<compile_context>
chip_gen: v7x
topology: tpu7x:2x2x1
jax: 0.10.0
libtpu: 0.0.40
codegen_flags: <defaults>
</compile_context>

<pallas_src>
import functools

import jax
import jax.numpy as jnp
from jax import lax
from jax.experimental import pallas as pl
from jax.experimental.pallas import tpu as pltpu


# ----------------------------------------------------------------------------
# Model configuration
# ----------------------------------------------------------------------------
C_IM, C_L2, C_L3, C_CLF, NUM_FILTERS = 3, 16, 32, 32, 4
STRIDE_L2, STRIDE_L3 = 8, 16
DEC_IN = NUM_FILTERS + C_L3 + C_L2
FILTER_REG = 1e-2
NUM_INIT_ITER = 3
MXU_DTYPE = jnp.bfloat16        # MXU operands only; elementwise math stays f32


def _round_up(x, m):
    return ((x + m - 1) // m) * m


def _pick_tiles(m):
    """M tile: >=2 grid blocks when possible (v7x megacore), 16-row aligned."""
    tm = min(128, _round_up(max(-(-m // 2), 16), 16))
    return tm, _round_up(m, tm)


# ----------------------------------------------------------------------------
# Kernel 1: generic matmul + bias + ReLU (layer2 conv)
# ----------------------------------------------------------------------------
def _mm_bias_relu_kernel(a_ref, w_ref, b_ref, o_ref):
    acc = jnp.dot(a_ref[...], w_ref[...], preferred_element_type=jnp.float32)
    o_ref[...] = jnp.maximum(acc + b_ref[...], 0.0)


def matmul_bias_relu(a, w, b):
    m, kd = a.shape
    n = w.shape[1]
    tm, mp = _pick_tiles(m)
    a = a.astype(MXU_DTYPE)
    if mp != m:
        a = jnp.pad(a, ((0, mp - m), (0, 0)))
    out = pl.pallas_call(
        _mm_bias_relu_kernel,
        out_shape=jax.ShapeDtypeStruct((mp, n), jnp.float32),
        grid=(mp // tm,),
        in_specs=[pl.BlockSpec((tm, kd), lambda i: (i, 0)),
                  pl.BlockSpec((kd, n), lambda i: (0, 0)),
                  pl.BlockSpec((1, n), lambda i: (0, 0))],
        out_specs=pl.BlockSpec((tm, n), lambda i: (i, 0)),
        compiler_params=pltpu.CompilerParams(
            dimension_semantics=("parallel",)),
    )(a, w.astype(MXU_DTYPE), b.reshape(1, n).astype(jnp.float32))
    return out[:m]


# ----------------------------------------------------------------------------
# Kernel 2: fused layer3 backbone conv + classification-feature 1x1 conv
# ----------------------------------------------------------------------------
def _l3_clf_kernel(rows_ref, w3_ref, b3_ref, wclf_ref, bclf_ref,
                   l3_ref, clf_ref):
    l3 = jnp.dot(rows_ref[...], w3_ref[...], preferred_element_type=jnp.float32)
    l3 = jnp.maximum(l3 + b3_ref[...], 0.0)                  # f32 elementwise
    l3_ref[...] = l3.astype(jnp.bfloat16)
    clf = jnp.dot(l3.astype(MXU_DTYPE), wclf_ref[...],
                  preferred_element_type=jnp.float32)
    clf_ref[...] = jnp.maximum(clf + bclf_ref[...], 0.0).astype(jnp.bfloat16)


def l3_clf_fused(rows, params):
    m, kd = rows.shape
    tm, mp = _pick_tiles(m)
    a = rows.astype(MXU_DTYPE)
    if mp != m:
        a = jnp.pad(a, ((0, mp - m), (0, 0)))
    l3, clf = pl.pallas_call(
        _l3_clf_kernel,
        out_shape=(jax.ShapeDtypeStruct((mp, C_L3), jnp.bfloat16),
                   jax.ShapeDtypeStruct((mp, C_CLF), jnp.bfloat16)),
        grid=(mp // tm,),
        in_specs=[pl.BlockSpec((tm, kd), lambda i: (i, 0)),
                  pl.BlockSpec((kd, C_L3), lambda i: (0, 0)),
                  pl.BlockSpec((1, C_L3), lambda i: (0, 0)),
                  pl.BlockSpec((C_L3, C_CLF), lambda i: (0, 0)),
                  pl.BlockSpec((1, C_CLF), lambda i: (0, 0))],
        out_specs=(pl.BlockSpec((tm, C_L3), lambda i: (i, 0)),
                   pl.BlockSpec((tm, C_CLF), lambda i: (i, 0))),
        compiler_params=pltpu.CompilerParams(
            dimension_semantics=("parallel",)),
    )(a,
      params["w3"].astype(MXU_DTYPE),
      params["b3"].reshape(1, C_L3).astype(jnp.float32),
      params["wclf"].astype(MXU_DTYPE),
      params["bclf"].reshape(1, C_CLF).astype(jnp.float32))
    return l3[:m], clf[:m]


# ----------------------------------------------------------------------------
# Kernel 3: fused per-frame loop (filter init + classify + decode + refine)
# ----------------------------------------------------------------------------
def _sd_steps(filt, feat_bf, y, sw, num_iter, reg):
    """DiMP/LWL Gauss-Newton steepest descent (bf16 MXU operands, f32 math).

    residual r = sw * (feat @ filt - y); grad = feat^T r + reg * filt;
    alpha = |grad|^2 / (sum(sw * (feat grad)^2) + reg |grad|^2)   (joint scalar
    step length over all filter channels, sample weight applied ONCE)."""
    for _ in range(num_iter):
        scores = jnp.dot(feat_bf, filt.astype(MXU_DTYPE),
                         preferred_element_type=jnp.float32)
        r = sw * (scores - y)
        grad = lax.dot_general(feat_bf, r.astype(MXU_DTYPE),
                               (((0,), (0,)), ((), ())),
                               preferred_element_type=jnp.float32) + reg * filt
        fg = jnp.dot(feat_bf, grad.astype(MXU_DTYPE),
                     preferred_element_type=jnp.float32)
        num = jnp.sum(grad * grad, keepdims=True)
        den = jnp.sum(sw * fg * fg, keepdims=True) + reg * num
        alpha = num / jnp.maximum(den, 1e-8)
        filt = filt - alpha * grad
    return filt


def _frame_loop_kernel(maskw_ref, trfeat_ref, tefeat_ref, tel3_ref, tel2p_ref,
                       dws_ref, dw3_ref, dw2_ref, decb_ref, lew_ref, leb_ref,
                       out_ref,
                       filt_s, hfeat_s, hy_s, hsw_s,
                       *, num_init_iter, num_refine_iter, reg, m_tr, hw3,
                       up_w, k):
    f = pl.program_id(1)

    we, ws = lew_ref[:, :k], lew_ref[:, k:]
    be, bs = leb_ref[:, :k], leb_ref[:, k:]

    # -- first test frame of each sequence: build history + filter init -------
    @pl.when(f == 0)
    def _():
        hfeat_s[...] = jnp.zeros_like(hfeat_s)
        hy_s[...] = jnp.zeros_like(hy_s)
        hsw_s[...] = jnp.zeros_like(hsw_s)          # sw == 0 masks unused rows
        feat_tr = trfeat_ref[0]                                  # (m_tr, C) bf16
        # label-encode the training masks (16x16 avg-pool fused in-kernel)
        pooled = jnp.mean(maskw_ref[0], axis=1, keepdims=True)   # (m_tr, 1) f32
        y_tr = jnp.maximum(pooled * we + be, 0.0)
        sw_tr = jax.nn.sigmoid(pooled * ws + bs)
        hfeat_s[pl.ds(0, m_tr), :] = feat_tr
        hy_s[pl.ds(0, m_tr), :] = y_tr
        hsw_s[pl.ds(0, m_tr), :] = sw_tr
        # filter init: feat^T @ (sw * y) / m_tr, then NUM_INIT_ITER SD steps
        filt0 = lax.dot_general(feat_tr, (sw_tr * y_tr).astype(MXU_DTYPE),
                                (((0,), (0,)), ((), ())),
                                preferred_element_type=jnp.float32)
        filt0 = filt0 * (1.0 / m_tr)
        filt_s[...] = _sd_steps(filt0, feat_tr, y_tr, sw_tr, num_init_iter, reg)

    filt = filt_s[...]                                           # (C, K) f32

    # -- classify + decoder 1x1 over [scores | layer3 | pooled layer2] --------
    feat_f = tefeat_ref[0, 0]                                    # (hw3, C) bf16
    scores = jnp.dot(feat_f, filt.astype(MXU_DTYPE),
                     preferred_element_type=jnp.float32)         # (hw3, K)
    m = (jnp.dot(scores.astype(MXU_DTYPE), dws_ref[...].astype(MXU_DTYPE),
                 preferred_element_type=jnp.float32)
         + jnp.dot(tel3_ref[0, 0], dw3_ref[...].astype(MXU_DTYPE),
                   preferred_element_type=jnp.float32)
         + jnp.dot(tel2p_ref[0, 0], dw2_ref[...].astype(MXU_DTYPE),
                   preferred_element_type=jnp.float32)
         + decb_ref[...])                                        # (hw3, 1) f32
    # lane-dense store: nearest-upsample WIDTH replication folded in-kernel
    out_ref[0, 0] = jnp.broadcast_to(m, (hw3, up_w))

    # -- label-encode the prediction and append it to the history -------------
    p = jax.nn.sigmoid(m)                                        # f32 (v5e-safe)
    off = pl.multiple_of(m_tr + f * hw3, hw3)
    hfeat_s[pl.ds(off, hw3), :] = feat_f
    hy_s[pl.ds(off, hw3), :] = jnp.maximum(p * we + be, 0.0)
    hsw_s[pl.ds(off, hw3), :] = jax.nn.sigmoid(p * ws + bs)

    # -- refine the filter for the next frame (skipped after the last) --------
    if num_refine_iter > 0:
        @pl.when(f < pl.num_programs(1) - 1)
        def _():
            filt_s[...] = _sd_steps(filt, hfeat_s[...], hy_s[...], hsw_s[...],
                                    num_refine_iter, reg)


def frame_loop_pallas(maskw, tr_feat, te_feat, te_l3, te_l2p,
                      dws, dw3, dw2, dec_b, le_w, le_b, *, num_refine_iter):
    s, m_tr, c = tr_feat.shape
    f_te, _, hw3, _ = te_feat.shape
    k = NUM_FILTERS
    up_w = STRIDE_L3
    m_max = m_tr + f_te * hw3
    pp = maskw.shape[-1]
    kern = functools.partial(
        _frame_loop_kernel, num_init_iter=NUM_INIT_ITER,
        num_refine_iter=num_refine_iter, reg=FILTER_REG,
        m_tr=m_tr, hw3=hw3, up_w=up_w, k=k)
    return pl.pallas_call(
        kern,
        out_shape=jax.ShapeDtypeStruct((f_te, s, hw3, up_w), jnp.float32),
        grid=(s, f_te),
        in_specs=[
            pl.BlockSpec((1, m_tr, pp), lambda si, fi: (si, 0, 0)),
            pl.BlockSpec((1, m_tr, c), lambda si, fi: (si, 0, 0)),
            pl.BlockSpec((1, 1, hw3, c), lambda si, fi: (fi, si, 0, 0)),
            pl.BlockSpec((1, 1, hw3, C_L3), lambda si, fi: (fi, si, 0, 0)),
            pl.BlockSpec((1, 1, hw3, C_L2), lambda si, fi: (fi, si, 0, 0)),
            pl.BlockSpec((k, 1), lambda si, fi: (0, 0)),
            pl.BlockSpec((C_L3, 1), lambda si, fi: (0, 0)),
            pl.BlockSpec((C_L2, 1), lambda si, fi: (0, 0)),
            pl.BlockSpec((1, 1), lambda si, fi: (0, 0)),
            pl.BlockSpec((1, 2 * k), lambda si, fi: (0, 0)),
            pl.BlockSpec((1, 2 * k), lambda si, fi: (0, 0)),
        ],
        out_specs=pl.BlockSpec((1, 1, hw3, up_w), lambda si, fi: (fi, si, 0, 0)),
        scratch_shapes=[
            pltpu.VMEM((c, k), jnp.float32),          # target filter state
            pltpu.VMEM((m_max, c), MXU_DTYPE),        # feature history (bf16)
            pltpu.VMEM((m_max, k), jnp.float32),      # encoded-label history
            pltpu.VMEM((m_max, k), jnp.float32),      # sample-weight history
        ],
        compiler_params=pltpu.CompilerParams(
            dimension_semantics=("parallel", "arbitrary"),
            vmem_limit_bytes=32 * 1024 * 1024),
    )(maskw, tr_feat, te_feat, te_l3, te_l2p,
      dws, dw3, dw2, dec_b, le_w, le_b)


# ----------------------------------------------------------------------------
# Parameters
# ----------------------------------------------------------------------------
def init_params(key):
    ks = jax.random.split(key, 6)

    def w(k, shape):
        return (jax.random.normal(k, shape, jnp.float32)
                / jnp.sqrt(jnp.float32(shape[0])))

    return {
        "w2": w(ks[0], (C_IM * STRIDE_L2 * STRIDE_L2, C_L2)),
        "b2": jnp.zeros((C_L2,), jnp.float32),
        "w3": w(ks[1], (C_IM * STRIDE_L3 * STRIDE_L3, C_L3)),
        "b3": jnp.zeros((C_L3,), jnp.float32),
        "wclf": w(ks[2], (C_L3, C_CLF)),
        "bclf": jnp.zeros((C_CLF,), jnp.float32),
        "le_we": 1.0 + 0.5 * jax.random.normal(ks[3], (1, NUM_FILTERS), jnp.float32),
        "le_be": jnp.zeros((1, NUM_FILTERS), jnp.float32),
        "le_ws": 0.5 * jax.random.normal(ks[4], (1, NUM_FILTERS), jnp.float32),
        "le_bs": jnp.ones((1, NUM_FILTERS), jnp.float32),
        "dec_w": w(ks[5], (DEC_IN, 1)),      # [scores(K), layer3, layer2] order
        "dec_b": jnp.zeros((1,), jnp.float32),
    }


# ----------------------------------------------------------------------------
# Glue (layout plumbing in XLA, all heavy math inside the Pallas kernels)
# ----------------------------------------------------------------------------
def _patch_rows(im, patch):
    # NCHW -> im2col rows (n*oh*ow, C*patch*patch); row order (n, y, x).
    n, c, hh, ww = im.shape
    oh, ow = hh // patch, ww // patch
    x = im.reshape(n, c, oh, patch, ow, patch)
    return x.transpose(0, 2, 4, 1, 3, 5).reshape(n * oh * ow, c * patch * patch)


# ----------------------------------------------------------------------------
# SegDolfTracker.forward
# ----------------------------------------------------------------------------
def seg_dolf_tracker_forward(params, train_imgs, test_imgs, train_masks,
                             test_masks, num_refinement_iter=2):
    del test_masks                      # not used in the reference forward()
    f_tr, s = train_imgs.shape[:2]
    f_te = test_imgs.shape[0]
    hh, ww = test_imgs.shape[-2:]
    h3, w3 = hh // STRIDE_L3, ww // STRIDE_L3
    hw3 = h3 * w3
    m_tr = f_tr * hw3

    # ---- layer3 -> clf features for ALL frames (train+test) in one call ----
    imgs_all = jnp.concatenate([train_imgs, test_imgs], axis=0)
    n_all = (f_tr + f_te) * s
    rows3 = _patch_rows(imgs_all.reshape(n_all, C_IM, hh, ww), STRIDE_L3)
    l3_all, clf_all = l3_clf_fused(rows3, params)          # bf16 activations
    l3_all = l3_all.reshape(f_tr + f_te, s, hw3, C_L3)
    clf_all = clf_all.reshape(f_tr + f_te, s, hw3, C_CLF)
    tr_feat = clf_all[:f_tr].transpose(1, 0, 2, 3).reshape(s, m_tr, C_CLF)
    te_feat = clf_all[f_tr:]                               # (F_te, S, hw3, C)
    te_l3 = l3_all[f_tr:]

    # ---- layer2 (test only) + 2x2 pool to the classifier stride ------------
    rows2 = _patch_rows(test_imgs.reshape(f_te * s, C_IM, hh, ww), STRIDE_L2)
    l2 = matmul_bias_relu(rows2, params["w2"], params["b2"])
    te_l2p = (l2.reshape(f_te, s, h3, 2, w3, 2, C_L2).mean(axis=(3, 5))
              .reshape(f_te, s, hw3, C_L2).astype(MXU_DTYPE))

    # ---- training mask 16x16 windows (pool fused into the frame kernel) ----
    mw = train_masks.transpose(1, 0, 2, 3).reshape(
        s, f_tr, h3, STRIDE_L3, w3, STRIDE_L3)
    mw = mw.transpose(0, 1, 2, 4, 3, 5).reshape(
        s, m_tr, STRIDE_L3 * STRIDE_L3).astype(jnp.float32)

    # packed label-encoder params ([enc | sample-weight] heads in one affine)
    le_w = jnp.concatenate([params["le_we"], params["le_ws"]], axis=1)
    le_b = jnp.concatenate([params["le_be"], params["le_bs"]], axis=1)
    dws = params["dec_w"][:NUM_FILTERS]
    dw3 = params["dec_w"][NUM_FILTERS:NUM_FILTERS + C_L3]
    dw2 = params["dec_w"][NUM_FILTERS + C_L3:]
    dec_b = params["dec_b"].reshape(1, 1)

    # ---- single gridded kernel over (sequences, test frames) ---------------
    out = frame_loop_pallas(mw, tr_feat, te_feat, te_l3, te_l2p,
                            dws, dw3, dw2, dec_b, le_w, le_b,
                            num_refine_iter=num_refinement_iter)

    # (F_te, S, hw3, up_w): width already replicated in-kernel; finish the
    # nearest x16 upsample by repeating rows (pure layout in XLA).
    m = out.reshape(f_te, s, h3, ww)
    return jnp.repeat(m, STRIDE_L3, axis=2)        # (num_test_frames, S, H, W)


# ----------------------------------------------------------------------------
# Main
# ----------------------------------------------------------------------------
if __name__ == "__main__":
    key = jax.random.PRNGKey(0)
    k_par, k_tr, k_te, k_m, k_tm = jax.random.split(key, 5)

    params = init_params(k_par)

    num_train_frames, num_test_frames, num_seq = 1, 2, 2
    H = W = 64
    train_imgs = jax.random.normal(
        k_tr, (num_train_frames, num_seq, C_IM, H, W), jnp.float32)
    test_imgs = jax.random.normal(
        k_te, (num_test_frames, num_seq, C_IM, H, W), jnp.float32)
    train_masks = (jax.random.uniform(
        k_m, (num_train_frames, num_seq, H, W)) > 0.5).astype(jnp.float32)
    test_masks = (jax.random.uniform(
        k_tm, (num_test_frames, num_seq, H, W)) > 0.5).astype(jnp.float32)

    fwd = jax.jit(functools.partial(seg_dolf_tracker_forward,
                                    num_refinement_iter=2))
    pred = fwd(params, train_imgs, test_imgs, train_masks, test_masks)
    pred = jax.block_until_ready(pred)

    assert pred.shape == (num_test_frames, num_seq, H, W)
    assert bool(jnp.all(jnp.isfinite(pred)))
    print("KERNEL_OK")
</pallas_src>

<mosaic_0001>
module attributes {stable_mosaic.version = 11 : i64} {
  func.func @_l3_clf_kernel(%arg0: i32, %arg1: memref<48x768xbf16, #tpu.memory_space<vmem>>, %arg2: memref<768x32xbf16, #tpu.memory_space<vmem>>, %arg3: memref<1x32xf32, #tpu.memory_space<vmem>>, %arg4: memref<32x32xbf16, #tpu.memory_space<vmem>>, %arg5: memref<1x32xf32, #tpu.memory_space<vmem>>, %arg6: memref<48x32xbf16, #tpu.memory_space<vmem>>, %arg7: memref<48x32xbf16, #tpu.memory_space<vmem>>) attributes {dimension_semantics = [#tpu.dimension_semantics<parallel>], iteration_bounds = array<i64: 2>, scalar_prefetch = 0 : i64, scratch_operands = 0 : i64, tpu.core_type = #tpu.core_type<tc>, window_params = [{transform_indices = @transform_0, window_bounds = array<i64: 48, 768>}, {pipeline_mode = #tpu.pipeline_mode<synchronous>, transform_indices = @transform_1, window_bounds = array<i64: 768, 32>}, {pipeline_mode = #tpu.pipeline_mode<synchronous>, transform_indices = @transform_2, window_bounds = array<i64: 1, 32>}, {pipeline_mode = #tpu.pipeline_mode<synchronous>, transform_indices = @transform_3, window_bounds = array<i64: 32, 32>}, {pipeline_mode = #tpu.pipeline_mode<synchronous>, transform_indices = @transform_4, window_bounds = array<i64: 1, 32>}, {transform_indices = @transform_5, window_bounds = array<i64: 48, 32>}, {transform_indices = @transform_6, window_bounds = array<i64: 48, 32>}]} {
    %c0 = arith.constant 0 : index
    %c0_0 = arith.constant 0 : index
    %0 = vector.load %arg1[%c0, %c0_0] : memref<48x768xbf16, #tpu.memory_space<vmem>>, vector<48x768xbf16>
    %c0_1 = arith.constant 0 : index
    %c0_2 = arith.constant 0 : index
    %1 = vector.load %arg2[%c0_1, %c0_2] : memref<768x32xbf16, #tpu.memory_space<vmem>>, vector<768x32xbf16>
    %cst = arith.constant dense<0.000000e+00> : vector<48x32xf32>
    %2 = tpu.matmul %0, %1, %cst {dimension_numbers = #tpu.dot_dimension_numbers<[1], [0], [0], [1], [0, 0, 1, 1], [], []>} : vector<48x768xbf16>, vector<768x32xbf16>, vector<48x32xf32> -> vector<48x32xf32>
    %c0_3 = arith.constant 0 : index
    %c0_4 = arith.constant 0 : index
    %3 = vector.load %arg3[%c0_3, %c0_4] : memref<1x32xf32, #tpu.memory_space<vmem>>, vector<1x32xf32>
    %4 = vector.broadcast %3 : vector<1x32xf32> to vector<48x32xf32>
    %5 = arith.addf %2, %4 : vector<48x32xf32>
    %cst_5 = arith.constant 0.000000e+00 : f32
    %6 = vector.broadcast %cst_5 : f32 to vector<48x32xf32>
    %7 = arith.maximumf %5, %6 : vector<48x32xf32>
    %8 = arith.truncf %7 : vector<48x32xf32> to vector<48x32xbf16>
    %c0_6 = arith.constant 0 : index
    %c0_7 = arith.constant 0 : index
    %9 = vector.load %arg6[%c0_6, %c0_7] : memref<48x32xbf16, #tpu.memory_space<vmem>>, vector<48x32xbf16>
    tpu.vector_store %arg6[%c0_6, %c0_7], %8 {strides = array<i32>} : memref<48x32xbf16, #tpu.memory_space<vmem>>, vector<48x32xbf16>,
    %10 = arith.truncf %7 : vector<48x32xf32> to vector<48x32xbf16>
    %c0_8 = arith.constant 0 : index
    %c0_9 = arith.constant 0 : index
    %11 = vector.load %arg4[%c0_8, %c0_9] : memref<32x32xbf16, #tpu.memory_space<vmem>>, vector<32x32xbf16>
    %cst_10 = arith.constant dense<0.000000e+00> : vector<48x32xf32>
    %12 = tpu.matmul %10, %11, %cst_10 {dimension_numbers = #tpu.dot_dimension_numbers<[1], [0], [0], [1], [0, 0, 1, 1], [], []>} : vector<48x32xbf16>, vector<32x32xbf16>, vector<48x32xf32> -> vector<48x32xf32>
    %c0_11 = arith.constant 0 : index
    %c0_12 = arith.constant 0 : index
    %13 = vector.load %arg5[%c0_11, %c0_12] : memref<1x32xf32, #tpu.memory_space<vmem>>, vector<1x32xf32>
    %14 = vector.broadcast %13 : vector<1x32xf32> to vector<48x32xf32>
    %15 = arith.addf %12, %14 : vector<48x32xf32>
    %cst_13 = arith.constant 0.000000e+00 : f32
    %16 = vector.broadcast %cst_13 : f32 to vector<48x32xf32>
    %17 = arith.maximumf %15, %16 : vector<48x32xf32>
    %18 = arith.truncf %17 : vector<48x32xf32> to vector<48x32xbf16>
    %c0_14 = arith.constant 0 : index
    %c0_15 = arith.constant 0 : index
    %19 = vector.load %arg7[%c0_14, %c0_15] : memref<48x32xbf16, #tpu.memory_space<vmem>>, vector<48x32xbf16>
    tpu.vector_store %arg7[%c0_14, %c0_15], %18 {strides = array<i32>} : memref<48x32xbf16, #tpu.memory_space<vmem>>, vector<48x32xbf16>,
    return
  }
  func.func @transform_0(%arg0: i32) -> (i32, i32) {
    %c0_i32 = arith.constant 0 : i32
    %c0_i32_0 = arith.constant 0 : i32
    return %arg0, %c0_i32 : i32, i32
  }
  func.func @transform_1(%arg0: i32) -> (i32, i32) {
    %c0_i32 = arith.constant 0 : i32
    %c0_i32_0 = arith.constant 0 : i32
    %c0_i32_1 = arith.constant 0 : i32
    return %c0_i32, %c0_i32_0 : i32, i32
  }
  func.func @transform_2(%arg0: i32) -> (i32, i32) {
    %c0_i32 = arith.constant 0 : i32
    %c0_i32_0 = arith.constant 0 : i32
    %c0_i32_1 = arith.constant 0 : i32
    return %c0_i32, %c0_i32_0 : i32, i32
  }
  func.func @transform_3(%arg0: i32) -> (i32, i32) {
    %c0_i32 = arith.constant 0 : i32
    %c0_i32_0 = arith.constant 0 : i32
    %c0_i32_1 = arith.constant 0 : i32
    return %c0_i32, %c0_i32_0 : i32, i32
  }
  func.func @transform_4(%arg0: i32) -> (i32, i32) {
    %c0_i32 = arith.constant 0 : i32
    %c0_i32_0 = arith.constant 0 : i32
    %c0_i32_1 = arith.constant 0 : i32
    return %c0_i32, %c0_i32_0 : i32, i32
  }
  func.func @transform_5(%arg0: i32) -> (i32, i32) {
    %c0_i32 = arith.constant 0 : i32
    %c0_i32_0 = arith.constant 0 : i32
    return %arg0, %c0_i32 : i32, i32
  }
  func.func @transform_6(%arg0: i32) -> (i32, i32) {
    %c0_i32 = arith.constant 0 : i32
    %c0_i32_0 = arith.constant 0 : i32
    return %arg0, %c0_i32 : i32, i32
  }
}

module attributes {stable_mosaic.version = 11 : i64} {
  func.func @_mm_bias_relu_kernel(%arg0: i32, %arg1: memref<128x192xbf16, #tpu.memory_space<vmem>>, %arg2: memref<192x16xbf16, #tpu.memory_space<vmem>>, %arg3: memref<1x16xf32, #tpu.memory_space<vmem>>, %arg4: memref<128x16xf32, #tpu.memory_space<vmem>>) attributes {dimension_semantics = [#tpu.dimension_semantics<parallel>], iteration_bounds = array<i64: 2>, scalar_prefetch = 0 : i64, scratch_operands = 0 : i64, tpu.core_type = #tpu.core_type<tc>, window_params = [{transform_indices = @transform_0, window_bounds = array<i64: 128, 192>}, {pipeline_mode = #tpu.pipeline_mode<synchronous>, transform_indices = @transform_1, window_bounds = array<i64: 192, 16>}, {pipeline_mode = #tpu.pipeline_mode<synchronous>, transform_indices = @transform_2, window_bounds = array<i64: 1, 16>}, {transform_indices = @transform_3, window_bounds = array<i64: 128, 16>}]} {
    %c0 = arith.constant 0 : index
    %c0_0 = arith.constant 0 : index
    %0 = vector.load %arg1[%c0, %c0_0] : memref<128x192xbf16, #tpu.memory_space<vmem>>, vector<128x192xbf16>
    %c0_1 = arith.constant 0 : index
    %c0_2 = arith.constant 0 : index
    %1 = vector.load %arg2[%c0_1, %c0_2] : memref<192x16xbf16, #tpu.memory_space<vmem>>, vector<192x16xbf16>
    %cst = arith.constant dense<0.000000e+00> : vector<128x16xf32>
    %2 = tpu.matmul %0, %1, %cst {dimension_numbers = #tpu.dot_dimension_numbers<[1], [0], [0], [1], [0, 0, 1, 1], [], []>} : vector<128x192xbf16>, vector<192x16xbf16>, vector<128x16xf32> -> vector<128x16xf32>
    %c0_3 = arith.constant 0 : index
    %c0_4 = arith.constant 0 : index
    %3 = vector.load %arg3[%c0_3, %c0_4] : memref<1x16xf32, #tpu.memory_space<vmem>>, vector<1x16xf32>
    %4 = vector.broadcast %3 : vector<1x16xf32> to vector<128x16xf32>
    %5 = arith.addf %2, %4 : vector<128x16xf32>
    %cst_5 = arith.constant 0.000000e+00 : f32
    %6 = vector.broadcast %cst_5 : f32 to vector<128x16xf32>
    %7 = arith.maximumf %5, %6 : vector<128x16xf32>
    %c0_6 = arith.constant 0 : index
    %c0_7 = arith.constant 0 : index
    %8 = vector.load %arg4[%c0_6, %c0_7] : memref<128x16xf32, #tpu.memory_space<vmem>>, vector<128x16xf32>
    tpu.vector_store %arg4[%c0_6, %c0_7], %7 {strides = array<i32>} : memref<128x16xf32, #tpu.memory_space<vmem>>, vector<128x16xf32>,
    return
  }
  func.func @transform_0(%arg0: i32) -> (i32, i32) {
    %c0_i32 = arith.constant 0 : i32
    %c0_i32_0 = arith.constant 0 : i32
    return %arg0, %c0_i32 : i32, i32
  }
  func.func @transform_1(%arg0: i32) -> (i32, i32) {
    %c0_i32 = arith.constant 0 : i32
    %c0_i32_0 = arith.constant 0 : i32
    %c0_i32_1 = arith.constant 0 : i32
    return %c0_i32, %c0_i32_0 : i32, i32
  }
  func.func @transform_2(%arg0: i32) -> (i32, i32) {
    %c0_i32 = arith.constant 0 : i32
    %c0_i32_0 = arith.constant 0 : i32
    %c0_i32_1 = arith.constant 0 : i32
    return %c0_i32, %c0_i32_0 : i32, i32
  }
  func.func @transform_3(%arg0: i32) -> (i32, i32) {
    %c0_i32 = arith.constant 0 : i32
    %c0_i32_0 = arith.constant 0 : i32
    return %arg0, %c0_i32 : i32, i32
  }
}

module attributes {stable_mosaic.version = 11 : i64} {
  func.func @_frame_loop_kernel(%arg0: i32, %arg1: i32, %arg2: memref<1x16x256xf32, #tpu.memory_space<vmem>>, %arg3: memref<1x16x32xbf16, #tpu.memory_space<vmem>>, %arg4: memref<1x1x16x32xbf16, #tpu.memory_space<vmem>>, %arg5: memref<1x1x16x32xbf16, #tpu.memory_space<vmem>>, %arg6: memref<1x1x16x16xbf16, #tpu.memory_space<vmem>>, %arg7: memref<4x1xf32, #tpu.memory_space<vmem>>, %arg8: memref<32x1xf32, #tpu.memory_space<vmem>>, %arg9: memref<16x1xf32, #tpu.memory_space<vmem>>, %arg10: memref<1x1xf32, #tpu.memory_space<vmem>>, %arg11: memref<1x8xf32, #tpu.memory_space<vmem>>, %arg12: memref<1x8xf32, #tpu.memory_space<vmem>>, %arg13: memref<1x1x16x16xf32, #tpu.memory_space<vmem>>, %arg14: memref<32x4xf32, #tpu.memory_space<vmem>>, %arg15: memref<48x32xbf16, #tpu.memory_space<vmem>>, %arg16: memref<48x4xf32, #tpu.memory_space<vmem>>, %arg17: memref<48x4xf32, #tpu.memory_space<vmem>>) attributes {dimension_semantics = [#tpu.dimension_semantics<parallel>, #tpu.dimension_semantics<arbitrary>], iteration_bounds = array<i64: 2, 2>, scalar_prefetch = 0 : i64, scratch_operands = 4 : i64, tpu.core_type = #tpu.core_type<tc>, window_params = [{transform_indices = @transform_0, window_bounds = array<i64: 1, 16, 256>}, {transform_indices = @transform_1, window_bounds = array<i64: 1, 16, 32>}, {transform_indices = @transform_2, window_bounds = array<i64: 1, 1, 16, 32>}, {transform_indices = @transform_3, window_bounds = array<i64: 1, 1, 16, 32>}, {transform_indices = @transform_4, window_bounds = array<i64: 1, 1, 16, 16>}, {pipeline_mode = #tpu.pipeline_mode<synchronous>, transform_indices = @transform_5, window_bounds = array<i64: 4, 1>}, {pipeline_mode = #tpu.pipeline_mode<synchronous>, transform_indices = @transform_6, window_bounds = array<i64: 32, 1>}, {pipeline_mode = #tpu.pipeline_mode<synchronous>, transform_indices = @transform_7, window_bounds = array<i64: 16, 1>}, {pipeline_mode = #tpu.pipeline_mode<synchronous>, transform_indices = @transform_8, window_bounds = array<i64: 1, 1>}, {pipeline_mode = #tpu.pipeline_mode<synchronous>, transform_indices = @transform_9, window_bounds = array<i64: 1, 8>}, {pipeline_mode = #tpu.pipeline_mode<synchronous>, transform_indices = @transform_10, window_bounds = array<i64: 1, 8>}, {transform_indices = @transform_11, window_bounds = array<i64: 1, 1, 16, 16>}]} {
    %c0 = arith.constant 0 : index
    %c0_0 = arith.constant 0 : index
    %0 = vector.load %arg11[%c0, %c0_0] : memref<1x8xf32, #tpu.memory_space<vmem>>, vector<1x4xf32>
    %c0_1 = arith.constant 0 : index
    %c4 = arith.constant 4 : index
    %1 = vector.load %arg11[%c0_1, %c4] : memref<1x8xf32, #tpu.memory_space<vmem>>, vector<1x4xf32>
    %c0_2 = arith.constant 0 : index
    %c0_3 = arith.constant 0 : index
    %2 = vector.load %arg12[%c0_2, %c0_3] : memref<1x8xf32, #tpu.memory_space<vmem>>, vector<1x4xf32>
    %c0_4 = arith.constant 0 : index
    %c4_5 = arith.constant 4 : index
    %3 = vector.load %arg12[%c0_4, %c4_5] : memref<1x8xf32, #tpu.memory_space<vmem>>, vector<1x4xf32>
    %c0_i32 = arith.constant 0 : i32
    %4 = arith.cmpi eq, %arg1, %c0_i32 : i32
    %5 = arith.extui %4 : i1 to i32
    %c0_i32_6 = arith.constant 0 : i32
    %6 = arith.cmpi ne, %5, %c0_i32_6 : i32
    scf.if %6 {
      %cst_44 = arith.constant 0.000000e+00 : bf16
      %70 = vector.broadcast %cst_44 : bf16 to vector<48x32xbf16>
      %c0_45 = arith.constant 0 : index
      %c0_46 = arith.constant 0 : index
      %71 = vector.load %arg15[%c0_45, %c0_46] : memref<48x32xbf16, #tpu.memory_space<vmem>>, vector<48x32xbf16>
      tpu.vector_store %arg15[%c0_45, %c0_46], %70 {strides = array<i32>} : memref<48x32xbf16, #tpu.memory_space<vmem>>, vector<48x32xbf16>,
      %cst_47 = arith.constant 0.000000e+00 : f32
      %72 = vector.broadcast %cst_47 : f32 to vector<48x4xf32>
      %c0_48 = arith.constant 0 : index
      %c0_49 = arith.constant 0 : index
      %73 = vector.load %arg16[%c0_48, %c0_49] : memref<48x4xf32, #tpu.memory_space<vmem>>, vector<48x4xf32>
      tpu.vector_store %arg16[%c0_48, %c0_49], %72 {strides = array<i32>} : memref<48x4xf32, #tpu.memory_space<vmem>>, vector<48x4xf32>,
      %cst_50 = arith.constant 0.000000e+00 : f32
      %74 = vector.broadcast %cst_50 : f32 to vector<48x4xf32>
      %c0_51 = arith.constant 0 : index
      %c0_52 = arith.constant 0 : index
      %75 = vector.load %arg17[%c0_51, %c0_52] : memref<48x4xf32, #tpu.memory_space<vmem>>, vector<48x4xf32>
      tpu.vector_store %arg17[%c0_51, %c0_52], %74 {strides = array<i32>} : memref<48x4xf32, #tpu.memory_space<vmem>>, vector<48x4xf32>,
      %c0_53 = arith.constant 0 : index
      %c0_54 = arith.constant 0 : index
      %c0_55 = arith.constant 0 : index
      %76 = vector.load %arg3[%c0_53, %c0_54, %c0_55] : memref<1x16x32xbf16, #tpu.memory_space<vmem>>, vector<1x16x32xbf16>
      %77 = vector.shape_cast %76 : vector<1x16x32xbf16> to vector<16x32xbf16>
      %c0_56 = arith.constant 0 : index
      %c0_57 = arith.constant 0 : index
      %c0_58 = arith.constant 0 : index
      %78 = vector.load %arg2[%c0_56, %c0_57, %c0_58] : memref<1x16x256xf32, #tpu.memory_space<vmem>>, vector<1x16x256xf32>
      %79 = vector.shape_cast %78 : vector<1x16x256xf32> to vector<16x256xf32>
      %cst_59 = arith.constant dense<0.000000e+00> : vector<16xf32>
      %80 = vector.multi_reduction <add>, %79, %cst_59 [1] : vector<16x256xf32> to vector<16xf32>
      %81 = vector.shape_cast %80 : vector<16xf32> to vector<16x1xf32>
      %cst_60 = arith.constant 2.560000e+02 : f32
      %82 = vector.broadcast %cst_60 : f32 to vector<16x1xf32>
      %83 = arith.divf %81, %82 : vector<16x1xf32>
      %84 = vector.broadcast %83 : vector<16x1xf32> to vector<16x4xf32>
      %85 = vector.broadcast %0 : vector<1x4xf32> to vector<16x4xf32>
      %86 = arith.mulf %84, %85 : vector<16x4xf32>
      %87 = vector.broadcast %2 : vector<1x4xf32> to vector<16x4xf32>
      %88 = arith.addf %86, %87 : vector<16x4xf32>
      %cst_61 = arith.constant 0.000000e+00 : f32
      %89 = vector.broadcast %cst_61 : f32 to vector<16x4xf32>
      %90 = arith.maximumf %88, %89 : vector<16x4xf32>
      %91 = vector.broadcast %83 : vector<16x1xf32> to vector<16x4xf32>
      %92 = vector.broadcast %1 : vector<1x4xf32> to vector<16x4xf32>
      %93 = arith.mulf %91, %92 : vector<16x4xf32>
      %94 = vector.broadcast %3 : vector<1x4xf32> to vector<16x4xf32>
      %95 = arith.addf %93, %94 : vector<16x4xf32>
      %96 = arith.negf %95 : vector<16x4xf32>
      %97 = math.exp %96 : vector<16x4xf32>
      %cst_62 = arith.constant 1.000000e+00 : f32
      %98 = vector.broadcast %cst_62 : f32 to vector<16x4xf32>
      %99 = arith.addf %98, %97 : vector<16x4xf32>
      %100 = arith.divf %98, %99 : vector<16x4xf32>
      %c0_63 = arith.constant 0 : index
      %c0_64 = arith.constant 0 : index
      %101 = vector.load %arg15[%c0_63, %c0_64] : memref<48x32xbf16, #tpu.memory_space<vmem>>, vector<16x32xbf16>
      tpu.vector_store %arg15[%c0_63, %c0_64], %77 {strides = array<i32>} : memref<48x32xbf16, #tpu.memory_space<vmem>>, vector<16x32xbf16>,
      %c0_65 = arith.constant 0 : index
      %c0_66 = arith.constant 0 : index
      %102 = vector.load %arg16[%c0_65, %c0_66] : memref<48x4xf32, #tpu.memory_space<vmem>>, vector<16x4xf32>
      tpu.vector_store %arg16[%c0_65, %c0_66], %90 {strides = array<i32>} : memref<48x4xf32, #tpu.memory_space<vmem>>, vector<16x4xf32>,
      %c0_67 = arith.constant 0 : index
      %c0_68 = arith.constant 0 : index
      %103 = vector.load %arg17[%c0_67, %c0_68] : memref<48x4xf32, #tpu.memory_space<vmem>>, vector<16x4xf32>
      tpu.vector_store %arg17[%c0_67, %c0_68], %100 {strides = array<i32>} : memref<48x4xf32, #tpu.memory_space<vmem>>, vector<16x4xf32>,
      %104 = arith.mulf %100, %90 : vector<16x4xf32>
      %105 = arith.truncf %104 : vector<16x4xf32> to vector<16x4xbf16>
      %cst_69 = arith.constant dense<0.000000e+00> : vector<32x4xf32>
      %106 = tpu.matmul %77, %105, %cst_69 {dimension_numbers = #tpu.dot_dimension_numbers<[0], [0], [1], [1], [0, 1, 1, 1], [], []>} : vector<16x32xbf16>, vector<16x4xbf16>, vector<32x4xf32> -> vector<32x4xf32>
      %cst_70 = arith.constant 6.250000e-02 : f32
      %107 = vector.broadcast %cst_70 : f32 to vector<32x4xf32>
      %108 = arith.mulf %106, %107 : vector<32x4xf32>
      %109 = arith.truncf %108 : vector<32x4xf32> to vector<32x4xbf16>
      %cst_71 = arith.constant dense<0.000000e+00> : vector<16x4xf32>
      %110 = tpu.matmul %77, %109, %cst_71 {dimension_numbers = #tpu.dot_dimension_numbers<[1], [0], [0], [1], [0, 0, 1, 1], [], []>} : vector<16x32xbf16>, vector<32x4xbf16>, vector<16x4xf32> -> vector<16x4xf32>
      %111 = arith.subf %110, %90 : vector<16x4xf32>
      %112 = arith.mulf %100, %111 : vector<16x4xf32>
      %113 = arith.truncf %112 : vector<16x4xf32> to vector<16x4xbf16>
      %cst_72 = arith.constant dense<0.000000e+00> : vector<32x4xf32>
      %114 = tpu.matmul %77, %113, %cst_72 {dimension_numbers = #tpu.dot_dimension_numbers<[0], [0], [1], [1], [0, 1, 1, 1], [], []>} : vector<16x32xbf16>, vector<16x4xbf16>, vector<32x4xf32> -> vector<32x4xf32>
      %cst_73 = arith.constant 0.00999999977 : f32
      %115 = vector.broadcast %cst_73 : f32 to vector<32x4xf32>
      %116 = arith.mulf %115, %108 : vector<32x4xf32>
      %117 = arith.addf %114, %116 : vector<32x4xf32>
      %118 = arith.truncf %117 : vector<32x4xf32> to vector<32x4xbf16>
      %cst_74 = arith.constant dense<0.000000e+00> : vector<16x4xf32>
      %119 = tpu.matmul %77, %118, %cst_74 {dimension_numbers = #tpu.dot_dimension_numbers<[1], [0], [0], [1], [0, 0, 1, 1], [], []>} : vector<16x32xbf16>, vector<32x4xbf16>, vector<16x4xf32> -> vector<16x4xf32>
      %120 = arith.mulf %117, %117 : vector<32x4xf32>
      %121 = vector.shape_cast %120 : vector<32x4xf32> to vector<1x32x4xf32>
      %cst_75 = arith.constant dense<0.000000e+00> : vector<1xf32>
      %122 = vector.multi_reduction <add>, %121, %cst_75 [1, 2] : vector<1x32x4xf32> to vector<1xf32>
      %123 = vector.shape_cast %122 : vector<1xf32> to vector<1x1x1xf32>
      %124 = vector.extract %123[0, 0, 0] : f32 from vector<1x1x1xf32>
      %125 = vector.broadcast %124 : f32 to vector<1x1xf32>
      %126 = arith.mulf %100, %119 : vector<16x4xf32>
      %127 = arith.mulf %126, %119 : vector<16x4xf32>
      %128 = vector.shape_cast %127 : vector<16x4xf32> to vector<1x16x4xf32>
      %cst_76 = arith.constant dense<0.000000e+00> : vector<1xf32>
      %129 = vector.multi_reduction <add>, %128, %cst_76 [1, 2] : vector<1x16x4xf32> to vector<1xf32>
      %130 = vector.shape_cast %129 : vector<1xf32> to vector<1x1x1xf32>
      %131 = vector.extract %130[0, 0, 0] : f32 from vector<1x1x1xf32>
      %132 = vector.broadcast %131 : f32 to vector<1x1xf32>
      %cst_77 = arith.constant 0.00999999977 : f32
      %133 = vector.broadcast %cst_77 : f32 to vector<1x1xf32>
      %134 = arith.mulf %133, %125 : vector<1x1xf32>
      %135 = arith.addf %132, %134 : vector<1x1xf32>
      %cst_78 = arith.constant 9.99999993E-9 : f32
      %136 = vector.broadcast %cst_78 : f32 to vector<1x1xf32>
      %137 = arith.maximumf %135, %136 : vector<1x1xf32>
      %138 = arith.divf %125, %137 : vector<1x1xf32>
      %139 = vector.broadcast %138 : vector<1x1xf32> to vector<32x4xf32>
      %140 = arith.mulf %139, %117 : vector<32x4xf32>
      %141 = arith.subf %108, %140 : vector<32x4xf32>
      %142 = arith.truncf %141 : vector<32x4xf32> to vector<32x4xbf16>
      %cst_79 = arith.constant dense<0.000000e+00> : vector<16x4xf32>
      %143 = tpu.matmul %77, %142, %cst_79 {dimension_numbers = #tpu.dot_dimension_numbers<[1], [0], [0], [1], [0, 0, 1, 1], [], []>} : vector<16x32xbf16>, vector<32x4xbf16>, vector<16x4xf32> -> vector<16x4xf32>
      %144 = arith.subf %143, %90 : vector<16x4xf32>
      %145 = arith.mulf %100, %144 : vector<16x4xf32>
      %146 = arith.truncf %145 : vector<16x4xf32> to vector<16x4xbf16>
      %cst_80 = arith.constant dense<0.000000e+00> : vector<32x4xf32>
      %147 = tpu.matmul %77, %146, %cst_80 {dimension_numbers = #tpu.dot_dimension_numbers<[0], [0], [1], [1], [0, 1, 1, 1], [], []>} : vector<16x32xbf16>, vector<16x4xbf16>, vector<32x4xf32> -> vector<32x4xf32>
      %cst_81 = arith.constant 0.00999999977 : f32
      %148 = vector.broadcast %cst_81 : f32 to vector<32x4xf32>
      %149 = arith.mulf %148, %141 : vector<32x4xf32>
      %150 = arith.addf %147, %149 : vector<32x4xf32>
      %151 = arith.truncf %150 : vector<32x4xf32> to vector<32x4xbf16>
      %cst_82 = arith.constant dense<0.000000e+00> : vector<16x4xf32>
      %152 = tpu.matmul %77, %151, %cst_82 {dimension_numbers = #tpu.dot_dimension_numbers<[1], [0], [0], [1], [0, 0, 1, 1], [], []>} : vector<16x32xbf16>, vector<32x4xbf16>, vector<16x4xf32> -> vector<16x4xf32>
      %153 = arith.mulf %150, %150 : vector<32x4xf32>
      %154 = vector.shape_cast %153 : vector<32x4xf32> to vector<1x32x4xf32>
      %cst_83 = arith.constant dense<0.000000e+00> : vector<1xf32>
      %155 = vector.multi_reduction <add>, %154, %cst_83 [1, 2] : vector<1x32x4xf32> to vector<1xf32>
      %156 = vector.shape_cast %155 : vector<1xf32> to vector<1x1x1xf32>
      %157 = vector.extract %156[0, 0, 0] : f32 from vector<1x1x1xf32>
      %158 = vector.broadcast %157 : f32 to vector<1x1xf32>
      %159 = arith.mulf %100, %152 : vector<16x4xf32>
      %160 = arith.mulf %159, %152 : vector<16x4xf32>
      %161 = vector.shape_cast %160 : vector<16x4xf32> to vector<1x16x4xf32>
      %cst_84 = arith.constant dense<0.000000e+00> : vector<1xf32>
      %162 = vector.multi_reduction <add>, %161, %cst_84 [1, 2] : vector<1x16x4xf32> to vector<1xf32>
      %163 = vector.shape_cast %162 : vector<1xf32> to vector<1x1x1xf32>
      %164 = vector.extract %163[0, 0, 0] : f32 from vector<1x1x1xf32>
      %165 = vector.broadcast %164 : f32 to vector<1x1xf32>
      %cst_85 = arith.constant 0.00999999977 : f32
      %166 = vector.broadcast %cst_85 : f32 to vector<1x1xf32>
      %167 = arith.mulf %166, %158 : vector<1x1xf32>
      %168 = arith.addf %165, %167 : vector<1x1xf32>
      %cst_86 = arith.constant 9.99999993E-9 : f32
      %169 = vector.broadcast %cst_86 : f32 to vector<1x1xf32>
      %170 = arith.maximumf %168, %169 : vector<1x1xf32>
      %171 = arith.divf %158, %170 : vector<1x1xf32>
      %172 = vector.broadcast %171 : vector<1x1xf32> to vector<32x4xf32>
      %173 = arith.mulf %172, %150 : vector<32x4xf32>
      %174 = arith.subf %141, %173 : vector<32x4xf32>
      %175 = arith.truncf %174 : vector<32x4xf32> to vector<32x4xbf16>
      %cst_87 = arith.constant dense<0.000000e+00> : vector<16x4xf32>
      %176 = tpu.matmul %77, %175, %cst_87 {dimension_numbers = #tpu.dot_dimension_numbers<[1], [0], [0], [1], [0, 0, 1, 1], [], []>} : vector<16x32xbf16>, vector<32x4xbf16>, vector<16x4xf32> -> vector<16x4xf32>
      %177 = arith.subf %176, %90 : vector<16x4xf32>
      %178 = arith.mulf %100, %177 : vector<16x4xf32>
      %179 = arith.truncf %178 : vector<16x4xf32> to vector<16x4xbf16>
      %cst_88 = arith.constant dense<0.000000e+00> : vector<32x4xf32>
      %180 = tpu.matmul %77, %179, %cst_88 {dimension_numbers = #tpu.dot_dimension_numbers<[0], [0], [1], [1], [0, 1, 1, 1], [], []>} : vector<16x32xbf16>, vector<16x4xbf16>, vector<32x4xf32> -> vector<32x4xf32>
      %cst_89 = arith.constant 0.00999999977 : f32
      %181 = vector.broadcast %cst_89 : f32 to vector<32x4xf32>
      %182 = arith.mulf %181, %174 : vector<32x4xf32>
      %183 = arith.addf %180, %182 : vector<32x4xf32>
      %184 = arith.truncf %183 : vector<32x4xf32> to vector<32x4xbf16>
      %cst_90 = arith.constant dense<0.000000e+00> : vector<16x4xf32>
      %185 = tpu.matmul %77, %184, %cst_90 {dimension_numbers = #tpu.dot_dimension_numbers<[1], [0], [0], [1], [0, 0, 1, 1], [], []>} : vector<16x32xbf16>, vector<32x4xbf16>, vector<16x4xf32> -> vector<16x4xf32>
      %186 = arith.mulf %183, %183 : vector<32x4xf32>
      %187 = vector.shape_cast %186 : vector<32x4xf32> to vector<1x32x4xf32>
      %cst_91 = arith.constant dense<0.000000e+00> : vector<1xf32>
      %188 = vector.multi_reduction <add>, %187, %cst_91 [1, 2] : vector<1x32x4xf32> to vector<1xf32>
      %189 = vector.shape_cast %188 : vector<1xf32> to vector<1x1x1xf32>
      %190 = vector.extract %189[0, 0, 0] : f32 from vector<1x1x1xf32>
      %191 = vector.broadcast %190 : f32 to vector<1x1xf32>
      %192 = arith.mulf %100, %185 : vector<16x4xf32>
      %193 = arith.mulf %192, %185 : vector<16x4xf32>
      %194 = vector.shape_cast %193 : vector<16x4xf32> to vector<1x16x4xf32>
      %cst_92 = arith.constant dense<0.000000e+00> : vector<1xf32>
      %195 = vector.multi_reduction <add>, %194, %cst_92 [1, 2] : vector<1x16x4xf32> to vector<1xf32>
      %196 = vector.shape_cast %195 : vector<1xf32> to vector<1x1x1xf32>
      %197 = vector.extract %196[0, 0, 0] : f32 from vector<1x1x1xf32>
      %198 = vector.broadcast %197 : f32 to vector<1x1xf32>
      %cst_93 = arith.constant 0.00999999977 : f32
      %199 = vector.broadcast %cst_93 : f32 to vector<1x1xf32>
      %200 = arith.mulf %199, %191 : vector<1x1xf32>
      %201 = arith.addf %198, %200 : vector<1x1xf32>
      %cst_94 = arith.constant 9.99999993E-9 : f32
      %202 = vector.broadcast %cst_94 : f32 to vector<1x1xf32>
      %203 = arith.maximumf %201, %202 : vector<1x1xf32>
      %204 = arith.divf %191, %203 : vector<1x1xf32>
      %205 = vector.broadcast %204 : vector<1x1xf32> to vector<32x4xf32>
      %206 = arith.mulf %205, %183 : vector<32x4xf32>
      %207 = arith.subf %174, %206 : vector<32x4xf32>
      %c0_95 = arith.constant 0 : index
      %c0_96 = arith.constant 0 : index
      %208 = vector.load %arg14[%c0_95, %c0_96] : memref<32x4xf32, #tpu.memory_space<vmem>>, vector<32x4xf32>
      tpu.vector_store %arg14[%c0_95, %c0_96], %207 {strides = array<i32>} : memref<32x4xf32, #tpu.memory_space<vmem>>, vector<32x4xf32>,
    } else {
    }
    %c0_7 = arith.constant 0 : index
    %c0_8 = arith.constant 0 : index
    %7 = vector.load %arg14[%c0_7, %c0_8] : memref<32x4xf32, #tpu.memory_space<vmem>>, vector<32x4xf32>
    %c0_9 = arith.constant 0 : index
    %c0_10 = arith.constant 0 : index
    %c0_11 = arith.constant 0 : index
    %c0_12 = arith.constant 0 : index
    %8 = vector.load %arg4[%c0_9, %c0_10, %c0_11, %c0_12] : memref<1x1x16x32xbf16, #tpu.memory_space<vmem>>, vector<1x1x16x32xbf16>
    %9 = vector.shape_cast %8 : vector<1x1x16x32xbf16> to vector<16x32xbf16>
    %10 = arith.truncf %7 : vector<32x4xf32> to vector<32x4xbf16>
    %cst = arith.constant dense<0.000000e+00> : vector<16x4xf32>
    %11 = tpu.matmul %9, %10, %cst {dimension_numbers = #tpu.dot_dimension_numbers<[1], [0], [0], [1], [0, 0, 1, 1], [], []>} : vector<16x32xbf16>, vector<32x4xbf16>, vector<16x4xf32> -> vector<16x4xf32>
    %12 = arith.truncf %11 : vector<16x4xf32> to vector<16x4xbf16>
    %c0_13 = arith.constant 0 : index
    %c0_14 = arith.constant 0 : index
    %13 = vector.load %arg7[%c0_13, %c0_14] : memref<4x1xf32, #tpu.memory_space<vmem>>, vector<4x1xf32>
    %14 = arith.truncf %13 : vector<4x1xf32> to vector<4x1xbf16>
    %cst_15 = arith.constant dense<0.000000e+00> : vector<16x1xf32>
    %15 = tpu.matmul %12, %14, %cst_15 {dimension_numbers = #tpu.dot_dimension_numbers<[1], [0], [0], [1], [0, 0, 1, 1], [], []>} : vector<16x4xbf16>, vector<4x1xbf16>, vector<16x1xf32> -> vector<16x1xf32>
    %c0_16 = arith.constant 0 : index
    %c0_17 = arith.constant 0 : index
    %c0_18 = arith.constant 0 : index
    %c0_19 = arith.constant 0 : index
    %16 = vector.load %arg5[%c0_16, %c0_17, %c0_18, %c0_19] : memref<1x1x16x32xbf16, #tpu.memory_space<vmem>>, vector<1x1x16x32xbf16>
    %17 = vector.shape_cast %16 : vector<1x1x16x32xbf16> to vector<16x32xbf16>
    %c0_20 = arith.constant 0 : index
    %c0_21 = arith.constant 0 : index
    %18 = vector.load %arg8[%c0_20, %c0_21] : memref<32x1xf32, #tpu.memory_space<vmem>>, vector<32x1xf32>
    %19 = arith.truncf %18 : vector<32x1xf32> to vector<32x1xbf16>
    %cst_22 = arith.constant dense<0.000000e+00> : vector<16x1xf32>
    %20 = tpu.matmul %17, %19, %cst_22 {dimension_numbers = #tpu.dot_dimension_numbers<[1], [0], [0], [1], [0, 0, 1, 1], [], []>} : vector<16x32xbf16>, vector<32x1xbf16>, vector<16x1xf32> -> vector<16x1xf32>
    %21 = arith.addf %15, %20 : vector<16x1xf32>
    %c0_23 = arith.constant 0 : index
    %c0_24 = arith.constant 0 : index
    %c0_25 = arith.constant 0 : index
    %c0_26 = arith.constant 0 : index
    %22 = vector.load %arg6[%c0_23, %c0_24, %c0_25, %c0_26] : memref<1x1x16x16xbf16, #tpu.memory_space<vmem>>, vector<1x1x16x16xbf16>
    %23 = vector.shape_cast %22 : vector<1x1x16x16xbf16> to vector<16x16xbf16>
    %c0_27 = arith.constant 0 : index
    %c0_28 = arith.constant 0 : index
    %24 = vector.load %arg9[%c0_27, %c0_28] : memref<16x1xf32, #tpu.memory_space<vmem>>, vector<16x1xf32>
    %25 = arith.truncf %24 : vector<16x1xf32> to vector<16x1xbf16>
    %cst_29 = arith.constant dense<0.000000e+00> : vector<16x1xf32>
    %26 = tpu.matmul %23, %25, %cst_29 {dimension_numbers = #tpu.dot_dimension_numbers<[1], [0], [0], [1], [0, 0, 1, 1], [], []>} : vector<16x16xbf16>, vector<16x1xbf16>, vector<16x1xf32> -> vector<16x1xf32>
    %27 = arith.addf %21, %26 : vector<16x1xf32>
    %c0_30 = arith.constant 0 : index
    %c0_31 = arith.constant 0 : index
    %28 = vector.load %arg10[%c0_30, %c0_31] : memref<1x1xf32, #tpu.memory_space<vmem>>, vector<1x1xf32>
    %29 = vector.broadcast %28 : vector<1x1xf32> to vector<16x1xf32>
    %30 = arith.addf %27, %29 : vector<16x1xf32>
    %31 = vector.shape_cast %30 : vector<16x1xf32> to vector<16x1xf32>
    %32 = vector.broadcast %31 : vector<16x1xf32> to vector<16x16xf32>
    %c0_32 = arith.constant 0 : index
    %c0_33 = arith.constant 0 : index
    %c0_34 = arith.constant 0 : index
    %c0_35 = arith.constant 0 : index
    %33 = vector.load %arg13[%c0_32, %c0_33, %c0_34, %c0_35] : memref<1x1x16x16xf32, #tpu.memory_space<vmem>>, vector<1x1x16x16xf32>
    %34 = vector.shape_cast %33 : vector<1x1x16x16xf32> to vector<16x16xf32>
    %35 = vector.shape_cast %32 : vector<16x16xf32> to vector<1x1x16x16xf32>
    tpu.vector_store %arg13[%c0_32, %c0_33, %c0_34, %c0_35], %35 {strides = array<i32>} : memref<1x1x16x16xf32, #tpu.memory_space<vmem>>, vector<1x1x16x16xf32>,
    %36 = arith.negf %30 : vector<16x1xf32>
    %37 = math.exp %36 : vector<16x1xf32>
    %cst_36 = arith.constant 1.000000e+00 : f32
    %38 = vector.broadcast %cst_36 : f32 to vector<16x1xf32>
    %39 = arith.addf %38, %37 : vector<16x1xf32>
    %40 = arith.divf %38, %39 : vector<16x1xf32>
    %c16_i32 = arith.constant 16 : i32
    %41 = arith.muli %arg1, %c16_i32 : i32
    %c16_i32_37 = arith.constant 16 : i32
    %42 = arith.addi %c16_i32_37, %41 : i32
    %43 = tpu.assume_multiple %42, 16 : i32
    %44 = arith.index_cast %43 : i32 to index
    %c0_38 = arith.constant 0 : index
    %45 = vector.load %arg15[%44, %c0_38] : memref<48x32xbf16, #tpu.memory_space<vmem>>, vector<16x32xbf16>
    tpu.vector_store %arg15[%44, %c0_38], %9 {strides = array<i32>} : memref<48x32xbf16, #tpu.memory_space<vmem>>, vector<16x32xbf16>,
    %46 = vector.broadcast %40 : vector<16x1xf32> to vector<16x4xf32>
    %47 = vector.broadcast %0 : vector<1x4xf32> to vector<16x4xf32>
    %48 = arith.mulf %46, %47 : vector<16x4xf32>
    %49 = vector.broadcast %2 : vector<1x4xf32> to vector<16x4xf32>
    %50 = arith.addf %48, %49 : vector<16x4xf32>
    %cst_39 = arith.constant 0.000000e+00 : f32
    %51 = vector.broadcast %cst_39 : f32 to vector<16x4xf32>
    %52 = arith.maximumf %50, %51 : vector<16x4xf32>
    %53 = arith.index_cast %43 : i32 to index
    %c0_40 = arith.constant 0 : index
    %54 = vector.load %arg16[%53, %c0_40] : memref<48x4xf32, #tpu.memory_space<vmem>>, vector<16x4xf32>
    tpu.vector_store %arg16[%53, %c0_40], %52 {strides = array<i32>} : memref<48x4xf32, #tpu.memory_space<vmem>>, vector<16x4xf32>,
    %55 = vector.broadcast %40 : vector<16x1xf32> to vector<16x4xf32>
    %56 = vector.broadcast %1 : vector<1x4xf32> to vector<16x4xf32>
    %57 = arith.mulf %55, %56 : vector<16x4xf32>
    %58 = vector.broadcast %3 : vector<1x4xf32> to vector<16x4xf32>
    %59 = arith.addf %57, %58 : vector<16x4xf32>
    %60 = arith.negf %59 : vector<16x4xf32>
    %61 = math.exp %60 : vector<16x4xf32>
    %cst_41 = arith.constant 1.000000e+00 : f32
    %62 = vector.broadcast %cst_41 : f32 to vector<16x4xf32>
    %63 = arith.addf %62, %61 : vector<16x4xf32>
    %64 = arith.divf %62, %63 : vector<16x4xf32>
    %65 = arith.index_cast %43 : i32 to index
    %c0_42 = arith.constant 0 : index
    %66 = vector.load %arg17[%65, %c0_42] : memref<48x4xf32, #tpu.memory_space<vmem>>, vector<16x4xf32>
    tpu.vector_store %arg17[%65, %c0_42], %64 {strides = array<i32>} : memref<48x4xf32, #tpu.memory_space<vmem>>, vector<16x4xf32>,
    %c1_i32 = arith.constant 1 : i32
    %67 = arith.cmpi slt, %arg1, %c1_i32 : i32
    %68 = arith.extui %67 : i1 to i32
    %c0_i32_43 = arith.constant 0 : i32
    %69 = arith.cmpi ne, %68, %c0_i32_43 : i32
    scf.if %69 {
      %c0_44 = arith.constant 0 : index
      %c0_45 = arith.constant 0 : index
      %70 = vector.load %arg15[%c0_44, %c0_45] : memref<48x32xbf16, #tpu.memory_space<vmem>>, vector<48x32xbf16>
      %c0_46 = arith.constant 0 : index
      %c0_47 = arith.constant 0 : index
      %71 = vector.load %arg16[%c0_46, %c0_47] : memref<48x4xf32, #tpu.memory_space<vmem>>, vector<48x4xf32>
      %c0_48 = arith.constant 0 : index
      %c0_49 = arith.constant 0 : index
      %72 = vector.load %arg17[%c0_48, %c0_49] : memref<48x4xf32, #tpu.memory_space<vmem>>, vector<48x4xf32>
      %73 = arith.truncf %7 : vector<32x4xf32> to vector<32x4xbf16>
      %cst_50 = arith.constant dense<0.000000e+00> : vector<48x4xf32>
      %74 = tpu.matmul %70, %73, %cst_50 {dimension_numbers = #tpu.dot_dimension_numbers<[1], [0], [0], [1], [0, 0, 1, 1], [], []>} : vector<48x32xbf16>, vector<32x4xbf16>, vector<48x4xf32> -> vector<48x4xf32>
      %75 = arith.subf %74, %71 : vector<48x4xf32>
      %76 = arith.mulf %72, %75 : vector<48x4xf32>
      %77 = arith.truncf %76 : vector<48x4xf32> to vector<48x4xbf16>
      %cst_51 = arith.constant dense<0.000000e+00> : vector<32x4xf32>
      %78 = tpu.matmul %70, %77, %cst_51 {dimension_numbers = #tpu.dot_dimension_numbers<[0], [0], [1], [1], [0, 1, 1, 1], [], []>} : vector<48x32xbf16>, vector<48x4xbf16>, vector<32x4xf32> -> vector<32x4xf32>
      %cst_52 = arith.constant 0.00999999977 : f32
      %79 = vector.broadcast %cst_52 : f32 to vector<32x4xf32>
      %80 = arith.mulf %79, %7 : vector<32x4xf32>
      %81 = arith.addf %78, %80 : vector<32x4xf32>
      %82 = arith.truncf %81 : vector<32x4xf32> to vector<32x4xbf16>
      %cst_53 = arith.constant dense<0.000000e+00> : vector<48x4xf32>
      %83 = tpu.matmul %70, %82, %cst_53 {dimension_numbers = #tpu.dot_dimension_numbers<[1], [0], [0], [1], [0, 0, 1, 1], [], []>} : vector<48x32xbf16>, vector<32x4xbf16>, vector<48x4xf32> -> vector<48x4xf32>
      %84 = arith.mulf %81, %81 : vector<32x4xf32>
      %85 = vector.shape_cast %84 : vector<32x4xf32> to vector<1x32x4xf32>
      %cst_54 = arith.constant dense<0.000000e+00> : vector<1xf32>
      %86 = vector.multi_reduction <add>, %85, %cst_54 [1, 2] : vector<1x32x4xf32> to vector<1xf32>
      %87 = vector.shape_cast %86 : vector<1xf32> to vector<1x1x1xf32>
      %88 = vector.extract %87[0, 0, 0] : f32 from vector<1x1x1xf32>
      %89 = vector.broadcast %88 : f32 to vector<1x1xf32>
      %90 = arith.mulf %72, %83 : vector<48x4xf32>
      %91 = arith.mulf %90, %83 : vector<48x4xf32>
      %92 = vector.shape_cast %91 : vector<48x4xf32> to vector<1x48x4xf32>
      %cst_55 = arith.constant dense<0.000000e+00> : vector<1xf32>
      %93 = vector.multi_reduction <add>, %92, %cst_55 [1, 2] : vector<1x48x4xf32> to vector<1xf32>
      %94 = vector.shape_cast %93 : vector<1xf32> to vector<1x1x1xf32>
      %95 = vector.extract %94[0, 0, 0] : f32 from vector<1x1x1xf32>
      %96 = vector.broadcast %95 : f32 to vector<1x1xf32>
      %cst_56 = arith.constant 0.00999999977 : f32
      %97 = vector.broadcast %cst_56 : f32 to vector<1x1xf32>
      %98 = arith.mulf %97, %89 : vector<1x1xf32>
      %99 = arith.addf %96, %98 : vector<1x1xf32>
      %cst_57 = arith.constant 9.99999993E-9 : f32
      %100 = vector.broadcast %cst_57 : f32 to vector<1x1xf32>
      %101 = arith.maximumf %99, %100 : vector<1x1xf32>
      %102 = arith.divf %89, %101 : vector<1x1xf32>
      %103 = vector.broadcast %102 : vector<1x1xf32> to vector<32x4xf32>
      %104 = arith.mulf %103, %81 : vector<32x4xf32>
      %105 = arith.subf %7, %104 : vector<32x4xf32>
      %106 = arith.truncf %105 : vector<32x4xf32> to vector<32x4xbf16>
      %cst_58 = arith.constant dense<0.000000e+00> : vector<48x4xf32>
      %107 = tpu.matmul %70, %106, %cst_58 {dimension_numbers = #tpu.dot_dimension_numbers<[1], [0], [0], [1], [0, 0, 1, 1], [], []>} : vector<48x32xbf16>, vector<32x4xbf16>, vector<48x4xf32> -> vector<48x4xf32>
      %108 = arith.subf %107, %71 : vector<48x4xf32>
      %109 = arith.mulf %72, %108 : vector<48x4xf32>
      %110 = arith.truncf %109 : vector<48x4xf32> to vector<48x4xbf16>
      %cst_59 = arith.constant dense<0.000000e+00> : vector<32x4xf32>
      %111 = tpu.matmul %70, %110, %cst_59 {dimension_numbers = #tpu.dot_dimension_numbers<[0], [0], [1], [1], [0, 1, 1, 1], [], []>} : vector<48x32xbf16>, vector<48x4xbf16>, vector<32x4xf32> -> vector<32x4xf32>
      %cst_60 = arith.constant 0.00999999977 : f32
      %112 = vector.broadcast %cst_60 : f32 to vector<32x4xf32>
      %113 = arith.mulf %112, %105 : vector<32x4xf32>
      %114 = arith.addf %111, %113 : vector<32x4xf32>
      %115 = arith.truncf %114 : vector<32x4xf32> to vector<32x4xbf16>
      %cst_61 = arith.constant dense<0.000000e+00> : vector<48x4xf32>
      %116 = tpu.matmul %70, %115, %cst_61 {dimension_numbers = #tpu.dot_dimension_numbers<[1], [0], [0], [1], [0, 0, 1, 1], [], []>} : vector<48x32xbf16>, vector<32x4xbf16>, vector<48x4xf32> -> vector<48x4xf32>
      %117 = arith.mulf %114, %114 : vector<32x4xf32>
      %118 = vector.shape_cast %117 : vector<32x4xf32> to vector<1x32x4xf32>
      %cst_62 = arith.constant dense<0.000000e+00> : vector<1xf32>
      %119 = vector.multi_reduction <add>, %118, %cst_62 [1, 2] : vector<1x32x4xf32> to vector<1xf32>
      %120 = vector.shape_cast %119 : vector<1xf32> to vector<1x1x1xf32>
      %121 = vector.extract %120[0, 0, 0] : f32 from vector<1x1x1xf32>
      %122 = vector.broadcast %121 : f32 to vector<1x1xf32>
      %123 = arith.mulf %72, %116 : vector<48x4xf32>
      %124 = arith.mulf %123, %116 : vector<48x4xf32>
      %125 = vector.shape_cast %124 : vector<48x4xf32> to vector<1x48x4xf32>
      %cst_63 = arith.constant dense<0.000000e+00> : vector<1xf32>
      %126 = vector.multi_reduction <add>, %125, %cst_63 [1, 2] : vector<1x48x4xf32> to vector<1xf32>
      %127 = vector.shape_cast %126 : vector<1xf32> to vector<1x1x1xf32>
      %128 = vector.extract %127[0, 0, 0] : f32 from vector<1x1x1xf32>
      %129 = vector.broadcast %128 : f32 to vector<1x1xf32>
      %cst_64 = arith.constant 0.00999999977 : f32
      %130 = vector.broadcast %cst_64 : f32 to vector<1x1xf32>
      %131 = arith.mulf %130, %122 : vector<1x1xf32>
      %132 = arith.addf %129, %131 : vector<1x1xf32>
      %cst_65 = arith.constant 9.99999993E-9 : f32
      %133 = vector.broadcast %cst_65 : f32 to vector<1x1xf32>
      %134 = arith.maximumf %132, %133 : vector<1x1xf32>
      %135 = arith.divf %122, %134 : vector<1x1xf32>
      %136 = vector.broadcast %135 : vector<1x1xf32> to vector<32x4xf32>
      %137 = arith.mulf %136, %114 : vector<32x4xf32>
      %138 = arith.subf %105, %137 : vector<32x4xf32>
      %c0_66 = arith.constant 0 : index
      %c0_67 = arith.constant 0 : index
      %139 = vector.load %arg14[%c0_66, %c0_67] : memref<32x4xf32, #tpu.memory_space<vmem>>, vector<32x4xf32>
      tpu.vector_store %arg14[%c0_66, %c0_67], %138 {strides = array<i32>} : memref<32x4xf32, #tpu.memory_space<vmem>>, vector<32x4xf32>,
    } else {
    }
    return
  }
  func.func @transform_0(%arg0: i32, %arg1: i32) -> (i32, i32, i32) {
    %c0_i32 = arith.constant 0 : i32
    %c0_i32_0 = arith.constant 0 : i32
    %c0_i32_1 = arith.constant 0 : i32
    return %arg0, %c0_i32, %c0_i32_0 : i32, i32, i32
  }
  func.func @transform_1(%arg0: i32, %arg1: i32) -> (i32, i32, i32) {
    %c0_i32 = arith.constant 0 : i32
    %c0_i32_0 = arith.constant 0 : i32
    %c0_i32_1 = arith.constant 0 : i32
    return %arg0, %c0_i32, %c0_i32_0 : i32, i32, i32
  }
  func.func @transform_2(%arg0: i32, %arg1: i32) -> (i32, i32, i32, i32) {
    %c0_i32 = arith.constant 0 : i32
    %c0_i32_0 = arith.constant 0 : i32
    %c0_i32_1 = arith.constant 0 : i32
    return %arg1, %arg0, %c0_i32, %c0_i32_0 : i32, i32, i32, i32
  }
  func.func @transform_3(%arg0: i32, %arg1: i32) -> (i32, i32, i32, i32) {
    %c0_i32 = arith.constant 0 : i32
    %c0_i32_0 = arith.constant 0 : i32
    %c0_i32_1 = arith.constant 0 : i32
    return %arg1, %arg0, %c0_i32, %c0_i32_0 : i32, i32, i32, i32
  }
  func.func @transform_4(%arg0: i32, %arg1: i32) -> (i32, i32, i32, i32) {
    %c0_i32 = arith.constant 0 : i32
    %c0_i32_0 = arith.constant 0 : i32
    %c0_i32_1 = arith.constant 0 : i32
    return %arg1, %arg0, %c0_i32, %c0_i32_0 : i32, i32, i32, i32
  }
  func.func @transform_5(%arg0: i32, %arg1: i32) -> (i32, i32) {
    %c0_i32 = arith.constant 0 : i32
    %c0_i32_0 = arith.constant 0 : i32
    %c0_i32_1 = arith.constant 0 : i32
    return %c0_i32, %c0_i32_0 : i32, i32
  }
  func.func @transform_6(%arg0: i32, %arg1: i32) -> (i32, i32) {
    %c0_i32 = arith.constant 0 : i32
    %c0_i32_0 = arith.constant 0 : i32
    %c0_i32_1 = arith.constant 0 : i32
    return %c0_i32, %c0_i32_0 : i32, i32
  }
  func.func @transform_7(%arg0: i32, %arg1: i32) -> (i32, i32) {
    %c0_i32 = arith.constant 0 : i32
    %c0_i32_0 = arith.constant 0 : i32
    %c0_i32_1 = arith.constant 0 : i32
    return %c0_i32, %c0_i32_0 : i32, i32
  }
  func.func @transform_8(%arg0: i32, %arg1: i32) -> (i32, i32) {
    %c0_i32 = arith.constant 0 : i32
    %c0_i32_0 = arith.constant 0 : i32
    %c0_i32_1 = arith.constant 0 : i32
    return %c0_i32, %c0_i32_0 : i32, i32
  }
  func.func @transform_9(%arg0: i32, %arg1: i32) -> (i32, i32) {
    %c0_i32 = arith.constant 0 : i32
    %c0_i32_0 = arith.constant 0 : i32
    %c0_i32_1 = arith.constant 0 : i32
    return %c0_i32, %c0_i32_0 : i32, i32
  }
  func.func @transform_10(%arg0: i32, %arg1: i32) -> (i32, i32) {
    %c0_i32 = arith.constant 0 : i32
    %c0_i32_0 = arith.constant 0 : i32
    %c0_i32_1 = arith.constant 0 : i32
    return %c0_i32, %c0_i32_0 : i32, i32
  }
  func.func @transform_11(%arg0: i32, %arg1: i32) -> (i32, i32, i32, i32) {
    %c0_i32 = arith.constant 0 : i32
    %c0_i32_0 = arith.constant 0 : i32
    %c0_i32_1 = arith.constant 0 : i32
    return %arg1, %arg0, %c0_i32, %c0_i32_0 : i32, i32, i32, i32
  }
}

</mosaic_0001>

<llo_original>
// kernel: seg_dolf_tracker_forward.3
$region0: #{seg_dolf_tracker_forward.3}
  #allocation0 [shape = 'u32[]', space=smem, size = 0x4, offset = 0x4, fixed_abs, tag = 'smem constant byte address 0x4 - core index']
  #allocation1 [shape = 'u32[144,128]{1,0:T(1,128)}', space=vmem, size = 0x12000, scoped, tag = 'internal scratch']
  %s0 = inlined_call_operand.vmem [shape: bf16[96,768], index: 0, kind: input, shape index: {}]
  %s1 = inlined_call_operand.vmem [shape: bf16[768,32], index: 1, kind: input, shape index: {}]
  %s2 = inlined_call_operand.vmem [shape: f32[1,32], index: 2, kind: input, shape index: {}]
  %s3 = inlined_call_operand.vmem [shape: bf16[32,32], index: 3, kind: input, shape index: {}]
  %s4 = inlined_call_operand.vmem [shape: f32[1,32], index: 4, kind: input, shape index: {}]
  %s5 = inlined_call_operand.vmem [shape: bf16[96,32], index: 5, kind: output, shape index: {0}]
  %s6 = inlined_call_operand.vmem [shape: bf16[96,32], index: 6, kind: output, shape index: {1}]
  %7 = xla_tuple %s5, %s6
  %s8 = sld [smem:[#allocation0]]
  $region61: #{seg_dolf_tracker_forward.3} parent=0
    _
  %s10 = ssub.s32 1, %s8
  %s11 = scalar_select 0, %s10, %s8
  loop: start=0, step=1, limit=4
  $region2: #{seg_dolf_tracker_forward.3} parent=0 // loop_pre_header
    _
  $region3: #{seg_dolf_tracker_forward.3} parent=0 // loop_header
    %s13 = sphi 0, %s17
    %p14 = scmp.ge.s32.totalorder %s13, 4
    %s23 = sphi 0, %s25
    %s26 = sphi 0, %s23
    %s27 = sphi 0, %s26
    %s43 = sphi 0, %s27
    %s47 = sphi 0, %s47
    %s49 = sphi 0, %s47
    %s50 = sphi 0, %s49
    %s64 = sphi 0, %s50
    %s68 = sphi 0, %s68
    %s70 = sphi 0, %s68
    %s71 = sphi 0, %s70
    %s85 = sphi 0, %s71
    %s89 = sphi 0, %s89
    %s91 = sphi 0, %s89
    %s92 = sphi 0, %s91
    %s106 = sphi 0, %s92
    %s110 = sphi 0, %s110
    %s112 = sphi 0, %s110
    %s113 = sphi 0, %s112
    %s127 = sphi 0, %s113
    %s133 = sphi 0, %s135
    %s136 = sphi 0, %s133
    %s137 = sphi 0, %s136
    %s153 = sphi 0, %s137
    %s159 = sphi 0, %s161
    %s162 = sphi 0, %s159
    %s163 = sphi 0, %s162
    %s179 = sphi 0, %s163
  $region4: #{seg_dolf_tracker_forward.3} parent=0 // loop_header_branch
    %16 = sbr.rel (%p14) target = $region8
  $region5: #{seg_dolf_tracker_forward.3} parent=0 // loop_body
    %s18 = ssub.s32 %s13, 1
    %s19 = ssub.s32 %s13, 2
    %s20 = sadd.s32 %s13, 1
    %s21 = ssub.s32 %s13, %s20
    %p22 = scmp.eq.s32.totalorder %s21, 0
    %s24 = sadd.s32 %s23, 1
    %s25 = scalar_select %p22, %s23, %s24
    %p28 = pneg %p22
    %p29 = scmp.eq.s32.totalorder %s13, 1
    %p30 = por %p28, %p29
    %p31 = scmp.ne.s32.totalorder %s23, %s26
    %p32 = scmp.eq.s32.totalorder %s13, 0
    %p33 = por %p31, %p32
    %p34 = scmp.ne.s32.totalorder %s23, %s26
    %p35 = scmp.eq.s32.totalorder %s18, 1
    %p36 = por %p34, %p35
    %p37 = scmp.ne.s32.totalorder %s26, %s27
    %p38 = scmp.eq.s32.totalorder %s18, 0
    %p39 = por %p37, %p38
    %p40 = scmp.ne.s32.totalorder %s26, %s27
    %p41 = scmp.eq.s32.totalorder %s19, 1
    %p42 = por %p40, %p41
    %p44 = scmp.ne.s32.totalorder %s27, %s43
    %p45 = scmp.eq.s32.totalorder %s19, 0
    %p46 = por %p44, %p45
    %s48 = sadd.s32 %s47, 1
    %p51 = scmp.eq.s32.totalorder %s13, 1
    %p52 = scmp.ne.s32.totalorder %s47, %s49
    %p53 = scmp.eq.s32.totalorder %s13, 0
    %p54 = por %p52, %p53
    %p55 = scmp.ne.s32.totalorder %s47, %s49
    %p56 = scmp.eq.s32.totalorder %s18, 1
    %p57 = por %p55, %p56
    %p58 = scmp.ne.s32.totalorder %s49, %s50
    %p59 = scmp.eq.s32.totalorder %s18, 0
    %p60 = por %p58, %p59
    %p61 = scmp.ne.s32.totalorder %s49, %s50
    %p62 = scmp.eq.s32.totalorder %s19, 1
    %p63 = por %p61, %p62
    %p65 = scmp.ne.s32.totalorder %s50, %s64
    %p66 = scmp.eq.s32.totalorder %s19, 0
    %p67 = por %p65, %p66
    %s69 = sadd.s32 %s68, 1
    %p72 = scmp.eq.s32.totalorder %s13, 1
    %p73 = scmp.ne.s32.totalorder %s68, %s70
    %p74 = scmp.eq.s32.totalorder %s13, 0
    %p75 = por %p73, %p74
    %p76 = scmp.ne.s32.totalorder %s68, %s70
    %p77 = scmp.eq.s32.totalorder %s18, 1
    %p78 = por %p76, %p77
    %p79 = scmp.ne.s32.totalorder %s70, %s71
    %p80 = scmp.eq.s32.totalorder %s18, 0
    %p81 = por %p79, %p80
    %p82 = scmp.ne.s32.totalorder %s70, %s71
    %p83 = scmp.eq.s32.totalorder %s19, 1
    %p84 = por %p82, %p83
    %p86 = scmp.ne.s32.totalorder %s71, %s85
    %p87 = scmp.eq.s32.totalorder %s19, 0
    %p88 = por %p86, %p87
    %s90 = sadd.s32 %s89, 1
    %p93 = scmp.eq.s32.totalorder %s13, 1
    %p94 = scmp.ne.s32.totalorder %s89, %s91
    %p95 = scmp.eq.s32.totalorder %s13, 0
    %p96 = por %p94, %p95
    %p97 = scmp.ne.s32.totalorder %s89, %s91
    %p98 = scmp.eq.s32.totalorder %s18, 1
    %p99 = por %p97, %p98
    %p100 = scmp.ne.s32.totalorder %s91, %s92
    %p101 = scmp.eq.s32.totalorder %s18, 0
    %p102 = por %p100, %p101
    %p103 = scmp.ne.s32.totalorder %s91, %s92
    %p104 = scmp.eq.s32.totalorder %s19, 1
    %p105 = por %p103, %p104
    %p107 = scmp.ne.s32.totalorder %s92, %s106
    %p108 = scmp.eq.s32.totalorder %s19, 0
    %p109 = por %p107, %p108
    %s111 = sadd.s32 %s110, 1
    %p114 = scmp.eq.s32.totalorder %s13, 1
    %p115 = scmp.ne.s32.totalorder %s110, %s112
    %p116 = scmp.eq.s32.totalorder %s13, 0
    %p117 = por %p115, %p116
    %p118 = scmp.ne.s32.totalorder %s110, %s112
    %p119 = scmp.eq.s32.totalorder %s18, 1
    %p120 = por %p118, %p119
    %p121 = scmp.ne.s32.totalorder %s112, %s113
    %p122 = scmp.eq.s32.totalorder %s18, 0
    %p123 = por %p121, %p122
    %p124 = scmp.ne.s32.totalorder %s112, %s113
    %p125 = scmp.eq.s32.totalorder %s19, 1
    %p126 = por %p124, %p125
    %p128 = scmp.ne.s32.totalorder %s113, %s127
    %p129 = scmp.eq.s32.totalorder %s19, 0
    %p130 = por %p128, %p129
    %s131 = ssub.s32 %s13, %s20
    %p132 = scmp.eq.s32.totalorder %s131, 0
    %s134 = sadd.s32 %s133, 1
    %s135 = scalar_select %p132, %s133, %s134
    %p138 = pneg %p132
    %p139 = scmp.eq.s32.totalorder %s13, 1
    %p140 = por %p138, %p139
    %p141 = scmp.ne.s32.totalorder %s133, %s136
    %p142 = scmp.eq.s32.totalorder %s13, 0
    %p143 = por %p141, %p142
    %p144 = scmp.ne.s32.totalorder %s133, %s136
    %p145 = scmp.eq.s32.totalorder %s18, 1
    %p146 = por %p144, %p145
    %p147 = scmp.ne.s32.totalorder %s136, %s137
    %p148 = scmp.eq.s32.totalorder %s18, 0
    %p149 = por %p147, %p148
    %p150 = scmp.ne.s32.totalorder %s136, %s137
    %p151 = scmp.eq.s32.totalorder %s19, 1
    %p152 = por %p150, %p151
    %p154 = scmp.ne.s32.totalorder %s137, %s153
    %p155 = scmp.eq.s32.totalorder %s19, 0
    %p156 = por %p154, %p155
    %s157 = ssub.s32 %s13, %s20
    %p158 = scmp.eq.s32.totalorder %s157, 0
    %s160 = sadd.s32 %s159, 1
    %s161 = scalar_select %p158, %s159, %s160
    %p164 = pneg %p158
    %p165 = scmp.eq.s32.totalorder %s13, 1
    %p166 = por %p164, %p165
    %p167 = scmp.ne.s32.totalorder %s159, %s162
    %p168 = scmp.eq.s32.totalorder %s13, 0
    %p169 = por %p167, %p168
    %p170 = scmp.ne.s32.totalorder %s159, %s162
    %p171 = scmp.eq.s32.totalorder %s18, 1
    %p172 = por %p170, %p171
    %p173 = scmp.ne.s32.totalorder %s162, %s163
    %p174 = scmp.eq.s32.totalorder %s18, 0
    %p175 = por %p173, %p174
    %p176 = scmp.ne.s32.totalorder %s162, %s163
    %p177 = scmp.eq.s32.totalorder %s19, 1
    %p178 = por %p176, %p177
    %p180 = scmp.ne.s32.totalorder %s163, %s179
    %p181 = scmp.eq.s32.totalorder %s19, 0
    %p182 = por %p180, %p181
    %p183 = scmp.le.s32.totalorder 1, %s13
    %p184 = scmp.lt.s32.totalorder %s13, 3
    %p185 = pnand %p183, %p184
    %p186 = pneg %p185
    // Predicated region
    $region9: #{seg_dolf_tracker_forward.3} parent=5 // pred_check
      _
    $region10: #{seg_dolf_tracker_forward.3} parent=5 // pred_check_branch
      %188 = sbr.rel (%p185) target = $region12
    $region11: #{seg_dolf_tracker_forward.3} parent=5 // pred_region
      %s189 = ssub.s32 %s13, 1
      // Predicated region
      $region13: #{seg_dolf_tracker_forward.3} parent=11 // pred_check
        %p190 = pneg %p60
      $region14: #{seg_dolf_tracker_forward.3} parent=11 // pred_check_branch
        %192 = sbr.rel (%p190) target = $region16
      $region15: #{seg_dolf_tracker_forward.3} parent=11 // pred_region
        _
      $region16: #{seg_dolf_tracker_forward.3} parent=11 // pred_fallthru
        _
      // Predicated region
      $region17: #{seg_dolf_tracker_forward.3} parent=11 // pred_check
        %p193 = pneg %p81
      $region18: #{seg_dolf_tracker_forward.3} parent=11 // pred_check_branch
        %195 = sbr.rel (%p193) target = $region20
      $region19: #{seg_dolf_tracker_forward.3} parent=11 // pred_region
        _
      $region20: #{seg_dolf_tracker_forward.3} parent=11 // pred_fallthru
        _
      // Predicated region
      $region21: #{seg_dolf_tracker_forward.3} parent=11 // pred_check
        %p196 = pneg %p102
      $region22: #{seg_dolf_tracker_forward.3} parent=11 // pred_check_branch
        %198 = sbr.rel (%p196) target = $region24
      $region23: #{seg_dolf_tracker_forward.3} parent=11 // pred_region
        _
      $region24: #{seg_dolf_tracker_forward.3} parent=11 // pred_fallthru
        _
      // Predicated region
      $region25: #{seg_dolf_tracker_forward.3} parent=11 // pred_check
        %p199 = pneg %p123
      $region26: #{seg_dolf_tracker_forward.3} parent=11 // pred_check_branch
        %201 = sbr.rel (%p199) target = $region28
      $region27: #{seg_dolf_tracker_forward.3} parent=11 // pred_region
        _
      $region28: #{seg_dolf_tracker_forward.3} parent=11 // pred_fallthru
        _
    $region12: #{seg_dolf_tracker_forward.3} parent=5 // pred_fallthru
      _
    %p202 = scmp.lt.s32.totalorder %s13, 2
    // Predicated region
    $region29: #{seg_dolf_tracker_forward.3} parent=5 // pred_check
      %p203 = pneg %p202
    $region30: #{seg_dolf_tracker_forward.3} parent=5 // pred_check_branch
      %205 = sbr.rel (%p203) target = $region32
    $region31: #{seg_dolf_tracker_forward.3} parent=5 // pred_region
      // Predicated region
      $region33: #{seg_dolf_tracker_forward.3} parent=31 // pred_check
        %p206 = pneg %p33
      $region34: #{seg_dolf_tracker_forward.3} parent=31 // pred_check_branch
        %208 = sbr.rel (%p206) target = $region36
      $region35: #{seg_dolf_tracker_forward.3} parent=31 // pred_region
        %s209 = smul.u32 6, %s13
        %p210 = scmp.lt.s32.totalorder %s209, 11
        %s211 = scalar_select %p210, %s209, 11
        %s212 = smul.addr %s211, 6
        %s213 = smul.addr %s212, 4
        %s214 = scalar_lea.vmem %s0, %s213
        %s215 = smul.u32 6, %s13
      $region36: #{seg_dolf_tracker_forward.3} parent=31 // pred_fallthru
        _
    $region32: #{seg_dolf_tracker_forward.3} parent=5 // pred_fallthru
      _
    %p216 = scmp.le.s32.totalorder 1, %s13
    %p217 = scmp.lt.s32.totalorder %s13, 3
    %p218 = pnand %p216, %p217
    %p219 = pneg %p218
    // Predicated region
    $region37: #{seg_dolf_tracker_forward.3} parent=5 // pred_check
      _
    $region38: #{seg_dolf_tracker_forward.3} parent=5 // pred_check_branch
      %221 = sbr.rel (%p218) target = $region40
    $region39: #{seg_dolf_tracker_forward.3} parent=5 // pred_region
      %s222 = ssub.s32 %s13, 1
      %s223 = smul.u32 6, %s18
      %p224 = scmp.lt.s32.totalorder %s223, 11
      %s225 = scalar_select %p224, %s223, 11
      %s226 = smul.addr %s225, 6
      %s227 = smul.addr %s226, 4
      %s228 = scalar_lea.vmem %s0, %s227
      %p229 = pneg %p39
      %p230 = pneg %p36
      %p231 = pneg %p60
      %p232 = pneg %p57
      %p233 = pneg %p81
      %p234 = pneg %p78
      %p235 = pneg %p102
      %p236 = pneg %p99
      %p237 = pneg %p123
      %p238 = pneg %p120
      %p239 = pneg %p149
      %p240 = pneg %p146
      %s241 = smul.u32 6, %s18
      %p242 = scmp.lt.s32.totalorder %s241, 11
      %s243 = scalar_select %p242, %s241, 11
      %s244 = smul.addr %s243, 4
      %s245 = scalar_lea.vmem %s5, %s244
      %p246 = pneg %p175
      %p247 = pneg %p172
      %s248 = smul.u32 6, %s18
      %p249 = scmp.lt.s32.totalorder %s248, 11
      %s250 = scalar_select %p249, %s248, 11
      %s251 = smul.addr %s250, 4
      %s252 = scalar_lea.vmem %s6, %s251
      %s253 = smul.u32 6, %s18
      %p254 = scmp.lt.s32.totalorder %s253, 11
      %s255 = scalar_select %p254, %s253, 11
      %s256 = smul.addr %s255, 6
      %s257 = smul.addr %s256, 4
      %s258 = scalar_lea.vmem %s0, %s257
      %s259 = smul.u32 6, %s18
      %s260 = smul.u32 6, %s18
      %p261 = scmp.lt.s32.totalorder %s260, 11
      %s262 = scalar_select %p261, %s260, 11
      %s263 = smul.addr %s262, 4
      %s264 = scalar_lea.vmem %s5, %s263
      %s265 = smul.u32 6, %s18
      %s266 = smul.u32 6, %s18
      %p267 = scmp.lt.s32.totalorder %s266, 11
      %s268 = scalar_select %p267, %s266, 11
      %s269 = smul.addr %s268, 4
      %s270 = scalar_lea.vmem %s6, %s269
      %s271 = smul.u32 6, %s18
      %v273 = vld [vmem:[%s258] sm:$0xff]
      %v274 = vld [vmem:[%s258 + $0x8] sm:$0xff]
      %v275 = vld [vmem:[%s258 + $0x10] sm:$0xff]
      %v276 = vld [vmem:[%s258 + $0x18] sm:$0xff]
      %v277 = vld [vmem:[%s258 + $0x20] sm:$0xff]
      %v278 = vld [vmem:[%s258 + $0x28] sm:$0xff]
      %v279 = vld [vmem:[%s258 + $0x30] sm:$0xff]
      %v280 = vld [vmem:[%s258 + $0x38] sm:$0xff]
      %v281 = vld [vmem:[%s258 + $0x40] sm:$0xff]
      %v282 = vld [vmem:[%s258 + $0x48] sm:$0xff]
      %v283 = vld [vmem:[%s258 + $0x50] sm:$0xff]
      %v284 = vld [vmem:[%s258 + $0x58] sm:$0xff]
      %v285 = vld [vmem:[%s258 + $0x60] sm:$0xff]
      %v286 = vld [vmem:[%s258 + $0x68] sm:$0xff]
      %v287 = vld [vmem:[%s258 + $0x70] sm:$0xff]
      %v288 = vld [vmem:[%s258 + $0x78] sm:$0xff]
      %v289 = vld [vmem:[%s258 + $0x80] sm:$0xff]
      %v290 = vld [vmem:[%s258 + $0x88] sm:$0xff]
      %v291 = vld [vmem:[%s1] sm:$0xf]
      %v292 = vld [vmem:[%s1 + $0x4] sm:$0xf]
      %v293 = vld [vmem:[%s1 + $0x8] sm:$0xf]
      %v294 = vld [vmem:[%s1 + $0xc] sm:$0xf]
      %v295 = vld [vmem:[%s1 + $0x10] sm:$0xf]
      %v296 = vld [vmem:[%s1 + $0x14] sm:$0xf]
      %v297 = vld [vmem:[%s1 + $0x18] sm:$0xf]
      %v298 = vld [vmem:[%s1 + $0x1c] sm:$0xf]
      %v299 = vld [vmem:[%s1 + $0x20] sm:$0xf]
      %v300 = vld [vmem:[%s1 + $0x24] sm:$0xf]
      %v301 = vld [vmem:[%s1 + $0x28] sm:$0xf]
      %v302 = vld [vmem:[%s1 + $0x2c] sm:$0xf]
      %v303 = vld [vmem:[%s1 + $0x30] sm:$0xf]
      %v304 = vld [vmem:[%s1 + $0x34] sm:$0xf]
      %v305 = vld [vmem:[%s1 + $0x38] sm:$0xf]
      %v306 = vld [vmem:[%s1 + $0x3c] sm:$0xf]
      %v307 = vld [vmem:[%s1 + $0x40] sm:$0xf]
      %v308 = vld [vmem:[%s1 + $0x44] sm:$0xf]
      %v309 = vld [vmem:[%s1 + $0x48] sm:$0xf]
      %v310 = vld [vmem:[%s1 + $0x4c] sm:$0xf]
      %v311 = vld [vmem:[%s1 + $0x50] sm:$0xf]
      %v312 = vld [vmem:[%s1 + $0x54] sm:$0xf]
      %v313 = vld [vmem:[%s1 + $0x58] sm:$0xf]
      %v314 = vld [vmem:[%s1 + $0x5c] sm:$0xf]
      %v315 = vld [vmem:[%s1 + $0x60] sm:$0xf]
      %v316 = vld [vmem:[%s1 + $0x64] sm:$0xf]
      %v317 = vld [vmem:[%s1 + $0x68] sm:$0xf]
      %v318 = vld [vmem:[%s1 + $0x6c] sm:$0xf]
      %v319 = vld [vmem:[%s1 + $0x70] sm:$0xf]
      %v320 = vld [vmem:[%s1 + $0x74] sm:$0xf]
      %v321 = vld [vmem:[%s1 + $0x78] sm:$0xf]
      %v322 = vld [vmem:[%s1 + $0x7c] sm:$0xf]
      %v323 = vld [vmem:[%s1 + $0x80] sm:$0xf]
      %v324 = vld [vmem:[%s1 + $0x84] sm:$0xf]
      %v325 = vld [vmem:[%s1 + $0x88] sm:$0xf]
      %v326 = vld [vmem:[%s1 + $0x8c] sm:$0xf]
      %v327 = vld [vmem:[%s1 + $0x90] sm:$0xf]
      %v328 = vld [vmem:[%s1 + $0x94] sm:$0xf]
      %v329 = vld [vmem:[%s1 + $0x98] sm:$0xf]
      %v330 = vld [vmem:[%s1 + $0x9c] sm:$0xf]
      %v331 = vld [vmem:[%s1 + $0xa0] sm:$0xf]
      %v332 = vld [vmem:[%s1 + $0xa4] sm:$0xf]
      %v333 = vld [vmem:[%s1 + $0xa8] sm:$0xf]
      %v334 = vld [vmem:[%s1 + $0xac] sm:$0xf]
      %v335 = vld [vmem:[%s1 + $0xb0] sm:$0xf]
      %v336 = vld [vmem:[%s1 + $0xb4] sm:$0xf]
      %v337 = vld [vmem:[%s1 + $0xb8] sm:$0xf]
      %v338 = vld [vmem:[%s1 + $0xbc] sm:$0xf]
      %v339 = vld [vmem:[%s1 + $0xc0] sm:$0xf]
      %v340 = vld [vmem:[%s1 + $0xc4] sm:$0xf]
      %v341 = vld [vmem:[%s1 + $0xc8] sm:$0xf]
      %v342 = vld [vmem:[%s1 + $0xcc] sm:$0xf]
      %v343 = vld [vmem:[%s1 + $0xd0] sm:$0xf]
      %v344 = vld [vmem:[%s1 + $0xd4] sm:$0xf]
      %v345 = vld [vmem:[%s1 + $0xd8] sm:$0xf]
      %v346 = vld [vmem:[%s1 + $0xdc] sm:$0xf]
      %v347 = vld [vmem:[%s1 + $0xe0] sm:$0xf]
      %v348 = vld [vmem:[%s1 + $0xe4] sm:$0xf]
      %v349 = vld [vmem:[%s1 + $0xe8] sm:$0xf]
      %v350 = vld [vmem:[%s1 + $0xec] sm:$0xf]
      %v351 = vld [vmem:[%s1 + $0xf0] sm:$0xf]
      %v352 = vld [vmem:[%s1 + $0xf4] sm:$0xf]
      %v353 = vld [vmem:[%s1 + $0xf8] sm:$0xf]
      %v354 = vld [vmem:[%s1 + $0xfc] sm:$0xf]
      %v355 = vld [vmem:[%s1 + $0x100] sm:$0xf]
      %v356 = vld [vmem:[%s1 + $0x104] sm:$0xf]
      %v357 = vld [vmem:[%s1 + $0x108] sm:$0xf]
      %v358 = vld [vmem:[%s1 + $0x10c] sm:$0xf]
      %v359 = vld [vmem:[%s1 + $0x110] sm:$0xf]
      %v360 = vld [vmem:[%s1 + $0x114] sm:$0xf]
      %v361 = vld [vmem:[%s1 + $0x118] sm:$0xf]
      %v362 = vld [vmem:[%s1 + $0x11c] sm:$0xf]
      %v363 = vld [vmem:[%s1 + $0x120] sm:$0xf]
      %v364 = vld [vmem:[%s1 + $0x124] sm:$0xf]
      %v365 = vld [vmem:[%s1 + $0x128] sm:$0xf]
      %v366 = vld [vmem:[%s1 + $0x12c] sm:$0xf]
      %v367 = vld [vmem:[%s1 + $0x130] sm:$0xf]
      %v368 = vld [vmem:[%s1 + $0x134] sm:$0xf]
      %v369 = vld [vmem:[%s1 + $0x138] sm:$0xf]
      %v370 = vld [vmem:[%s1 + $0x13c] sm:$0xf]
      %v371 = vld [vmem:[%s1 + $0x140] sm:$0xf]
      %v372 = vld [vmem:[%s1 + $0x144] sm:$0xf]
      %v373 = vld [vmem:[%s1 + $0x148] sm:$0xf]
      %v374 = vld [vmem:[%s1 + $0x14c] sm:$0xf]
      %v375 = vld [vmem:[%s1 + $0x150] sm:$0xf]
      %v376 = vld [vmem:[%s1 + $0x154] sm:$0xf]
      %v377 = vld [vmem:[%s1 + $0x158] sm:$0xf]
      %v378 = vld [vmem:[%s1 + $0x15c] sm:$0xf]
      %v379 = vld [vmem:[%s1 + $0x160] sm:$0xf]
      %v380 = vld [vmem:[%s1 + $0x164] sm:$0xf]
      %v381 = vld [vmem:[%s1 + $0x168] sm:$0xf]
      %v382 = vld [vmem:[%s1 + $0x16c] sm:$0xf]
      %v383 = vld [vmem:[%s1 + $0x170] sm:$0xf]
      %v384 = vld [vmem:[%s1 + $0x174] sm:$0xf]
      %v385 = vld [vmem:[%s1 + $0x178] sm:$0xf]
      %v386 = vld [vmem:[%s1 + $0x17c] sm:$0xf]
      %v387 = vld [vmem:[%s2] sm:$0x1]
      %v389 = vlaneseq
      %v390 = vshrl.u32 %v389, 7
      %v391 = vsub.s32 0, %v390
      %v392 = vrot.slane %v387, %v391
      %v412 = vunpack.c.l.b16 %v273
      %v413 = vunpack.c.h.b16 %v273
      %v414 = vunpack.c.l.b16 %v274
      %v415 = vunpack.c.h.b16 %v274
      %v416 = vunpack.c.l.b16 %v275
      %v417 = vunpack.c.h.b16 %v275
      %v418 = vunpack.c.l.b16 %v276
      %v419 = vunpack.c.h.b16 %v276
      %v420 = vunpack.c.l.b16 %v277
      %v421 = vunpack.c.h.b16 %v277
      %v422 = vunpack.c.l.b16 %v278
      %v423 = vunpack.c.h.b16 %v278
      %v424 = vunpack.c.l.b16 %v279
      %v425 = vunpack.c.h.b16 %v279
      %v426 = vunpack.c.l.b16 %v280
      %v427 = vunpack.c.h.b16 %v280
      %v428 = vunpack.c.l.b16 %v281
      %v429 = vunpack.c.h.b16 %v281
      %v430 = vunpack.c.l.b16 %v282
      %v431 = vunpack.c.h.b16 %v282
      %v432 = vunpack.c.l.b16 %v283
      %v433 = vunpack.c.h.b16 %v283
      %v434 = vunpack.c.l.b16 %v284
      %v435 = vunpack.c.h.b16 %v284
      %v436 = vunpack.c.l.b16 %v285
      %v437 = vunpack.c.h.b16 %v285
      %v438 = vunpack.c.l.b16 %v286
      %v439 = vunpack.c.h.b16 %v286
      %v440 = vunpack.c.l.b16 %v287
      %v441 = vunpack.c.h.b16 %v287
      %v442 = vunpack.c.l.b16 %v288
      %v443 = vunpack.c.h.b16 %v288
      %v444 = vunpack.c.l.b16 %v289
      %v445 = vunpack.c.h.b16 %v289
      %v446 = vunpack.c.l.b16 %v290
      %v447 = vunpack.c.h.b16 %v290
      %v448 = vpack.c.b16 %v418, %v412
      %v449 = vpack.c.b16 %v419, %v413
      %v450 = vpack.c.b16 %v420, %v414
      %v451 = vpack.c.b16 %v421, %v415
      %v452 = vpack.c.b16 %v422, %v416
      %v453 = vpack.c.b16 %v423, %v417
      %v454 = vpack.c.b16 %v430, %v424
      %v455 = vpack.c.b16 %v431, %v425
      %v456 = vpack.c.b16 %v432, %v426
      %v457 = vpack.c.b16 %v433, %v427
      %v458 = vpack.c.b16 %v434, %v428
      %v459 = vpack.c.b16 %v435, %v429
      %v460 = vpack.c.b16 %v442, %v436
      %v461 = vpack.c.b16 %v443, %v437
      %v462 = vpack.c.b16 %v444, %v438
      %v463 = vpack.c.b16 %v445, %v439
      %v464 = vpack.c.b16 %v446, %v440
      %v465 = vpack.c.b16 %v447, %v441
      %v580 = vunpack.c.l.b16 %v291
      %v581 = vunpack.c.l.b16 %v292
      %v582 = vunpack.c.l.b16 %v293
      %v583 = vunpack.c.l.b16 %v294
      %v584 = vunpack.c.l.b16 %v295
      %v585 = vunpack.c.l.b16 %v296
      %v586 = vunpack.c.l.b16 %v297
      %v587 = vunpack.c.l.b16 %v298
      %v588 = vunpack.c.l.b16 %v299
      %v589 = vunpack.c.l.b16 %v300
      %v590 = vunpack.c.l.b16 %v301
      %v591 = vunpack.c.l.b16 %v302
      %v592 = vunpack.c.l.b16 %v303
      %v593 = vunpack.c.l.b16 %v304
      %v594 = vunpack.c.l.b16 %v305
      %v595 = vunpack.c.l.b16 %v306
      %v596 = vunpack.c.l.b16 %v307
      %v597 = vunpack.c.l.b16 %v308
      %v598 = vunpack.c.l.b16 %v309
      %v599 = vunpack.c.l.b16 %v310
      %v600 = vunpack.c.l.b16 %v311
      %v601 = vunpack.c.l.b16 %v312
      %v602 = vunpack.c.l.b16 %v313
      %v603 = vunpack.c.l.b16 %v314
      %v604 = vunpack.c.l.b16 %v315
      %v605 = vunpack.c.l.b16 %v316
      %v606 = vunpack.c.l.b16 %v317
      %v607 = vunpack.c.l.b16 %v318
      %v608 = vunpack.c.l.b16 %v319
      %v609 = vunpack.c.l.b16 %v320
      %v610 = vunpack.c.l.b16 %v321
      %v611 = vunpack.c.l.b16 %v322
      %v612 = vunpack.c.l.b16 %v323
      %v613 = vunpack.c.l.b16 %v324
      %v614 = vunpack.c.l.b16 %v325
      %v615 = vunpack.c.l.b16 %v326
      %v616 = vunpack.c.l.b16 %v327
      %v617 = vunpack.c.l.b16 %v328
      %v618 = vunpack.c.l.b16 %v329
      %v619 = vunpack.c.l.b16 %v330
      %v620 = vunpack.c.l.b16 %v331
      %v621 = vunpack.c.l.b16 %v332
      %v622 = vunpack.c.l.b16 %v333
      %v623 = vunpack.c.l.b16 %v334
      %v624 = vunpack.c.l.b16 %v335
      %v625 = vunpack.c.l.b16 %v336
      %v626 = vunpack.c.l.b16 %v337
      %v627 = vunpack.c.l.b16 %v338
      %v628 = vunpack.c.l.b16 %v339
      %v629 = vunpack.c.l.b16 %v340
      %v630 = vunpack.c.l.b16 %v341
      %v631 = vunpack.c.l.b16 %v342
      %v632 = vunpack.c.l.b16 %v343
      %v633 = vunpack.c.l.b16 %v344
      %v634 = vunpack.c.l.b16 %v345
      %v635 = vunpack.c.l.b16 %v346
      %v636 = vunpack.c.l.b16 %v347
      %v637 = vunpack.c.l.b16 %v348
      %v638 = vunpack.c.l.b16 %v349
      %v639 = vunpack.c.l.b16 %v350
      %v640 = vunpack.c.l.b16 %v351
      %v641 = vunpack.c.l.b16 %v352
      %v642 = vunpack.c.l.b16 %v353
      %v643 = vunpack.c.l.b16 %v354
      %v644 = vunpack.c.l.b16 %v355
      %v645 = vunpack.c.l.b16 %v356
      %v646 = vunpack.c.l.b16 %v357
      %v647 = vunpack.c.l.b16 %v358
      %v648 = vunpack.c.l.b16 %v359
      %v649 = vunpack.c.l.b16 %v360
      %v650 = vunpack.c.l.b16 %v361
      %v651 = vunpack.c.l.b16 %v362
      %v652 = vunpack.c.l.b16 %v363
      %v653 = vunpack.c.l.b16 %v364
      %v654 = vunpack.c.l.b16 %v365
      %v655 = vunpack.c.l.b16 %v366
      %v656 = vunpack.c.l.b16 %v367
      %v657 = vunpack.c.l.b16 %v368
      %v658 = vunpack.c.l.b16 %v369
      %v659 = vunpack.c.l.b16 %v370
      %v660 = vunpack.c.l.b16 %v371
      %v661 = vunpack.c.l.b16 %v372
      %v662 = vunpack.c.l.b16 %v373
      %v663 = vunpack.c.l.b16 %v374
      %v664 = vunpack.c.l.b16 %v375
      %v665 = vunpack.c.l.b16 %v376
      %v666 = vunpack.c.l.b16 %v377
      %v667 = vunpack.c.l.b16 %v378
      %v668 = vunpack.c.l.b16 %v379
      %v669 = vunpack.c.l.b16 %v380
      %v670 = vunpack.c.l.b16 %v381
      %v671 = vunpack.c.l.b16 %v382
      %v672 = vunpack.c.l.b16 %v383
      %v673 = vunpack.c.l.b16 %v384
      %v674 = vunpack.c.l.b16 %v385
      %v675 = vunpack.c.l.b16 %v386
      %v676 = vpack.c.b16 %v581, %v580
      %v677 = vpack.c.b16 %v583, %v582
      %v678 = vpack.c.b16 %v585, %v584
      %v679 = vpack.c.b16 %v587, %v586
      %v680 = vpack.c.b16 %v589, %v588
      %v681 = vpack.c.b16 %v591, %v590
      %v682 = vpack.c.b16 %v593, %v592
      %v683 = vpack.c.b16 %v595, %v594
      %v684 = vpack.c.b16 %v597, %v596
      %v685 = vpack.c.b16 %v599, %v598
      %v686 = vpack.c.b16 %v601, %v600
      %v687 = vpack.c.b16 %v603, %v602
      %v688 = vpack.c.b16 %v605, %v604
      %v689 = vpack.c.b16 %v607, %v606
      %v690 = vpack.c.b16 %v609, %v608
      %v691 = vpack.c.b16 %v611, %v610
      %v692 = vpack.c.b16 %v613, %v612
      %v693 = vpack.c.b16 %v615, %v614
      %v694 = vpack.c.b16 %v617, %v616
      %v695 = vpack.c.b16 %v619, %v618
      %v696 = vpack.c.b16 %v621, %v620
      %v697 = vpack.c.b16 %v623, %v622
      %v698 = vpack.c.b16 %v625, %v624
      %v699 = vpack.c.b16 %v627, %v626
      %v700 = vpack.c.b16 %v629, %v628
      %v701 = vpack.c.b16 %v631, %v630
      %v702 = vpack.c.b16 %v633, %v632
      %v703 = vpack.c.b16 %v635, %v634
      %v704 = vpack.c.b16 %v637, %v636
      %v705 = vpack.c.b16 %v639, %v638
      %v706 = vpack.c.b16 %v641, %v640
      %v707 = vpack.c.b16 %v643, %v642
      %v708 = vpack.c.b16 %v645, %v644
      %v709 = vpack.c.b16 %v647, %v646
      %v710 = vpack.c.b16 %v649, %v648
      %v711 = vpack.c.b16 %v651, %v650
      %v712 = vpack.c.b16 %v653, %v652
      %v713 = vpack.c.b16 %v655, %v654
      %v714 = vpack.c.b16 %v657, %v656
      %v715 = vpack.c.b16 %v659, %v658
      %v716 = vpack.c.b16 %v661, %v660
      %v717 = vpack.c.b16 %v663, %v662
      %v718 = vpack.c.b16 %v665, %v664
      %v719 = vpack.c.b16 %v667, %v666
      %v720 = vpack.c.b16 %v669, %v668
      %v721 = vpack.c.b16 %v671, %v670
      %v722 = vpack.c.b16 %v673, %v672
      %v723 = vpack.c.b16 %v675, %v674
      %772 = vmatprep.subr.bf16.mxu0 0
      %773 = vmatpush1.bf16.msra.mxu0 %v676
      %774 = vmatprep.subr.bf16.mxu0 0
      %775 = vmatpush1.bf16.msra.mxu0 %v677
      %776 = vmatprep.subr.bf16.mxu0 0
      %777 = vmatpush1.bf16.msra.mxu0 %v678
      %778 = vmatprep.subr.bf16.mxu0 0
      %779 = vmatpush1.bf16.msra.mxu0 %v679
      %780 = vmatprep.subr.bf16.mxu0 0
      %781 = vmatpush1.bf16.msra.mxu0 %v680
      %782 = vmatprep.subr.bf16.mxu0 0
      %783 = vmatpush1.bf16.msra.mxu0 %v681
      %784 = vmatprep.subr.bf16.mxu0 0
      %785 = vmatpush1.bf16.msra.mxu0 %v682
      %786 = vmatprep.subr.bf16.mxu0 0
      %787 = vmatpush1.bf16.msra.mxu0 %v683
      %788 = vmatprep.subr.bf16.mxu0 0
      %789 = vmatpush1.bf16.msra.mxu0 %v684
      %790 = vmatprep.subr.bf16.mxu0 0
      %791 = vmatpush1.bf16.msra.mxu0 %v685
      %792 = vmatprep.subr.bf16.mxu0 0
      %793 = vmatpush1.bf16.msra.mxu0 %v686
      %794 = vmatprep.subr.bf16.mxu0 0
      %795 = vmatpush1.bf16.msra.mxu0 %v687
      %796 = vmatprep.subr.bf16.mxu0 0
      %797 = vmatpush1.bf16.msra.mxu0 %v688
      %798 = vmatprep.subr.bf16.mxu0 0
      %799 = vmatpush1.bf16.msra.mxu0 %v689
      %800 = vmatprep.subr.bf16.mxu0 0
      %801 = vmatpush1.bf16.msra.mxu0 %v690
      %802 = vmatprep.subr.bf16.mxu0 0
      %803 = vmatpush1.bf16.msra.mxu0 %v691
      %804 = vmatprep.mubr.bf16.mxu0 %v449
      %805 = vmatmul.mubr.bf16.gmra.mrb[0].mxu0 %v448
      %v806 = vpop.f32.mrb[0].mxu0
      %v807 = vadd.f32 %v392, %v806
      %v808 = vpop.f32.mrb[0].mxu0
      %v809 = vpop.f32.mrb[0].mxu0
      %v810 = vadd.f32 %v392, %v809
      %v811 = vpop.f32.mrb[0].mxu0
      %812 = vmatprep.mubr.bf16.mxu0 %v455
      %813 = vmatmul.mubr.bf16.gmra.mrb[0].mxu0 %v454
      %v814 = vpop.f32.mrb[0].mxu0
      %v815 = vadd.f32 %v392, %v814
      %v816 = vpop.f32.mrb[0].mxu0
      %v817 = vpop.f32.mrb[0].mxu0
      %v818 = vadd.f32 %v392, %v817
      %v819 = vpop.f32.mrb[0].mxu0
      %820 = vmatprep.mubr.bf16.mxu0 %v461
      %821 = vmatmul.mubr.bf16.gmra.mrb[0].mxu0 %v460
      %v822 = vpop.f32.mrb[0].mxu0
      %v823 = vadd.f32 %v392, %v822
      %v824 = vpop.f32.mrb[0].mxu0
      %v825 = vpop.f32.mrb[0].mxu0
      %v826 = vadd.f32 %v392, %v825
      %v827 = vpop.f32.mrb[0].mxu0
      %828 = vdwg.mxu0
      %829 = vmatprep.subr.bf16.mxu0 0
      %830 = vmatpush1.bf16.msra.mxu0 %v692
      %831 = vmatprep.subr.bf16.mxu0 0
      %832 = vmatpush1.bf16.msra.mxu0 %v693
      %833 = vmatprep.subr.bf16.mxu0 0
      %834 = vmatpush1.bf16.msra.mxu0 %v694
      %835 = vmatprep.subr.bf16.mxu0 0
      %836 = vmatpush1.bf16.msra.mxu0 %v695
      %837 = vmatprep.subr.bf16.mxu0 0
      %838 = vmatpush1.bf16.msra.mxu0 %v696
      %839 = vmatprep.subr.bf16.mxu0 0
      %840 = vmatpush1.bf16.msra.mxu0 %v697
      %841 = vmatprep.subr.bf16.mxu0 0
      %842 = vmatpush1.bf16.msra.mxu0 %v698
      %843 = vmatprep.subr.bf16.mxu0 0
      %844 = vmatpush1.bf16.msra.mxu0 %v699
      %845 = vmatprep.subr.bf16.mxu0 0
      %846 = vmatpush1.bf16.msra.mxu0 %v700
      %847 = vmatprep.subr.bf16.mxu0 0
      %848 = vmatpush1.bf16.msra.mxu0 %v701
      %849 = vmatprep.subr.bf16.mxu0 0
      %850 = vmatpush1.bf16.msra.mxu0 %v702
      %851 = vmatprep.subr.bf16.mxu0 0
      %852 = vmatpush1.bf16.msra.mxu0 %v703
      %853 = vmatprep.subr.bf16.mxu0 0
      %854 = vmatpush1.bf16.msra.mxu0 %v704
      %855 = vmatprep.subr.bf16.mxu0 0
      %856 = vmatpush1.bf16.msra.mxu0 %v705
      %857 = vmatprep.subr.bf16.mxu0 0
      %858 = vmatpush1.bf16.msra.mxu0 %v706
      %859 = vmatprep.subr.bf16.mxu0 0
      %860 = vmatpush1.bf16.msra.mxu0 %v707
      %861 = vmatprep.mubr.bf16.mxu0 %v451
      %862 = vmatmul.mubr.bf16.gmra.mrb[0].mxu0 %v450
      %v863 = vpop.f32.mrb[0].mxu0
      %v864 = vadd.f32 %v807, %v863
      %v865 = vpop.f32.mrb[0].mxu0
      %v866 = vpop.f32.mrb[0].mxu0
      %v867 = vadd.f32 %v810, %v866
      %v868 = vpop.f32.mrb[0].mxu0
      %869 = vmatprep.mubr.bf16.mxu0 %v457
      %870 = vmatmul.mubr.bf16.gmra.mrb[0].mxu0 %v456
      %v871 = vpop.f32.mrb[0].mxu0
      %v872 = vadd.f32 %v815, %v871
      %v873 = vpop.f32.mrb[0].mxu0
      %v874 = vpop.f32.mrb[0].mxu0
      %v875 = vadd.f32 %v818, %v874
      %v876 = vpop.f32.mrb[0].mxu0
      %877 = vmatprep.mubr.bf16.mxu0 %v463
      %878 = vmatmul.mubr.bf16.gmra.mrb[0].mxu0 %v462
      %v879 = vpop.f32.mrb[0].mxu0
      %v880 = vadd.f32 %v823, %v879
      %v881 = vpop.f32.mrb[0].mxu0
      %v882 = vpop.f32.mrb[0].mxu0
      %v883 = vadd.f32 %v826, %v882
      %v884 = vpop.f32.mrb[0].mxu0
      %885 = vdwg.mxu0
      %886 = vmatprep.subr.bf16.mxu0 0
      %887 = vmatpush1.bf16.msra.mxu0 %v708
      %888 = vmatprep.subr.bf16.mxu0 0
      %889 = vmatpush1.bf16.msra.mxu0 %v709
      %890 = vmatprep.subr.bf16.mxu0 0
      %891 = vmatpush1.bf16.msra.mxu0 %v710
      %892 = vmatprep.subr.bf16.mxu0 0
      %893 = vmatpush1.bf16.msra.mxu0 %v711
      %894 = vmatprep.subr.bf16.mxu0 0
      %895 = vmatpush1.bf16.msra.mxu0 %v712
      %896 = vmatprep.subr.bf16.mxu0 0
      %897 = vmatpush1.bf16.msra.mxu0 %v713
      %898 = vmatprep.subr.bf16.mxu0 0
      %899 = vmatpush1.bf16.msra.mxu0 %v714
      %900 = vmatprep.subr.bf16.mxu0 0
      %901 = vmatpush1.bf16.msra.mxu0 %v715
      %902 = vmatprep.subr.bf16.mxu0 0
      %903 = vmatpush1.bf16.msra.mxu0 %v716
      %904 = vmatprep.subr.bf16.mxu0 0
      %905 = vmatpush1.bf16.msra.mxu0 %v717
      %906 = vmatprep.subr.bf16.mxu0 0
      %907 = vmatpush1.bf16.msra.mxu0 %v718
      %908 = vmatprep.subr.bf16.mxu0 0
      %909 = vmatpush1.bf16.msra.mxu0 %v719
      %910 = vmatprep.subr.bf16.mxu0 0
      %911 = vmatpush1.bf16.msra.mxu0 %v720
      %912 = vmatprep.subr.bf16.mxu0 0
      %913 = vmatpush1.bf16.msra.mxu0 %v721
      %914 = vmatprep.subr.bf16.mxu0 0
      %915 = vmatpush1.bf16.msra.mxu0 %v722
      %916 = vmatprep.subr.bf16.mxu0 0
      %917 = vmatpush1.bf16.msra.mxu0 %v723
      %918 = vmatprep.mubr.bf16.mxu0 %v453
      %919 = vmatmul.mubr.bf16.gmra.mrb[0].mxu0 %v452
      %v920 = vpop.f32.mrb[0].mxu0
      %v921 = vadd.f32 %v864, %v920
      %v922 = vpop.f32.mrb[0].mxu0
      %v923 = vpop.f32.mrb[0].mxu0
      %v924 = vadd.f32 %v867, %v923
      %v925 = vpop.f32.mrb[0].mxu0
      %926 = vmatprep.mubr.bf16.mxu0 %v459
      %927 = vmatmul.mubr.bf16.gmra.mrb[0].mxu0 %v458
      %v928 = vpop.f32.mrb[0].mxu0
      %v929 = vadd.f32 %v872, %v928
      %v930 = vpop.f32.mrb[0].mxu0
      %v931 = vpop.f32.mrb[0].mxu0
      %v932 = vadd.f32 %v875, %v931
      %v933 = vpop.f32.mrb[0].mxu0
      %934 = vmatprep.mubr.bf16.mxu0 %v465
      %935 = vmatmul.mubr.bf16.gmra.mrb[0].mxu0 %v464
      %v936 = vpop.f32.mrb[0].mxu0
      %v937 = vadd.f32 %v880, %v936
      %v938 = vpop.f32.mrb[0].mxu0
      %v939 = vpop.f32.mrb[0].mxu0
      %v940 = vadd.f32 %v883, %v939
      %v941 = vpop.f32.mrb[0].mxu0
      %942 = vdwg.mxu0
      %v943 = vmax.f32 %v921, 0.0
      %v944 = vmax.f32 %v924, 0.0
      %v945 = vmax.f32 %v929, 0.0
      %v946 = vmax.f32 %v932, 0.0
      %v947 = vmax.f32 %v937, 0.0
      %v948 = vmax.f32 %v940, 0.0
      %v949 = vpack.c.bf16 %v944, %v943
      %v950 = vpack.c.bf16 %v946, %v945
      %v951 = vpack.c.bf16 %v948, %v947
      %v955 = vunpack.c.l.b16 %v949
      %v956 = vunpack.c.h.b16 %v949
      %v957 = vunpack.c.l.b16 %v950
      %v958 = vunpack.c.h.b16 %v950
      %v959 = vunpack.c.l.b16 %v951
      %v960 = vunpack.c.h.b16 %v951
      %v961 = vpack.c.b16 %v955, %v955
      %v962 = vpack.c.b16 %v956, %v956
      %v963 = vpack.c.b16 %v957, %v957
      %v964 = vpack.c.b16 %v958, %v958
      %v965 = vpack.c.b16 %v959, %v959
      %v966 = vpack.c.b16 %v960, %v960
      %vm973 = vcmask 257024
      %974 = vst.msk [vmem:[%s264] sm:$0xf] %vm973, %v961
      %975 = vst.msk [vmem:[%s264 + $0x4] sm:$0xf] %vm973, %v962
      %976 = vst.msk [vmem:[%s264 + $0x8] sm:$0xf] %vm973, %v963
      %977 = vst.msk [vmem:[%s264 + $0xc] sm:$0xf] %vm973, %v964
      %978 = vst.msk [vmem:[%s264 + $0x10] sm:$0xf] %vm973, %v965
      %979 = vst.msk [vmem:[%s264 + $0x14] sm:$0xf] %vm973, %v966
      %v980 = vld [vmem:[%s3] sm:$0xf]
      %v981 = vld [vmem:[%s3 + $0x4] sm:$0xf]
      %v982 = vld [vmem:[%s3 + $0x8] sm:$0xf]
      %v983 = vld [vmem:[%s3 + $0xc] sm:$0xf]
      %v984 = vld [vmem:[%s4] sm:$0x1]
      %v986 = vlaneseq
      %v987 = vshrl.u32 %v986, 7
      %v988 = vsub.s32 0, %v987
      %v989 = vrot.slane %v984, %v988
      %v995 = vunpack.c.l.b16 %v980
      %v996 = vunpack.c.l.b16 %v981
      %v997 = vunpack.c.l.b16 %v982
      %v998 = vunpack.c.l.b16 %v983
      %v999 = vpack.c.b16 %v996, %v995
      %v1000 = vpack.c.b16 %v998, %v997
      %vm1003 = vcmask 261120
      %v1005 = vsel %vm1003, %v949, 0
      %v1008 = vsel %vm1003, %v950, 0
      %v1011 = vsel %vm1003, %v951, 0
      %1013 = vmatprep.subr.bf16.mxu0 0
      %1014 = vmatpush1.bf16.msra.mxu0 %v999
      %1015 = vmatprep.subr.bf16.mxu0 0
      %1016 = vmatpush1.bf16.msra.mxu0 %v1000
      %1017 = vmatprep.subr.bf16.mxu0 0
      %1018 = vmatpush1.bf16.msra.mxu0 0
      %1019 = vmatprep.subr.bf16.mxu0 0
      %1020 = vmatpush1.bf16.msra.mxu0 0
      %1021 = vmatprep.subr.bf16.mxu0 0
      %1022 = vmatpush1.bf16.msra.mxu0 0
      %1023 = vmatprep.subr.bf16.mxu0 0
      %1024 = vmatpush1.bf16.msra.mxu0 0
      %1025 = vmatprep.subr.bf16.mxu0 0
      %1026 = vmatpush1.bf16.msra.mxu0 0
      %1027 = vmatprep.subr.bf16.mxu0 0
      %1028 = vmatpush1.bf16.msra.mxu0 0
      %1029 = vmatprep.subr.bf16.mxu0 0
      %1030 = vmatpush1.bf16.msra.mxu0 0
      %1031 = vmatprep.subr.bf16.mxu0 0
      %1032 = vmatpush1.bf16.msra.mxu0 0
      %1033 = vmatprep.subr.bf16.mxu0 0
      %1034 = vmatpush1.bf16.msra.mxu0 0
      %1035 = vmatprep.subr.bf16.mxu0 0
      %1036 = vmatpush1.bf16.msra.mxu0 0
      %1037 = vmatprep.subr.bf16.mxu0 0
      %1038 = vmatpush1.bf16.msra.mxu0 0
      %1039 = vmatprep.subr.bf16.mxu0 0
      %1040 = vmatpush1.bf16.msra.mxu0 0
      %1041 = vmatprep.subr.bf16.mxu0 0
      %1042 = vmatpush1.bf16.msra.mxu0 0
      %1043 = vmatprep.subr.bf16.mxu0 0
      %1044 = vmatpush1.bf16.msra.mxu0 0
      %1045 = vmatprep.mubr.bf16.mxu0 0
      %1046 = vmatmul.mubr.bf16.gmra.mrb[0].mxu0 %v1005
      %v1047 = vpop.f32.mrb[0].mxu0
      %v1048 = vadd.f32 %v989, %v1047
      %v1049 = vpop.f32.mrb[0].mxu0
      %v1050 = vpop.f32.mrb[0].mxu0
      %v1051 = vadd.f32 %v989, %v1050
      %v1052 = vpop.f32.mrb[0].mxu0
      %1053 = vmatprep.mubr.bf16.mxu0 0
      %1054 = vmatmul.mubr.bf16.gmra.mrb[0].mxu0 %v1008
      %v1055 = vpop.f32.mrb[0].mxu0
      %v1056 = vadd.f32 %v989, %v1055
      %v1057 = vpop.f32.mrb[0].mxu0
      %v1058 = vpop.f32.mrb[0].mxu0
      %v1059 = vadd.f32 %v989, %v1058
      %v1060 = vpop.f32.mrb[0].mxu0
      %1061 = vmatprep.mubr.bf16.mxu0 0
      %1062 = vmatmul.mubr.bf16.gmra.mrb[0].mxu0 %v1011
      %v1063 = vpop.f32.mrb[0].mxu0
      %v1064 = vadd.f32 %v989, %v1063
      %v1065 = vpop.f32.mrb[0].mxu0
      %v1066 = vpop.f32.mrb[0].mxu0
      %v1067 = vadd.f32 %v989, %v1066
      %v1068 = vpop.f32.mrb[0].mxu0
      %1069 = vdwg.mxu0
      %v1070 = vmax.f32 %v1048, 0.0
      %v1071 = vmax.f32 %v1051, 0.0
      %v1072 = vmax.f32 %v1056, 0.0
      %v1073 = vmax.f32 %v1059, 0.0
      %v1074 = vmax.f32 %v1064, 0.0
      %v1075 = vmax.f32 %v1067, 0.0
      %v1076 = vpack.c.bf16 %v1071, %v1070
      %v1077 = vpack.c.bf16 %v1073, %v1072
      %v1078 = vpack.c.bf16 %v1075, %v1074
      %v1082 = vunpack.c.l.b16 %v1076
      %v1083 = vunpack.c.h.b16 %v1076
      %v1084 = vunpack.c.l.b16 %v1077
      %v1085 = vunpack.c.h.b16 %v1077
      %v1086 = vunpack.c.l.b16 %v1078
      %v1087 = vunpack.c.h.b16 %v1078
      %v1088 = vpack.c.b16 %v1082, %v1082
      %v1089 = vpack.c.b16 %v1083, %v1083
      %v1090 = vpack.c.b16 %v1084, %v1084
      %v1091 = vpack.c.b16 %v1085, %v1085
      %v1092 = vpack.c.b16 %v1086, %v1086
      %v1093 = vpack.c.b16 %v1087, %v1087
      %1100 = vst.msk [vmem:[%s270] sm:$0xf] %vm973, %v1088
      %1101 = vst.msk [vmem:[%s270 + $0x4] sm:$0xf] %vm973, %v1089
      %1102 = vst.msk [vmem:[%s270 + $0x8] sm:$0xf] %vm973, %v1090
      %1103 = vst.msk [vmem:[%s270 + $0xc] sm:$0xf] %vm973, %v1091
      %1104 = vst.msk [vmem:[%s270 + $0x10] sm:$0xf] %vm973, %v1092
      %1105 = vst.msk [vmem:[%s270 + $0x14] sm:$0xf] %vm973, %v1093
      %s1106 = smul.u32 6, %s18
      %p1107 = scmp.lt.s32.totalorder %s1106, 11
      %s1108 = scalar_select %p1107, %s1106, 11
      %s1109 = smul.addr %s1108, 4
      %s1110 = scalar_lea.vmem %s5, %s1109
      %s1111 = smul.u32 6, %s18
      %p1112 = scmp.lt.s32.totalorder %s1111, 11
      %s1113 = scalar_select %p1112, %s1111, 11
      %s1114 = smul.addr %s1113, 4
      %s1115 = scalar_lea.vmem %s6, %s1114
      // Predicated region
      $region41: #{seg_dolf_tracker_forward.3} parent=39 // pred_check
        %p1116 = pneg %p146
      $region42: #{seg_dolf_tracker_forward.3} parent=39 // pred_check_branch
        %1118 = sbr.rel (%p1116) target = $region44
      $region43: #{seg_dolf_tracker_forward.3} parent=39 // pred_region
        %s1119 = smul.u32 6, %s18
      $region44: #{seg_dolf_tracker_forward.3} parent=39 // pred_fallthru
        _
      // Predicated region
      $region45: #{seg_dolf_tracker_forward.3} parent=39 // pred_check
        %p1120 = pneg %p172
      $region46: #{seg_dolf_tracker_forward.3} parent=39 // pred_check_branch
        %1122 = sbr.rel (%p1120) target = $region48
      $region47: #{seg_dolf_tracker_forward.3} parent=39 // pred_region
        %s1123 = smul.u32 6, %s18
      $region48: #{seg_dolf_tracker_forward.3} parent=39 // pred_fallthru
        _
    $region40: #{seg_dolf_tracker_forward.3} parent=5 // pred_fallthru
      _
    %p1124 = scmp.le.s32.totalorder 2, %s13
    // Predicated region
    $region49: #{seg_dolf_tracker_forward.3} parent=5 // pred_check
      %p1125 = pneg %p1124
    $region50: #{seg_dolf_tracker_forward.3} parent=5 // pred_check_branch
      %1127 = sbr.rel (%p1125) target = $region52
    $region51: #{seg_dolf_tracker_forward.3} parent=5 // pred_region
      %s1128 = ssub.s32 %s13, 2
      // Predicated region
      $region53: #{seg_dolf_tracker_forward.3} parent=51 // pred_check
        %p1129 = pneg %p152
      $region54: #{seg_dolf_tracker_forward.3} parent=51 // pred_check_branch
        %1131 = sbr.rel (%p1129) target = $region56
      $region55: #{seg_dolf_tracker_forward.3} parent=51 // pred_region
        %s1132 = smul.u32 6, %s19
        %p1133 = scmp.lt.s32.totalorder %s1132, 11
        %s1134 = scalar_select %p1133, %s1132, 11
        %s1135 = smul.addr %s1134, 4
        %s1136 = scalar_lea.vmem %s5, %s1135
      $region56: #{seg_dolf_tracker_forward.3} parent=51 // pred_fallthru
        _
      // Predicated region
      $region57: #{seg_dolf_tracker_forward.3} parent=51 // pred_check
        %p1137 = pneg %p178
      $region58: #{seg_dolf_tracker_forward.3} parent=51 // pred_check_branch
        %1139 = sbr.rel (%p1137) target = $region60
      $region59: #{seg_dolf_tracker_forward.3} parent=51 // pred_region
        %s1140 = smul.u32 6, %s19
        %p1141 = scmp.lt.s32.totalorder %s1140, 11
        %s1142 = scalar_select %p1141, %s1140, 11
        %s1143 = smul.addr %s1142, 4
        %s1144 = scalar_lea.vmem %s6, %s1143
      $region60: #{seg_dolf_tracker_forward.3} parent=51 // pred_fallthru
        _
    $region52: #{seg_dolf_tracker_forward.3} parent=5 // pred_fallthru
      _
  $region6: #{seg_dolf_tracker_forward.3} parent=0 // loop_footer
    %s17 = sadd.s32 1, %s13
  $region7: #{seg_dolf_tracker_forward.3} parent=0 // loop_footer_branch
    %12 = sbr.rel target = $region3
  $region8: #{seg_dolf_tracker_forward.3} parent=0 // loop_exit
    _

// kernel: seg_dolf_tracker_forward.4
$region0: #{seg_dolf_tracker_forward.4}
  #allocation0 [shape = 'u32[]', space=smem, size = 0x4, offset = 0x4, fixed_abs, tag = 'smem constant byte address 0x4 - core index']
  #allocation1 [shape = 'u32[144,128]{1,0:T(1,128)}', space=vmem, size = 0x12000, scoped, tag = 'internal scratch']
  %s0 = inlined_call_operand.vmem [shape: bf16[256,192], index: 0, kind: input, shape index: {}]
  %s1 = inlined_call_operand.vmem [shape: bf16[192,16], index: 1, kind: input, shape index: {}]
  %s2 = inlined_call_operand.vmem [shape: f32[1,16], index: 2, kind: input, shape index: {}]
  %s3 = inlined_call_operand.vmem [shape: f32[256,16], index: 3, kind: output, shape index: {}]
  %s4 = sld [smem:[#allocation0]]
  $region45: #{seg_dolf_tracker_forward.4} parent=0
    _
  %s6 = ssub.s32 1, %s4
  %s7 = scalar_select 0, %s6, %s4
  loop: start=0, step=1, limit=4
  $region2: #{seg_dolf_tracker_forward.4} parent=0 // loop_pre_header
    _
  $region3: #{seg_dolf_tracker_forward.4} parent=0 // loop_header
    %s9 = sphi 0, %s13
    %p10 = scmp.ge.s32.totalorder %s9, 4
    %s19 = sphi 0, %s21
    %s22 = sphi 0, %s19
    %s23 = sphi 0, %s22
    %s39 = sphi 0, %s23
    %s43 = sphi 0, %s43
    %s45 = sphi 0, %s43
    %s46 = sphi 0, %s45
    %s60 = sphi 0, %s46
    %s64 = sphi 0, %s64
    %s66 = sphi 0, %s64
    %s67 = sphi 0, %s66
    %s81 = sphi 0, %s67
    %s87 = sphi 0, %s89
    %s90 = sphi 0, %s87
    %s91 = sphi 0, %s90
    %s107 = sphi 0, %s91
  $region4: #{seg_dolf_tracker_forward.4} parent=0 // loop_header_branch
    %12 = sbr.rel (%p10) target = $region8
  $region5: #{seg_dolf_tracker_forward.4} parent=0 // loop_body
    %s14 = ssub.s32 %s9, 1
    %s15 = ssub.s32 %s9, 2
    %s16 = sadd.s32 %s9, 1
    %s17 = ssub.s32 %s9, %s16
    %p18 = scmp.eq.s32.totalorder %s17, 0
    %s20 = sadd.s32 %s19, 1
    %s21 = scalar_select %p18, %s19, %s20
    %p24 = pneg %p18
    %p25 = scmp.eq.s32.totalorder %s9, 1
    %p26 = por %p24, %p25
    %p27 = scmp.ne.s32.totalorder %s19, %s22
    %p28 = scmp.eq.s32.totalorder %s9, 0
    %p29 = por %p27, %p28
    %p30 = scmp.ne.s32.totalorder %s19, %s22
    %p31 = scmp.eq.s32.totalorder %s14, 1
    %p32 = por %p30, %p31
    %p33 = scmp.ne.s32.totalorder %s22, %s23
    %p34 = scmp.eq.s32.totalorder %s14, 0
    %p35 = por %p33, %p34
    %p36 = scmp.ne.s32.totalorder %s22, %s23
    %p37 = scmp.eq.s32.totalorder %s15, 1
    %p38 = por %p36, %p37
    %p40 = scmp.ne.s32.totalorder %s23, %s39
    %p41 = scmp.eq.s32.totalorder %s15, 0
    %p42 = por %p40, %p41
    %s44 = sadd.s32 %s43, 1
    %p47 = scmp.eq.s32.totalorder %s9, 1
    %p48 = scmp.ne.s32.totalorder %s43, %s45
    %p49 = scmp.eq.s32.totalorder %s9, 0
    %p50 = por %p48, %p49
    %p51 = scmp.ne.s32.totalorder %s43, %s45
    %p52 = scmp.eq.s32.totalorder %s14, 1
    %p53 = por %p51, %p52
    %p54 = scmp.ne.s32.totalorder %s45, %s46
    %p55 = scmp.eq.s32.totalorder %s14, 0
    %p56 = por %p54, %p55
    %p57 = scmp.ne.s32.totalorder %s45, %s46
    %p58 = scmp.eq.s32.totalorder %s15, 1
    %p59 = por %p57, %p58
    %p61 = scmp.ne.s32.totalorder %s46, %s60
    %p62 = scmp.eq.s32.totalorder %s15, 0
    %p63 = por %p61, %p62
    %s65 = sadd.s32 %s64, 1
    %p68 = scmp.eq.s32.totalorder %s9, 1
    %p69 = scmp.ne.s32.totalorder %s64, %s66
    %p70 = scmp.eq.s32.totalorder %s9, 0
    %p71 = por %p69, %p70
    %p72 = scmp.ne.s32.totalorder %s64, %s66
    %p73 = scmp.eq.s32.totalorder %s14, 1
    %p74 = por %p72, %p73
    %p75 = scmp.ne.s32.totalorder %s66, %s67
    %p76 = scmp.eq.s32.totalorder %s14, 0
    %p77 = por %p75, %p76
    %p78 = scmp.ne.s32.totalorder %s66, %s67
    %p79 = scmp.eq.s32.totalorder %s15, 1
    %p80 = por %p78, %p79
    %p82 = scmp.ne.s32.totalorder %s67, %s81
    %p83 = scmp.eq.s32.totalorder %s15, 0
    %p84 = por %p82, %p83
    %s85 = ssub.s32 %s9, %s16
    %p86 = scmp.eq.s32.totalorder %s85, 0
    %s88 = sadd.s32 %s87, 1
    %s89 = scalar_select %p86, %s87, %s88
    %p92 = pneg %p86
    %p93 = scmp.eq.s32.totalorder %s9, 1
    %p94 = por %p92, %p93
    %p95 = scmp.ne.s32.totalorder %s87, %s90
    %p96 = scmp.eq.s32.totalorder %s9, 0
    %p97 = por %p95, %p96
    %p98 = scmp.ne.s32.totalorder %s87, %s90
    %p99 = scmp.eq.s32.totalorder %s14, 1
    %p100 = por %p98, %p99
    %p101 = scmp.ne.s32.totalorder %s90, %s91
    %p102 = scmp.eq.s32.totalorder %s14, 0
    %p103 = por %p101, %p102
    %p104 = scmp.ne.s32.totalorder %s90, %s91
    %p105 = scmp.eq.s32.totalorder %s15, 1
    %p106 = por %p104, %p105
    %p108 = scmp.ne.s32.totalorder %s91, %s107
    %p109 = scmp.eq.s32.totalorder %s15, 0
    %p110 = por %p108, %p109
    %p111 = scmp.le.s32.totalorder 1, %s9
    %p112 = scmp.lt.s32.totalorder %s9, 3
    %p113 = pnand %p111, %p112
    %p114 = pneg %p113
    // Predicated region
    $region9: #{seg_dolf_tracker_forward.4} parent=5 // pred_check
      _
    $region10: #{seg_dolf_tracker_forward.4} parent=5 // pred_check_branch
      %116 = sbr.rel (%p113) target = $region12
    $region11: #{seg_dolf_tracker_forward.4} parent=5 // pred_region
      %s117 = ssub.s32 %s9, 1
      // Predicated region
      $region13: #{seg_dolf_tracker_forward.4} parent=11 // pred_check
        %p118 = pneg %p56
      $region14: #{seg_dolf_tracker_forward.4} parent=11 // pred_check_branch
        %120 = sbr.rel (%p118) target = $region16
      $region15: #{seg_dolf_tracker_forward.4} parent=11 // pred_region
        _
      $region16: #{seg_dolf_tracker_forward.4} parent=11 // pred_fallthru
        _
      // Predicated region
      $region17: #{seg_dolf_tracker_forward.4} parent=11 // pred_check
        %p121 = pneg %p77
      $region18: #{seg_dolf_tracker_forward.4} parent=11 // pred_check_branch
        %123 = sbr.rel (%p121) target = $region20
      $region19: #{seg_dolf_tracker_forward.4} parent=11 // pred_region
        _
      $region20: #{seg_dolf_tracker_forward.4} parent=11 // pred_fallthru
        _
    $region12: #{seg_dolf_tracker_forward.4} parent=5 // pred_fallthru
      _
    %p124 = scmp.lt.s32.totalorder %s9, 2
    // Predicated region
    $region21: #{seg_dolf_tracker_forward.4} parent=5 // pred_check
      %p125 = pneg %p124
    $region22: #{seg_dolf_tracker_forward.4} parent=5 // pred_check_branch
      %127 = sbr.rel (%p125) target = $region24
    $region23: #{seg_dolf_tracker_forward.4} parent=5 // pred_region
      // Predicated region
      $region25: #{seg_dolf_tracker_forward.4} parent=23 // pred_check
        %p128 = pneg %p29
      $region26: #{seg_dolf_tracker_forward.4} parent=23 // pred_check_branch
        %130 = sbr.rel (%p128) target = $region28
      $region27: #{seg_dolf_tracker_forward.4} parent=23 // pred_region
        %s131 = smul.u32 16, %s9
        %p132 = scmp.lt.s32.totalorder %s131, 31
        %s133 = scalar_select %p132, %s131, 31
        %s134 = smul.addr %s133, 2
        %s135 = smul.addr %s134, 4
        %s136 = scalar_lea.vmem %s0, %s135
        %s137 = smul.u32 16, %s9
      $region28: #{seg_dolf_tracker_forward.4} parent=23 // pred_fallthru
        _
    $region24: #{seg_dolf_tracker_forward.4} parent=5 // pred_fallthru
      _
    %p138 = scmp.le.s32.totalorder 1, %s9
    %p139 = scmp.lt.s32.totalorder %s9, 3
    %p140 = pnand %p138, %p139
    %p141 = pneg %p140
    // Predicated region
    $region29: #{seg_dolf_tracker_forward.4} parent=5 // pred_check
      _
    $region30: #{seg_dolf_tracker_forward.4} parent=5 // pred_check_branch
      %143 = sbr.rel (%p140) target = $region32
    $region31: #{seg_dolf_tracker_forward.4} parent=5 // pred_region
      %s144 = ssub.s32 %s9, 1
      %s145 = smul.u32 16, %s14
      %p146 = scmp.lt.s32.totalorder %s145, 31
      %s147 = scalar_select %p146, %s145, 31
      %s148 = smul.addr %s147, 2
      %s149 = smul.addr %s148, 4
      %s150 = scalar_lea.vmem %s0, %s149
      %p151 = pneg %p35
      %p152 = pneg %p32
      %p153 = pneg %p56
      %p154 = pneg %p53
      %p155 = pneg %p77
      %p156 = pneg %p74
      %p157 = pneg %p103
      %p158 = pneg %p100
      %s159 = smul.u32 16, %s14
      %p160 = scmp.lt.s32.totalorder %s159, 31
      %s161 = scalar_select %p160, %s159, 31
      %s162 = smul.addr %s161, 8
      %s163 = scalar_lea.vmem %s3, %s162
      %s164 = smul.u32 16, %s14
      %p165 = scmp.lt.s32.totalorder %s164, 31
      %s166 = scalar_select %p165, %s164, 31
      %s167 = smul.addr %s166, 2
      %s168 = smul.addr %s167, 4
      %s169 = scalar_lea.vmem %s0, %s168
      %s170 = smul.u32 16, %s14
      %s171 = smul.u32 16, %s14
      %p172 = scmp.lt.s32.totalorder %s171, 31
      %s173 = scalar_select %p172, %s171, 31
      %s174 = smul.addr %s173, 8
      %s175 = scalar_lea.vmem %s3, %s174
      %s176 = smul.u32 16, %s14
      %v178 = vld [vmem:[%s169] sm:$0xff]
      %v179 = vld [vmem:[%s169 + $0x8] sm:$0xff]
      %v180 = vld [vmem:[%s169 + $0x10] sm:$0xff]
      %v181 = vld [vmem:[%s169 + $0x18] sm:$0xff]
      %v182 = vld [vmem:[%s169 + $0x20] sm:$0xff]
      %v183 = vld [vmem:[%s169 + $0x28] sm:$0xff]
      %v184 = vld [vmem:[%s169 + $0x30] sm:$0xff]
      %v185 = vld [vmem:[%s169 + $0x38] sm:$0xff]
      %v186 = vld [vmem:[%s169 + $0x40] sm:$0xff]
      %v187 = vld [vmem:[%s169 + $0x48] sm:$0xff]
      %v188 = vld [vmem:[%s169 + $0x50] sm:$0xff]
      %v189 = vld [vmem:[%s169 + $0x58] sm:$0xff]
      %v190 = vld [vmem:[%s169 + $0x60] sm:$0xff]
      %v191 = vld [vmem:[%s169 + $0x68] sm:$0xff]
      %v192 = vld [vmem:[%s169 + $0x70] sm:$0xff]
      %v193 = vld [vmem:[%s169 + $0x78] sm:$0xff]
      %v194 = vld [vmem:[%s1] sm:$0xf]
      %v195 = vld [vmem:[%s1 + $0x4] sm:$0xf]
      %v196 = vld [vmem:[%s1 + $0x8] sm:$0xf]
      %v197 = vld [vmem:[%s1 + $0xc] sm:$0xf]
      %v198 = vld [vmem:[%s1 + $0x10] sm:$0xf]
      %v199 = vld [vmem:[%s1 + $0x14] sm:$0xf]
      %v200 = vld [vmem:[%s1 + $0x18] sm:$0xf]
      %v201 = vld [vmem:[%s1 + $0x1c] sm:$0xf]
      %v202 = vld [vmem:[%s1 + $0x20] sm:$0xf]
      %v203 = vld [vmem:[%s1 + $0x24] sm:$0xf]
      %v204 = vld [vmem:[%s1 + $0x28] sm:$0xf]
      %v205 = vld [vmem:[%s1 + $0x2c] sm:$0xf]
      %v206 = vld [vmem:[%s1 + $0x30] sm:$0xf]
      %v207 = vld [vmem:[%s1 + $0x34] sm:$0xf]
      %v208 = vld [vmem:[%s1 + $0x38] sm:$0xf]
      %v209 = vld [vmem:[%s1 + $0x3c] sm:$0xf]
      %v210 = vld [vmem:[%s1 + $0x40] sm:$0xf]
      %v211 = vld [vmem:[%s1 + $0x44] sm:$0xf]
      %v212 = vld [vmem:[%s1 + $0x48] sm:$0xf]
      %v213 = vld [vmem:[%s1 + $0x4c] sm:$0xf]
      %v214 = vld [vmem:[%s1 + $0x50] sm:$0xf]
      %v215 = vld [vmem:[%s1 + $0x54] sm:$0xf]
      %v216 = vld [vmem:[%s1 + $0x58] sm:$0xf]
      %v217 = vld [vmem:[%s1 + $0x5c] sm:$0xf]
      %v218 = vld [vmem:[%s2] sm:$0x1]
      %v220 = vlaneseq
      %v221 = vshrl.u32 %v220, 7
      %v222 = vsub.s32 0, %v221
      %v223 = vrot.slane %v218, %v222
      %v241 = vunpack.c.l.b16 %v178
      %v242 = vunpack.c.h.b16 %v178
      %v243 = vunpack.c.l.b16 %v179
      %v244 = vunpack.c.h.b16 %v179
      %v245 = vunpack.c.l.b16 %v180
      %v246 = vunpack.c.h.b16 %v180
      %v247 = vunpack.c.l.b16 %v181
      %v248 = vunpack.c.h.b16 %v181
      %v249 = vunpack.c.l.b16 %v182
      %v250 = vunpack.c.h.b16 %v182
      %v251 = vunpack.c.l.b16 %v183
      %v252 = vunpack.c.h.b16 %v183
      %v253 = vunpack.c.l.b16 %v184
      %v254 = vunpack.c.h.b16 %v184
      %v255 = vunpack.c.l.b16 %v185
      %v256 = vunpack.c.h.b16 %v185
      %v257 = vunpack.c.l.b16 %v186
      %v258 = vunpack.c.h.b16 %v186
      %v259 = vunpack.c.l.b16 %v187
      %v260 = vunpack.c.h.b16 %v187
      %v261 = vunpack.c.l.b16 %v188
      %v262 = vunpack.c.h.b16 %v188
      %v263 = vunpack.c.l.b16 %v189
      %v264 = vunpack.c.h.b16 %v189
      %v265 = vunpack.c.l.b16 %v190
      %v266 = vunpack.c.h.b16 %v190
      %v267 = vunpack.c.l.b16 %v191
      %v268 = vunpack.c.h.b16 %v191
      %v269 = vunpack.c.l.b16 %v192
      %v270 = vunpack.c.h.b16 %v192
      %v271 = vunpack.c.l.b16 %v193
      %v272 = vunpack.c.h.b16 %v193
      %v273 = vpack.c.b16 %v243, %v241
      %v274 = vpack.c.b16 %v244, %v242
      %v275 = vpack.c.b16 %v247, %v245
      %v276 = vpack.c.b16 %v248, %v246
      %v277 = vpack.c.b16 %v251, %v249
      %v278 = vpack.c.b16 %v252, %v250
      %v279 = vpack.c.b16 %v255, %v253
      %v280 = vpack.c.b16 %v256, %v254
      %v281 = vpack.c.b16 %v259, %v257
      %v282 = vpack.c.b16 %v260, %v258
      %v283 = vpack.c.b16 %v263, %v261
      %v284 = vpack.c.b16 %v264, %v262
      %v285 = vpack.c.b16 %v267, %v265
      %v286 = vpack.c.b16 %v268, %v266
      %v287 = vpack.c.b16 %v271, %v269
      %v288 = vpack.c.b16 %v272, %v270
      %v321 = vunpack.c.l.b16 %v194
      %v322 = vunpack.c.l.b16 %v195
      %v323 = vunpack.c.l.b16 %v196
      %v324 = vunpack.c.l.b16 %v197
      %v325 = vunpack.c.l.b16 %v198
      %v326 = vunpack.c.l.b16 %v199
      %v327 = vunpack.c.l.b16 %v200
      %v328 = vunpack.c.l.b16 %v201
      %v329 = vunpack.c.l.b16 %v202
      %v330 = vunpack.c.l.b16 %v203
      %v331 = vunpack.c.l.b16 %v204
      %v332 = vunpack.c.l.b16 %v205
      %v333 = vunpack.c.l.b16 %v206
      %v334 = vunpack.c.l.b16 %v207
      %v335 = vunpack.c.l.b16 %v208
      %v336 = vunpack.c.l.b16 %v209
      %v337 = vunpack.c.l.b16 %v210
      %v338 = vunpack.c.l.b16 %v211
      %v339 = vunpack.c.l.b16 %v212
      %v340 = vunpack.c.l.b16 %v213
      %v341 = vunpack.c.l.b16 %v214
      %v342 = vunpack.c.l.b16 %v215
      %v343 = vunpack.c.l.b16 %v216
      %v344 = vunpack.c.l.b16 %v217
      %v345 = vpack.c.b16 %v322, %v321
      %v346 = vpack.c.b16 %v324, %v323
      %v347 = vpack.c.b16 %v326, %v325
      %v348 = vpack.c.b16 %v328, %v327
      %v349 = vpack.c.b16 %v330, %v329
      %v350 = vpack.c.b16 %v332, %v331
      %v351 = vpack.c.b16 %v334, %v333
      %v352 = vpack.c.b16 %v336, %v335
      %v353 = vpack.c.b16 %v338, %v337
      %v354 = vpack.c.b16 %v340, %v339
      %v355 = vpack.c.b16 %v342, %v341
      %v356 = vpack.c.b16 %v344, %v343
      %vm369 = vcmask 523264
      %v371 = vsel %vm369, %v274, 0
      %v374 = vsel %vm369, %v276, 0
      %v377 = vsel %vm369, %v278, 0
      %v380 = vsel %vm369, %v280, 0
      %v383 = vsel %vm369, %v282, 0
      %v386 = vsel %vm369, %v284, 0
      %v389 = vsel %vm369, %v286, 0
      %v392 = vsel %vm369, %v288, 0
      %394 = vmatprep.subr.bf16.mxu0 0
      %395 = vmatpush1.bf16.msra.mxu0 %v345
      %396 = vmatprep.subr.bf16.mxu0 0
      %397 = vmatpush1.bf16.msra.mxu0 %v346
      %398 = vmatprep.subr.bf16.mxu0 0
      %399 = vmatpush1.bf16.msra.mxu0 %v347
      %400 = vmatprep.subr.bf16.mxu0 0
      %401 = vmatpush1.bf16.msra.mxu0 %v348
      %402 = vmatprep.subr.bf16.mxu0 0
      %403 = vmatpush1.bf16.msra.mxu0 %v349
      %404 = vmatprep.subr.bf16.mxu0 0
      %405 = vmatpush1.bf16.msra.mxu0 %v350
      %406 = vmatprep.subr.bf16.mxu0 0
      %407 = vmatpush1.bf16.msra.mxu0 %v351
      %408 = vmatprep.subr.bf16.mxu0 0
      %409 = vmatpush1.bf16.msra.mxu0 %v352
      %410 = vmatprep.subr.bf16.mxu0 0
      %411 = vmatpush1.bf16.msra.mxu0 %v353
      %412 = vmatprep.subr.bf16.mxu0 0
      %413 = vmatpush1.bf16.msra.mxu0 %v354
      %414 = vmatprep.subr.bf16.mxu0 0
      %415 = vmatpush1.bf16.msra.mxu0 %v355
      %416 = vmatprep.subr.bf16.mxu0 0
      %417 = vmatpush1.bf16.msra.mxu0 %v356
      %418 = vmatprep.subr.bf16.mxu0 0
      %419 = vmatpush1.bf16.msra.mxu0 0
      %420 = vmatprep.subr.bf16.mxu0 0
      %421 = vmatpush1.bf16.msra.mxu0 0
      %422 = vmatprep.subr.bf16.mxu0 0
      %423 = vmatpush1.bf16.msra.mxu0 0
      %424 = vmatprep.subr.bf16.mxu0 0
      %425 = vmatpush1.bf16.msra.mxu0 0
      %426 = vmatprep.mubr.bf16.mxu0 %v371
      %427 = vmatmul.mubr.bf16.gmra.mrb[0].mxu0 %v273
      %v428 = vpop.f32.mrb[0].mxu0
      %v429 = vadd.f32 %v223, %v428
      %v430 = vpop.f32.mrb[0].mxu0
      %v431 = vpop.f32.mrb[0].mxu0
      %v432 = vadd.f32 %v223, %v431
      %v433 = vpop.f32.mrb[0].mxu0
      %434 = vmatprep.mubr.bf16.mxu0 %v374
      %435 = vmatmul.mubr.bf16.gmra.mrb[0].mxu0 %v275
      %v436 = vpop.f32.mrb[0].mxu0
      %v437 = vadd.f32 %v223, %v436
      %v438 = vpop.f32.mrb[0].mxu0
      %v439 = vpop.f32.mrb[0].mxu0
      %v440 = vadd.f32 %v223, %v439
      %v441 = vpop.f32.mrb[0].mxu0
      %442 = vmatprep.mubr.bf16.mxu0 %v377
      %443 = vmatmul.mubr.bf16.gmra.mrb[0].mxu0 %v277
      %v444 = vpop.f32.mrb[0].mxu0
      %v445 = vadd.f32 %v223, %v444
      %v446 = vpop.f32.mrb[0].mxu0
      %v447 = vpop.f32.mrb[0].mxu0
      %v448 = vadd.f32 %v223, %v447
      %v449 = vpop.f32.mrb[0].mxu0
      %450 = vmatprep.mubr.bf16.mxu0 %v380
      %451 = vmatmul.mubr.bf16.gmra.mrb[0].mxu0 %v279
      %v452 = vpop.f32.mrb[0].mxu0
      %v453 = vadd.f32 %v223, %v452
      %v454 = vpop.f32.mrb[0].mxu0
      %v455 = vpop.f32.mrb[0].mxu0
      %v456 = vadd.f32 %v223, %v455
      %v457 = vpop.f32.mrb[0].mxu0
      %458 = vmatprep.mubr.bf16.mxu0 %v383
      %459 = vmatmul.mubr.bf16.gmra.mrb[0].mxu0 %v281
      %v460 = vpop.f32.mrb[0].mxu0
      %v461 = vadd.f32 %v223, %v460
      %v462 = vpop.f32.mrb[0].mxu0
      %v463 = vpop.f32.mrb[0].mxu0
      %v464 = vadd.f32 %v223, %v463
      %v465 = vpop.f32.mrb[0].mxu0
      %466 = vmatprep.mubr.bf16.mxu0 %v386
      %467 = vmatmul.mubr.bf16.gmra.mrb[0].mxu0 %v283
      %v468 = vpop.f32.mrb[0].mxu0
      %v469 = vadd.f32 %v223, %v468
      %v470 = vpop.f32.mrb[0].mxu0
      %v471 = vpop.f32.mrb[0].mxu0
      %v472 = vadd.f32 %v223, %v471
      %v473 = vpop.f32.mrb[0].mxu0
      %474 = vmatprep.mubr.bf16.mxu0 %v389
      %475 = vmatmul.mubr.bf16.gmra.mrb[0].mxu0 %v285
      %v476 = vpop.f32.mrb[0].mxu0
      %v477 = vadd.f32 %v223, %v476
      %v478 = vpop.f32.mrb[0].mxu0
      %v479 = vpop.f32.mrb[0].mxu0
      %v480 = vadd.f32 %v223, %v479
      %v481 = vpop.f32.mrb[0].mxu0
      %482 = vmatprep.mubr.bf16.mxu0 %v392
      %483 = vmatmul.mubr.bf16.gmra.mrb[0].mxu0 %v287
      %v484 = vpop.f32.mrb[0].mxu0
      %v485 = vadd.f32 %v223, %v484
      %v486 = vpop.f32.mrb[0].mxu0
      %v487 = vpop.f32.mrb[0].mxu0
      %v488 = vadd.f32 %v223, %v487
      %v489 = vpop.f32.mrb[0].mxu0
      %490 = vdwg.mxu0
      %v491 = vmax.f32 %v429, 0.0
      %v492 = vmax.f32 %v432, 0.0
      %v493 = vmax.f32 %v437, 0.0
      %v494 = vmax.f32 %v440, 0.0
      %v495 = vmax.f32 %v445, 0.0
      %v496 = vmax.f32 %v448, 0.0
      %v497 = vmax.f32 %v453, 0.0
      %v498 = vmax.f32 %v456, 0.0
      %v499 = vmax.f32 %v461, 0.0
      %v500 = vmax.f32 %v464, 0.0
      %v501 = vmax.f32 %v469, 0.0
      %v502 = vmax.f32 %v472, 0.0
      %v503 = vmax.f32 %v477, 0.0
      %v504 = vmax.f32 %v480, 0.0
      %v505 = vmax.f32 %v485, 0.0
      %v506 = vmax.f32 %v488, 0.0
      %vm507 = vcmask 130048
      %508 = vst.msk [vmem:[%s175] sm:$0xff] %vm507, %v491
      %509 = vst.msk [vmem:[%s175 + $0x8] sm:$0xff] %vm507, %v492
      %510 = vst.msk [vmem:[%s175 + $0x10] sm:$0xff] %vm507, %v493
      %511 = vst.msk [vmem:[%s175 + $0x18] sm:$0xff] %vm507, %v494
      %512 = vst.msk [vmem:[%s175 + $0x20] sm:$0xff] %vm507, %v495
      %513 = vst.msk [vmem:[%s175 + $0x28] sm:$0xff] %vm507, %v496
      %514 = vst.msk [vmem:[%s175 + $0x30] sm:$0xff] %vm507, %v497
      %515 = vst.msk [vmem:[%s175 + $0x38] sm:$0xff] %vm507, %v498
      %516 = vst.msk [vmem:[%s175 + $0x40] sm:$0xff] %vm507, %v499
      %517 = vst.msk [vmem:[%s175 + $0x48] sm:$0xff] %vm507, %v500
      %518 = vst.msk [vmem:[%s175 + $0x50] sm:$0xff] %vm507, %v501
      %519 = vst.msk [vmem:[%s175 + $0x58] sm:$0xff] %vm507, %v502
      %520 = vst.msk [vmem:[%s175 + $0x60] sm:$0xff] %vm507, %v503
      %521 = vst.msk [vmem:[%s175 + $0x68] sm:$0xff] %vm507, %v504
      %522 = vst.msk [vmem:[%s175 + $0x70] sm:$0xff] %vm507, %v505
      %523 = vst.msk [vmem:[%s175 + $0x78] sm:$0xff] %vm507, %v506
      %s524 = smul.u32 16, %s14
      %p525 = scmp.lt.s32.totalorder %s524, 31
      %s526 = scalar_select %p525, %s524, 31
      %s527 = smul.addr %s526, 8
      %s528 = scalar_lea.vmem %s3, %s527
      // Predicated region
      $region33: #{seg_dolf_tracker_forward.4} parent=31 // pred_check
        %p529 = pneg %p100
      $region34: #{seg_dolf_tracker_forward.4} parent=31 // pred_check_branch
        %531 = sbr.rel (%p529) target = $region36
      $region35: #{seg_dolf_tracker_forward.4} parent=31 // pred_region
        %s532 = smul.u32 16, %s14
      $region36: #{seg_dolf_tracker_forward.4} parent=31 // pred_fallthru
        _
    $region32: #{seg_dolf_tracker_forward.4} parent=5 // pred_fallthru
      _
    %p533 = scmp.le.s32.totalorder 2, %s9
    // Predicated region
    $region37: #{seg_dolf_tracker_forward.4} parent=5 // pred_check
      %p534 = pneg %p533
    $region38: #{seg_dolf_tracker_forward.4} parent=5 // pred_check_branch
      %536 = sbr.rel (%p534) target = $region40
    $region39: #{seg_dolf_tracker_forward.4} parent=5 // pred_region
      %s537 = ssub.s32 %s9, 2
      // Predicated region
      $region41: #{seg_dolf_tracker_forward.4} parent=39 // pred_check
        %p538 = pneg %p106
      $region42: #{seg_dolf_tracker_forward.4} parent=39 // pred_check_branch
        %540 = sbr.rel (%p538) target = $region44
      $region43: #{seg_dolf_tracker_forward.4} parent=39 // pred_region
        %s541 = smul.u32 16, %s15
        %p542 = scmp.lt.s32.totalorder %s541, 31
        %s543 = scalar_select %p542, %s541, 31
        %s544 = smul.addr %s543, 8
        %s545 = scalar_lea.vmem %s3, %s544
      $region44: #{seg_dolf_tracker_forward.4} parent=39 // pred_fallthru
        _
    $region40: #{seg_dolf_tracker_forward.4} parent=5 // pred_fallthru
      _
  $region6: #{seg_dolf_tracker_forward.4} parent=0 // loop_footer
    %s13 = sadd.s32 1, %s9
  $region7: #{seg_dolf_tracker_forward.4} parent=0 // loop_footer_branch
    %8 = sbr.rel target = $region3
  $region8: #{seg_dolf_tracker_forward.4} parent=0 // loop_exit
    _

// kernel: seg_dolf_tracker_forward.5
$region0: #{seg_dolf_tracker_forward.5}
  #allocation0 [shape = 'u32[]', space=smem, size = 0x4, offset = 0x4, fixed_abs, tag = 'smem constant byte address 0x4 - core index']
  #allocation1 [shape = 'u32[144,128]{1,0:T(1,128)}', space=vmem, size = 0x12000, scoped, tag = 'internal scratch']
  #allocation2 [shape = 'f32[32,4]{1,0:T(8,128)}', space=vmem, size = 0x4000, scoped, tag = 'scratch operand']
  #allocation3 [shape = 'bf16[48,32]{1,0:T(16,128)(2,1)}', space=vmem, size = 0x3000, scoped, tag = 'scratch operand']
  #allocation4 [shape = 'f32[48,4]{1,0:T(8,128)}', space=vmem, size = 0x6000, scoped, tag = 'scratch operand']
  #allocation5 [shape = 'f32[48,4]{1,0:T(8,128)}', space=vmem, size = 0x6000, scoped, tag = 'scratch operand']
  #allocation6 [shape = 'f32[1,1]{1,0:T(1,128)S(1)}', space=vmem, size = 0x200, scoped, tag = 'scoped memory for seg_dolf_tracker_forward.5']
  %s0 = inlined_call_operand.vmem [shape: f32[2,16,256], index: 0, kind: input, shape index: {}]
  %s1 = inlined_call_operand.vmem [shape: bf16[2,16,32], index: 1, kind: input, shape index: {}]
  %s2 = inlined_call_operand.vmem [shape: bf16[2,2,16,32], index: 2, kind: input, shape index: {}]
  %s3 = inlined_call_operand.vmem [shape: bf16[2,2,16,32], index: 3, kind: input, shape index: {}]
  %s4 = inlined_call_operand.vmem [shape: bf16[2,2,16,16], index: 4, kind: input, shape index: {}]
  %s5 = inlined_call_operand.vmem [shape: f32[4,1], index: 5, kind: input, shape index: {}]
  %s6 = inlined_call_operand.vmem [shape: f32[32,1], index: 6, kind: input, shape index: {}]
  %s7 = inlined_call_operand.vmem [shape: f32[16,1], index: 7, kind: input, shape index: {}]
  %s8 = inlined_call_operand.<no memory space> [shape: f32[1,1], index: 8, kind: input, shape index: {}]
  %s9 = inlined_call_operand.vmem [shape: f32[1,8], index: 9, kind: input, shape index: {}]
  %s10 = inlined_call_operand.vmem [shape: f32[1,8], index: 10, kind: input, shape index: {}]
  %s11 = inlined_call_operand.vmem [shape: f32[2,2,16,16], index: 11, kind: output, shape index: {}]
  %s12 = sld [smem:[#allocation0]]
  $region85: #{seg_dolf_tracker_forward.5} parent=0
    _
  %s14 = ssub.s32 1, %s12
  %s15 = scalar_select 0, %s14, %s12
  %v16 = vstv %s8
  %17 = vst [vmem:[#allocation6] sm:$0x1] %v16
  loop: start=0, step=1, limit=6
  $region2: #{seg_dolf_tracker_forward.5} parent=0 // loop_pre_header
    _
  $region3: #{seg_dolf_tracker_forward.5} parent=0 // loop_header
    %s19 = sphi 0, %s23
    %p20 = scmp.ge.s32.totalorder %s19, 6
    %s26 = sphi 0, %s38
    %s27 = sphi 0, %s34
    %s28 = sphi 0, %s26
    %s29 = sphi 0, %s27
    %s30 = sphi 0, %s28
    %s31 = sphi 0, %s29
    %s41 = sphi 0, %s43
    %s44 = sphi 0, %s41
    %s45 = sphi 0, %s44
    %s61 = sphi 0, %s45
    %s67 = sphi 0, %s69
    %s70 = sphi 0, %s67
    %s71 = sphi 0, %s70
    %s87 = sphi 0, %s71
    %s95 = sphi 0, %s97
    %s98 = sphi 0, %s95
    %s99 = sphi 0, %s98
    %s115 = sphi 0, %s99
    %s123 = sphi 0, %s125
    %s126 = sphi 0, %s123
    %s127 = sphi 0, %s126
    %s143 = sphi 0, %s127
    %s151 = sphi 0, %s153
    %s154 = sphi 0, %s151
    %s155 = sphi 0, %s154
    %s171 = sphi 0, %s155
    %s175 = sphi 0, %s175
    %s177 = sphi 0, %s175
    %s178 = sphi 0, %s177
    %s192 = sphi 0, %s178
    %s196 = sphi 0, %s196
    %s198 = sphi 0, %s196
    %s199 = sphi 0, %s198
    %s213 = sphi 0, %s199
    %s217 = sphi 0, %s217
    %s219 = sphi 0, %s217
    %s220 = sphi 0, %s219
    %s234 = sphi 0, %s220
    %s238 = sphi 0, %s238
    %s240 = sphi 0, %s238
    %s241 = sphi 0, %s240
    %s255 = sphi 0, %s241
    %s259 = sphi 0, %s259
    %s261 = sphi 0, %s259
    %s262 = sphi 0, %s261
    %s276 = sphi 0, %s262
    %s280 = sphi 0, %s280
    %s282 = sphi 0, %s280
    %s283 = sphi 0, %s282
    %s297 = sphi 0, %s283
    %s305 = sphi 0, %s307
    %s308 = sphi 0, %s305
    %s309 = sphi 0, %s308
    %s325 = sphi 0, %s309
  $region4: #{seg_dolf_tracker_forward.5} parent=0 // loop_header_branch
    %22 = sbr.rel (%p20) target = $region8
  $region5: #{seg_dolf_tracker_forward.5} parent=0 // loop_body
    %s24 = ssub.s32 %s19, 1
    %s25 = ssub.s32 %s19, 2
    %s32 = sadd.s32 1, %s27
    %p33 = scmp.ge.s32.totalorder %s32, 2
    %s34 = scalar_select %p33, 0, %s32
    %s35 = sadd.s32 1, %s26
    %s36 = scalar_select %p33, %s35, %s26
    %p37 = scmp.ge.s32.totalorder %s36, 2
    %s38 = scalar_select %p37, 0, %s36
    %s39 = ssub.s32 %s26, %s38
    %p40 = scmp.eq.s32.totalorder %s39, 0
    %s42 = sadd.s32 %s41, 1
    %s43 = scalar_select %p40, %s41, %s42
    %p46 = pneg %p40
    %p47 = scmp.eq.s32.totalorder %s19, 3
    %p48 = por %p46, %p47
    %p49 = scmp.ne.s32.totalorder %s41, %s44
    %p50 = scmp.eq.s32.totalorder %s19, 0
    %p51 = por %p49, %p50
    %p52 = scmp.ne.s32.totalorder %s41, %s44
    %p53 = scmp.eq.s32.totalorder %s24, 3
    %p54 = por %p52, %p53
    %p55 = scmp.ne.s32.totalorder %s44, %s45
    %p56 = scmp.eq.s32.totalorder %s24, 0
    %p57 = por %p55, %p56
    %p58 = scmp.ne.s32.totalorder %s44, %s45
    %p59 = scmp.eq.s32.totalorder %s25, 3
    %p60 = por %p58, %p59
    %p62 = scmp.ne.s32.totalorder %s45, %s61
    %p63 = scmp.eq.s32.totalorder %s25, 0
    %p64 = por %p62, %p63
    %s65 = ssub.s32 %s26, %s38
    %p66 = scmp.eq.s32.totalorder %s65, 0
    %s68 = sadd.s32 %s67, 1
    %s69 = scalar_select %p66, %s67, %s68
    %p72 = pneg %p66
    %p73 = scmp.eq.s32.totalorder %s19, 3
    %p74 = por %p72, %p73
    %p75 = scmp.ne.s32.totalorder %s67, %s70
    %p76 = scmp.eq.s32.totalorder %s19, 0
    %p77 = por %p75, %p76
    %p78 = scmp.ne.s32.totalorder %s67, %s70
    %p79 = scmp.eq.s32.totalorder %s24, 3
    %p80 = por %p78, %p79
    %p81 = scmp.ne.s32.totalorder %s70, %s71
    %p82 = scmp.eq.s32.totalorder %s24, 0
    %p83 = por %p81, %p82
    %p84 = scmp.ne.s32.totalorder %s70, %s71
    %p85 = scmp.eq.s32.totalorder %s25, 3
    %p86 = por %p84, %p85
    %p88 = scmp.ne.s32.totalorder %s71, %s87
    %p89 = scmp.eq.s32.totalorder %s25, 0
    %p90 = por %p88, %p89
    %s91 = ssub.s32 %s27, %s34
    %s92 = ssub.s32 %s26, %s38
    %s93 = sor.u32 %s91, %s92
    %p94 = scmp.eq.s32.totalorder %s93, 0
    %s96 = sadd.s32 %s95, 1
    %s97 = scalar_select %p94, %s95, %s96
    %p100 = pneg %p94
    %p101 = scmp.eq.s32.totalorder %s19, 3
    %p102 = por %p100, %p101
    %p103 = scmp.ne.s32.totalorder %s95, %s98
    %p104 = scmp.eq.s32.totalorder %s19, 0
    %p105 = por %p103, %p104
    %p106 = scmp.ne.s32.totalorder %s95, %s98
    %p107 = scmp.eq.s32.totalorder %s24, 3
    %p108 = por %p106, %p107
    %p109 = scmp.ne.s32.totalorder %s98, %s99
    %p110 = scmp.eq.s32.totalorder %s24, 0
    %p111 = por %p109, %p110
    %p112 = scmp.ne.s32.totalorder %s98, %s99
    %p113 = scmp.eq.s32.totalorder %s25, 3
    %p114 = por %p112, %p113
    %p116 = scmp.ne.s32.totalorder %s99, %s115
    %p117 = scmp.eq.s32.totalorder %s25, 0
    %p118 = por %p116, %p117
    %s119 = ssub.s32 %s27, %s34
    %s120 = ssub.s32 %s26, %s38
    %s121 = sor.u32 %s119, %s120
    %p122 = scmp.eq.s32.totalorder %s121, 0
    %s124 = sadd.s32 %s123, 1
    %s125 = scalar_select %p122, %s123, %s124
    %p128 = pneg %p122
    %p129 = scmp.eq.s32.totalorder %s19, 3
    %p130 = por %p128, %p129
    %p131 = scmp.ne.s32.totalorder %s123, %s126
    %p132 = scmp.eq.s32.totalorder %s19, 0
    %p133 = por %p131, %p132
    %p134 = scmp.ne.s32.totalorder %s123, %s126
    %p135 = scmp.eq.s32.totalorder %s24, 3
    %p136 = por %p134, %p135
    %p137 = scmp.ne.s32.totalorder %s126, %s127
    %p138 = scmp.eq.s32.totalorder %s24, 0
    %p139 = por %p137, %p138
    %p140 = scmp.ne.s32.totalorder %s126, %s127
    %p141 = scmp.eq.s32.totalorder %s25, 3
    %p142 = por %p140, %p141
    %p144 = scmp.ne.s32.totalorder %s127, %s143
    %p145 = scmp.eq.s32.totalorder %s25, 0
    %p146 = por %p144, %p145
    %s147 = ssub.s32 %s27, %s34
    %s148 = ssub.s32 %s26, %s38
    %s149 = sor.u32 %s147, %s148
    %p150 = scmp.eq.s32.totalorder %s149, 0
    %s152 = sadd.s32 %s151, 1
    %s153 = scalar_select %p150, %s151, %s152
    %p156 = pneg %p150
    %p157 = scmp.eq.s32.totalorder %s19, 3
    %p158 = por %p156, %p157
    %p159 = scmp.ne.s32.totalorder %s151, %s154
    %p160 = scmp.eq.s32.totalorder %s19, 0
    %p161 = por %p159, %p160
    %p162 = scmp.ne.s32.totalorder %s151, %s154
    %p163 = scmp.eq.s32.totalorder %s24, 3
    %p164 = por %p162, %p163
    %p165 = scmp.ne.s32.totalorder %s154, %s155
    %p166 = scmp.eq.s32.totalorder %s24, 0
    %p167 = por %p165, %p166
    %p168 = scmp.ne.s32.totalorder %s154, %s155
    %p169 = scmp.eq.s32.totalorder %s25, 3
    %p170 = por %p168, %p169
    %p172 = scmp.ne.s32.totalorder %s155, %s171
    %p173 = scmp.eq.s32.totalorder %s25, 0
    %p174 = por %p172, %p173
    %s176 = sadd.s32 %s175, 1
    %p179 = scmp.eq.s32.totalorder %s19, 3
    %p180 = scmp.ne.s32.totalorder %s175, %s177
    %p181 = scmp.eq.s32.totalorder %s19, 0
    %p182 = por %p180, %p181
    %p183 = scmp.ne.s32.totalorder %s175, %s177
    %p184 = scmp.eq.s32.totalorder %s24, 3
    %p185 = por %p183, %p184
    %p186 = scmp.ne.s32.totalorder %s177, %s178
    %p187 = scmp.eq.s32.totalorder %s24, 0
    %p188 = por %p186, %p187
    %p189 = scmp.ne.s32.totalorder %s177, %s178
    %p190 = scmp.eq.s32.totalorder %s25, 3
    %p191 = por %p189, %p190
    %p193 = scmp.ne.s32.totalorder %s178, %s192
    %p194 = scmp.eq.s32.totalorder %s25, 0
    %p195 = por %p193, %p194
    %s197 = sadd.s32 %s196, 1
    %p200 = scmp.eq.s32.totalorder %s19, 3
    %p201 = scmp.ne.s32.totalorder %s196, %s198
    %p202 = scmp.eq.s32.totalorder %s19, 0
    %p203 = por %p201, %p202
    %p204 = scmp.ne.s32.totalorder %s196, %s198
    %p205 = scmp.eq.s32.totalorder %s24, 3
    %p206 = por %p204, %p205
    %p207 = scmp.ne.s32.totalorder %s198, %s199
    %p208 = scmp.eq.s32.totalorder %s24, 0
    %p209 = por %p207, %p208
    %p210 = scmp.ne.s32.totalorder %s198, %s199
    %p211 = scmp.eq.s32.totalorder %s25, 3
    %p212 = por %p210, %p211
    %p214 = scmp.ne.s32.totalorder %s199, %s213
    %p215 = scmp.eq.s32.totalorder %s25, 0
    %p216 = por %p214, %p215
    %s218 = sadd.s32 %s217, 1
    %p221 = scmp.eq.s32.totalorder %s19, 3
    %p222 = scmp.ne.s32.totalorder %s217, %s219
    %p223 = scmp.eq.s32.totalorder %s19, 0
    %p224 = por %p222, %p223
    %p225 = scmp.ne.s32.totalorder %s217, %s219
    %p226 = scmp.eq.s32.totalorder %s24, 3
    %p227 = por %p225, %p226
    %p228 = scmp.ne.s32.totalorder %s219, %s220
    %p229 = scmp.eq.s32.totalorder %s24, 0
    %p230 = por %p228, %p229
    %p231 = scmp.ne.s32.totalorder %s219, %s220
    %p232 = scmp.eq.s32.totalorder %s25, 3
    %p233 = por %p231, %p232
    %p235 = scmp.ne.s32.totalorder %s220, %s234
    %p236 = scmp.eq.s32.totalorder %s25, 0
    %p237 = por %p235, %p236
    %s239 = sadd.s32 %s238, 1
    %p242 = scmp.eq.s32.totalorder %s19, 3
    %p243 = scmp.ne.s32.totalorder %s238, %s240
    %p244 = scmp.eq.s32.totalorder %s19, 0
    %p245 = por %p243, %p244
    %p246 = scmp.ne.s32.totalorder %s238, %s240
    %p247 = scmp.eq.s32.totalorder %s24, 3
    %p248 = por %p246, %p247
    %p249 = scmp.ne.s32.totalorder %s240, %s241
    %p250 = scmp.eq.s32.totalorder %s24, 0
    %p251 = por %p249, %p250
    %p252 = scmp.ne.s32.totalorder %s240, %s241
    %p253 = scmp.eq.s32.totalorder %s25, 3
    %p254 = por %p252, %p253
    %p256 = scmp.ne.s32.totalorder %s241, %s255
    %p257 = scmp.eq.s32.totalorder %s25, 0
    %p258 = por %p256, %p257
    %s260 = sadd.s32 %s259, 1
    %p263 = scmp.eq.s32.totalorder %s19, 3
    %p264 = scmp.ne.s32.totalorder %s259, %s261
    %p265 = scmp.eq.s32.totalorder %s19, 0
    %p266 = por %p264, %p265
    %p267 = scmp.ne.s32.totalorder %s259, %s261
    %p268 = scmp.eq.s32.totalorder %s24, 3
    %p269 = por %p267, %p268
    %p270 = scmp.ne.s32.totalorder %s261, %s262
    %p271 = scmp.eq.s32.totalorder %s24, 0
    %p272 = por %p270, %p271
    %p273 = scmp.ne.s32.totalorder %s261, %s262
    %p274 = scmp.eq.s32.totalorder %s25, 3
    %p275 = por %p273, %p274
    %p277 = scmp.ne.s32.totalorder %s262, %s276
    %p278 = scmp.eq.s32.totalorder %s25, 0
    %p279 = por %p277, %p278
    %s281 = sadd.s32 %s280, 1
    %p284 = scmp.eq.s32.totalorder %s19, 3
    %p285 = scmp.ne.s32.totalorder %s280, %s282
    %p286 = scmp.eq.s32.totalorder %s19, 0
    %p287 = por %p285, %p286
    %p288 = scmp.ne.s32.totalorder %s280, %s282
    %p289 = scmp.eq.s32.totalorder %s24, 3
    %p290 = por %p288, %p289
    %p291 = scmp.ne.s32.totalorder %s282, %s283
    %p292 = scmp.eq.s32.totalorder %s24, 0
    %p293 = por %p291, %p292
    %p294 = scmp.ne.s32.totalorder %s282, %s283
    %p295 = scmp.eq.s32.totalorder %s25, 3
    %p296 = por %p294, %p295
    %p298 = scmp.ne.s32.totalorder %s283, %s297
    %p299 = scmp.eq.s32.totalorder %s25, 0
    %p300 = por %p298, %p299
    %s301 = ssub.s32 %s27, %s34
    %s302 = ssub.s32 %s26, %s38
    %s303 = sor.u32 %s301, %s302
    %p304 = scmp.eq.s32.totalorder %s303, 0
    %s306 = sadd.s32 %s305, 1
    %s307 = scalar_select %p304, %s305, %s306
    %p310 = pneg %p304
    %p311 = scmp.eq.s32.totalorder %s19, 3
    %p312 = por %p310, %p311
    %p313 = scmp.ne.s32.totalorder %s305, %s308
    %p314 = scmp.eq.s32.totalorder %s19, 0
    %p315 = por %p313, %p314
    %p316 = scmp.ne.s32.totalorder %s305, %s308
    %p317 = scmp.eq.s32.totalorder %s24, 3
    %p318 = por %p316, %p317
    %p319 = scmp.ne.s32.totalorder %s308, %s309
    %p320 = scmp.eq.s32.totalorder %s24, 0
    %p321 = por %p319, %p320
    %p322 = scmp.ne.s32.totalorder %s308, %s309
    %p323 = scmp.eq.s32.totalorder %s25, 3
    %p324 = por %p322, %p323
    %p326 = scmp.ne.s32.totalorder %s309, %s325
    %p327 = scmp.eq.s32.totalorder %s25, 0
    %p328 = por %p326, %p327
    %p329 = scmp.le.s32.totalorder 1, %s19
    %p330 = scmp.lt.s32.totalorder %s19, 5
    %p331 = pnand %p329, %p330
    %p332 = pneg %p331
    // Predicated region
    $region9: #{seg_dolf_tracker_forward.5} parent=5 // pred_check
      _
    $region10: #{seg_dolf_tracker_forward.5} parent=5 // pred_check_branch
      %334 = sbr.rel (%p331) target = $region12
    $region11: #{seg_dolf_tracker_forward.5} parent=5 // pred_region
      %s335 = ssub.s32 %s19, 1
      // Predicated region
      $region13: #{seg_dolf_tracker_forward.5} parent=11 // pred_check
        %p336 = pneg %p188
      $region14: #{seg_dolf_tracker_forward.5} parent=11 // pred_check_branch
        %338 = sbr.rel (%p336) target = $region16
      $region15: #{seg_dolf_tracker_forward.5} parent=11 // pred_region
        _
      $region16: #{seg_dolf_tracker_forward.5} parent=11 // pred_fallthru
        _
      // Predicated region
      $region17: #{seg_dolf_tracker_forward.5} parent=11 // pred_check
        %p339 = pneg %p209
      $region18: #{seg_dolf_tracker_forward.5} parent=11 // pred_check_branch
        %341 = sbr.rel (%p339) target = $region20
      $region19: #{seg_dolf_tracker_forward.5} parent=11 // pred_region
        _
      $region20: #{seg_dolf_tracker_forward.5} parent=11 // pred_fallthru
        _
      // Predicated region
      $region21: #{seg_dolf_tracker_forward.5} parent=11 // pred_check
        %p342 = pneg %p230
      $region22: #{seg_dolf_tracker_forward.5} parent=11 // pred_check_branch
        %344 = sbr.rel (%p342) target = $region24
      $region23: #{seg_dolf_tracker_forward.5} parent=11 // pred_region
        _
      $region24: #{seg_dolf_tracker_forward.5} parent=11 // pred_fallthru
        _
      // Predicated region
      $region25: #{seg_dolf_tracker_forward.5} parent=11 // pred_check
        %p345 = pneg %p251
      $region26: #{seg_dolf_tracker_forward.5} parent=11 // pred_check_branch
        %347 = sbr.rel (%p345) target = $region28
      $region27: #{seg_dolf_tracker_forward.5} parent=11 // pred_region
        _
      $region28: #{seg_dolf_tracker_forward.5} parent=11 // pred_fallthru
        _
      // Predicated region
      $region29: #{seg_dolf_tracker_forward.5} parent=11 // pred_check
        %p348 = pneg %p272
      $region30: #{seg_dolf_tracker_forward.5} parent=11 // pred_check_branch
        %350 = sbr.rel (%p348) target = $region32
      $region31: #{seg_dolf_tracker_forward.5} parent=11 // pred_region
        _
      $region32: #{seg_dolf_tracker_forward.5} parent=11 // pred_fallthru
        _
      // Predicated region
      $region33: #{seg_dolf_tracker_forward.5} parent=11 // pred_check
        %p351 = pneg %p293
      $region34: #{seg_dolf_tracker_forward.5} parent=11 // pred_check_branch
        %353 = sbr.rel (%p351) target = $region36
      $region35: #{seg_dolf_tracker_forward.5} parent=11 // pred_region
        _
      $region36: #{seg_dolf_tracker_forward.5} parent=11 // pred_fallthru
        _
    $region12: #{seg_dolf_tracker_forward.5} parent=5 // pred_fallthru
      _
    %p354 = scmp.lt.s32.totalorder %s19, 4
    // Predicated region
    $region37: #{seg_dolf_tracker_forward.5} parent=5 // pred_check
      %p355 = pneg %p354
    $region38: #{seg_dolf_tracker_forward.5} parent=5 // pred_check_branch
      %357 = sbr.rel (%p355) target = $region40
    $region39: #{seg_dolf_tracker_forward.5} parent=5 // pred_region
      // Predicated region
      $region41: #{seg_dolf_tracker_forward.5} parent=39 // pred_check
        %p358 = pneg %p51
      $region42: #{seg_dolf_tracker_forward.5} parent=39 // pred_check_branch
        %360 = sbr.rel (%p358) target = $region44
      $region43: #{seg_dolf_tracker_forward.5} parent=39 // pred_region
        %p361 = scmp.lt.s32.totalorder %s26, 1
        %s362 = scalar_select %p361, %s26, 1
        %s363 = smul.addr %s362, 4
        %s364 = smul.addr %s363, 8
        %s365 = scalar_lea.vmem %s0, %s364
      $region44: #{seg_dolf_tracker_forward.5} parent=39 // pred_fallthru
        _
      // Predicated region
      $region45: #{seg_dolf_tracker_forward.5} parent=39 // pred_check
        %p366 = pneg %p77
      $region46: #{seg_dolf_tracker_forward.5} parent=39 // pred_check_branch
        %368 = sbr.rel (%p366) target = $region48
      $region47: #{seg_dolf_tracker_forward.5} parent=39 // pred_region
        %p369 = scmp.lt.s32.totalorder %s26, 1
        %s370 = scalar_select %p369, %s26, 1
        %s371 = smul.addr %s370, 2
        %s372 = smul.addr %s371, 4
        %s373 = scalar_lea.vmem %s1, %s372
      $region48: #{seg_dolf_tracker_forward.5} parent=39 // pred_fallthru
        _
      // Predicated region
      $region49: #{seg_dolf_tracker_forward.5} parent=39 // pred_check
        %p374 = pneg %p105
      $region50: #{seg_dolf_tracker_forward.5} parent=39 // pred_check_branch
        %376 = sbr.rel (%p374) target = $region52
      $region51: #{seg_dolf_tracker_forward.5} parent=39 // pred_region
        %p377 = scmp.lt.s32.totalorder %s27, 1
        %s378 = scalar_select %p377, %s27, 1
        %p379 = scmp.lt.s32.totalorder %s26, 1
        %s380 = scalar_select %p379, %s26, 1
        %s381 = smul.addr %s380, 2
        %s382 = smul.addr %s378, 4
        %s383 = sadd.s32 %s381, %s382
        %s384 = smul.addr %s383, 4
        %s385 = scalar_lea.vmem %s2, %s384
      $region52: #{seg_dolf_tracker_forward.5} parent=39 // pred_fallthru
        _
      // Predicated region
      $region53: #{seg_dolf_tracker_forward.5} parent=39 // pred_check
        %p386 = pneg %p133
      $region54: #{seg_dolf_tracker_forward.5} parent=39 // pred_check_branch
        %388 = sbr.rel (%p386) target = $region56
      $region55: #{seg_dolf_tracker_forward.5} parent=39 // pred_region
        %p389 = scmp.lt.s32.totalorder %s27, 1
        %s390 = scalar_select %p389, %s27, 1
        %p391 = scmp.lt.s32.totalorder %s26, 1
        %s392 = scalar_select %p391, %s26, 1
        %s393 = smul.addr %s392, 2
        %s394 = smul.addr %s390, 4
        %s395 = sadd.s32 %s393, %s394
        %s396 = smul.addr %s395, 4
        %s397 = scalar_lea.vmem %s3, %s396
      $region56: #{seg_dolf_tracker_forward.5} parent=39 // pred_fallthru
        _
      // Predicated region
      $region57: #{seg_dolf_tracker_forward.5} parent=39 // pred_check
        %p398 = pneg %p161
      $region58: #{seg_dolf_tracker_forward.5} parent=39 // pred_check_branch
        %400 = sbr.rel (%p398) target = $region60
      $region59: #{seg_dolf_tracker_forward.5} parent=39 // pred_region
        %p401 = scmp.lt.s32.totalorder %s27, 1
        %s402 = scalar_select %p401, %s27, 1
        %p403 = scmp.lt.s32.totalorder %s26, 1
        %s404 = scalar_select %p403, %s26, 1
        %s405 = smul.addr %s404, 2
        %s406 = smul.addr %s402, 4
        %s407 = sadd.s32 %s405, %s406
        %s408 = smul.addr %s407, 4
        %s409 = scalar_lea.vmem %s4, %s408
      $region60: #{seg_dolf_tracker_forward.5} parent=39 // pred_fallthru
        _
    $region40: #{seg_dolf_tracker_forward.5} parent=5 // pred_fallthru
      _
    %p410 = scmp.le.s32.totalorder 1, %s19
    %p411 = scmp.lt.s32.totalorder %s19, 5
    %p412 = pnand %p410, %p411
    %p413 = pneg %p412
    // Predicated region
    $region61: #{seg_dolf_tracker_forward.5} parent=5 // pred_check
      _
    $region62: #{seg_dolf_tracker_forward.5} parent=5 // pred_check_branch
      %415 = sbr.rel (%p412) target = $region64
    $region63: #{seg_dolf_tracker_forward.5} parent=5 // pred_region
      %s416 = ssub.s32 %s19, 1
      %p417 = scmp.lt.s32.totalorder %s28, 1
      %s418 = scalar_select %p417, %s28, 1
      %s419 = smul.addr %s418, 4
      %s420 = smul.addr %s419, 8
      %s421 = scalar_lea.vmem %s0, %s420
      %p422 = pneg %p57
      %p423 = pneg %p54
      %p424 = scmp.lt.s32.totalorder %s28, 1
      %s425 = scalar_select %p424, %s28, 1
      %s426 = smul.addr %s425, 2
      %s427 = smul.addr %s426, 4
      %s428 = scalar_lea.vmem %s1, %s427
      %p429 = pneg %p83
      %p430 = pneg %p80
      %p431 = scmp.lt.s32.totalorder %s29, 1
      %s432 = scalar_select %p431, %s29, 1
      %p433 = scmp.lt.s32.totalorder %s28, 1
      %s434 = scalar_select %p433, %s28, 1
      %s435 = smul.addr %s434, 2
      %s436 = smul.addr %s432, 4
      %s437 = sadd.s32 %s435, %s436
      %s438 = smul.addr %s437, 4
      %s439 = scalar_lea.vmem %s2, %s438
      %p440 = pneg %p111
      %p441 = pneg %p108
      %p442 = scmp.lt.s32.totalorder %s29, 1
      %s443 = scalar_select %p442, %s29, 1
      %p444 = scmp.lt.s32.totalorder %s28, 1
      %s445 = scalar_select %p444, %s28, 1
      %s446 = smul.addr %s445, 2
      %s447 = smul.addr %s443, 4
      %s448 = sadd.s32 %s446, %s447
      %s449 = smul.addr %s448, 4
      %s450 = scalar_lea.vmem %s3, %s449
      %p451 = pneg %p139
      %p452 = pneg %p136
      %p453 = scmp.lt.s32.totalorder %s29, 1
      %s454 = scalar_select %p453, %s29, 1
      %p455 = scmp.lt.s32.totalorder %s28, 1
      %s456 = scalar_select %p455, %s28, 1
      %s457 = smul.addr %s456, 2
      %s458 = smul.addr %s454, 4
      %s459 = sadd.s32 %s457, %s458
      %s460 = smul.addr %s459, 4
      %s461 = scalar_lea.vmem %s4, %s460
      %p462 = pneg %p167
      %p463 = pneg %p164
      %p464 = pneg %p188
      %p465 = pneg %p185
      %p466 = pneg %p209
      %p467 = pneg %p206
      %p468 = pneg %p230
      %p469 = pneg %p227
      %p470 = pneg %p251
      %p471 = pneg %p248
      %p472 = pneg %p272
      %p473 = pneg %p269
      %p474 = pneg %p293
      %p475 = pneg %p290
      %p476 = pneg %p321
      %p477 = pneg %p318
      %p478 = scmp.lt.s32.totalorder %s29, 1
      %s479 = scalar_select %p478, %s29, 1
      %p480 = scmp.lt.s32.totalorder %s28, 1
      %s481 = scalar_select %p480, %s28, 1
      %s482 = smul.addr %s481, 2
      %s483 = smul.addr %s479, 4
      %s484 = sadd.s32 %s482, %s483
      %s485 = smul.addr %s484, 8
      %s486 = scalar_lea.vmem %s11, %s485
      %p487 = scmp.lt.s32.totalorder %s28, 1
      %s488 = scalar_select %p487, %s28, 1
      %s489 = smul.addr %s488, 4
      %s490 = smul.addr %s489, 8
      %s491 = scalar_lea.vmem %s0, %s490
      %p492 = scmp.lt.s32.totalorder %s28, 1
      %s493 = scalar_select %p492, %s28, 1
      %s494 = smul.addr %s493, 2
      %s495 = smul.addr %s494, 4
      %s496 = scalar_lea.vmem %s1, %s495
      %p497 = scmp.lt.s32.totalorder %s29, 1
      %s498 = scalar_select %p497, %s29, 1
      %p499 = scmp.lt.s32.totalorder %s28, 1
      %s500 = scalar_select %p499, %s28, 1
      %s501 = smul.addr %s500, 2
      %s502 = smul.addr %s498, 4
      %s503 = sadd.s32 %s501, %s502
      %s504 = smul.addr %s503, 4
      %s505 = scalar_lea.vmem %s2, %s504
      %p506 = scmp.lt.s32.totalorder %s29, 1
      %s507 = scalar_select %p506, %s29, 1
      %p508 = scmp.lt.s32.totalorder %s28, 1
      %s509 = scalar_select %p508, %s28, 1
      %s510 = smul.addr %s509, 2
      %s511 = smul.addr %s507, 4
      %s512 = sadd.s32 %s510, %s511
      %s513 = smul.addr %s512, 4
      %s514 = scalar_lea.vmem %s3, %s513
      %p515 = scmp.lt.s32.totalorder %s29, 1
      %s516 = scalar_select %p515, %s29, 1
      %p517 = scmp.lt.s32.totalorder %s28, 1
      %s518 = scalar_select %p517, %s28, 1
      %s519 = smul.addr %s518, 2
      %s520 = smul.addr %s516, 4
      %s521 = sadd.s32 %s519, %s520
      %s522 = smul.addr %s521, 4
      %s523 = scalar_lea.vmem %s4, %s522
      %p524 = scmp.lt.s32.totalorder %s29, 1
      %s525 = scalar_select %p524, %s29, 1
      %p526 = scmp.lt.s32.totalorder %s28, 1
      %s527 = scalar_select %p526, %s28, 1
      %s528 = smul.addr %s527, 2
      %s529 = smul.addr %s525, 4
      %s530 = sadd.s32 %s528, %s529
      %s531 = smul.addr %s530, 8
      %s532 = scalar_lea.vmem %s11, %s531
      %v534 = vld [vmem:[%s9] sm:$0x1]
      %v535 = vld [vmem:[%s10] sm:$0x1]
      %p536 = scmp.eq.s32.totalorder %s29, 0
      // Predicated region
      $region65: #{seg_dolf_tracker_forward.5} parent=63 // pred_check
        %p537 = pneg %p536
      $region66: #{seg_dolf_tracker_forward.5} parent=63 // pred_check_branch
        %539 = sbr.rel (%p537) target = $region68
      $region67: #{seg_dolf_tracker_forward.5} parent=63 // pred_region
        %vm540 = vcmask 261120
        %541 = vst.msk [vmem:[#allocation3] sm:$0xff] %vm540, 0
        %542 = vst.msk [vmem:[#allocation3 + $0x8] sm:$0xff] %vm540, 0
        %543 = vst.msk [vmem:[#allocation3 + $0x10] sm:$0xff] %vm540, 0
        %vm544 = vcmask 31744
        %545 = vst.msk [vmem:[#allocation4] sm:$0xff] %vm544, 0.0
        %546 = vst.msk [vmem:[#allocation4 + $0x8] sm:$0xff] %vm544, 0.0
        %547 = vst.msk [vmem:[#allocation4 + $0x10] sm:$0xff] %vm544, 0.0
        %548 = vst.msk [vmem:[#allocation4 + $0x18] sm:$0xff] %vm544, 0.0
        %549 = vst.msk [vmem:[#allocation4 + $0x20] sm:$0xff] %vm544, 0.0
        %550 = vst.msk [vmem:[#allocation4 + $0x28] sm:$0xff] %vm544, 0.0
        %551 = vst.msk [vmem:[#allocation5] sm:$0xff] %vm544, 0.0
        %552 = vst.msk [vmem:[#allocation5 + $0x8] sm:$0xff] %vm544, 0.0
        %553 = vst.msk [vmem:[#allocation5 + $0x10] sm:$0xff] %vm544, 0.0
        %554 = vst.msk [vmem:[#allocation5 + $0x18] sm:$0xff] %vm544, 0.0
        %555 = vst.msk [vmem:[#allocation5 + $0x20] sm:$0xff] %vm544, 0.0
        %556 = vst.msk [vmem:[#allocation5 + $0x28] sm:$0xff] %vm544, 0.0
        %v557 = vld [vmem:[%s496] sm:$0xf]
        %v558 = vld [vmem:[%s496 + $0x4] sm:$0xf]
        %v559 = vld [vmem:[%s491] sm:$0xff]
        %v560 = vld [vmem:[%s491 + $0x8] sm:$0xff]
        %v561 = vld [vmem:[%s491 + $0x10] sm:$0xff]
        %v562 = vld [vmem:[%s491 + $0x18] sm:$0xff]
        %v563 = vadd.f32 %v559, %v560
        %564 = vadd.xlane.f32.xlu0 %v563
        %v565 = vpop.xlane.xlu0 %564
        %v566 = vadd.f32 %v561, %v562
        %567 = vadd.xlane.f32.xlu0 %v566
        %v568 = vpop.xlane.xlu0 %567
        %v569 = vrcp.pop 256.0
        %v570 = vmul.f32 %v565, %v569
        %v571 = vmul.f32 %v568, %v569
        %v573 = vlaneseq
        %v574 = vshrl.u32 %v573, 7
        %v575 = vsub.s32 0, %v574
        %v576 = vrot.slane %v534, %v575
        %v578 = vmul.f32 %v570, %v576
        %v579 = vmul.f32 %v571, %v576
        %v581 = vlaneseq
        %v582 = vshrl.u32 %v581, 7
        %v583 = vsub.s32 0, %v582
        %v584 = vrot.slane %v535, %v583
        %v586 = vadd.f32 %v578, %v584
        %v587 = vadd.f32 %v579, %v584
        %v588 = vmax.f32 %v586, 0.0
        %v589 = vmax.f32 %v587, 0.0
        %v590 = vxor.u32 %v586, 2147483648
        %v591 = vxor.u32 %v587, 2147483648
        %v592 = vmul.f32 %v590, 1.442695
        %v593 = vpow.pop %v592
        %v594 = vmul.f32 %v591, 1.442695
        %v595 = vpow.pop %v594
        %v596 = vadd.f32 %v593, 1.0
        %v597 = vadd.f32 %v595, 1.0
        %v598 = vrcp.pop %v596
        %v599 = vmul.f32 1.0, %v598
        %v600 = vrcp.pop %v597
        %v601 = vmul.f32 1.0, %v600
        %v604 = vunpack.c.l.b16 %v557
        %v605 = vunpack.c.l.b16 %v558
        %v606 = vpack.c.b16 %v605, %v604
        %608 = vst.msk [vmem:[#allocation3] sm:$0xff] %vm540, %v606
        %609 = vst.msk [vmem:[#allocation4] sm:$0xff] %vm544, %v588
        %610 = vst.msk [vmem:[#allocation4 + $0x8] sm:$0xff] %vm544, %v589
        %613 = vrot.lane.b32.xlu0 %v599, 124
        %v614 = vpop.permute.xlu0 %613
        %615 = vrot.lane.b32.xlu0 %v601, 124
        %v616 = vpop.permute.xlu0 %615
        %619 = vst.msk [vmem:[#allocation5] sm:$0xff] %vm544, %v614
        %620 = vst.msk [vmem:[#allocation5 + $0x8] sm:$0xff] %vm544, %v616
        %623 = vrot.lane.b32.xlu0 %v588, 4
        %v624 = vpop.permute.xlu0 %623
        %625 = vrot.lane.b32.xlu0 %v589, 4
        %v626 = vpop.permute.xlu0 %625
        %v629 = vmul.f32 %v599, %v624
        %v630 = vmul.f32 %v601, %v626
        %v631 = vpack.c.bf16 %v630, %v629
        %632 = vxpose.xlu0.c.b16.start [1/8] %v606, 128
        %633 = vxpose.xlu0.c.b16.cont [2/8] 0, 128
        %634 = vxpose.xlu0.c.b16.cont [3/8] 0, 128
        %635 = vxpose.xlu0.c.b16.cont [4/8] 0, 128
        %636 = vxpose.xlu0.c.b16.cont [5/8] 0, 128
        %637 = vxpose.xlu0.c.b16.cont [6/8] 0, 128
        %638 = vxpose.xlu0.c.b16.cont [7/8] 0, 128
        %639 = vxpose.xlu0.c.b16.end [8/8] 0, 128
        %v640 = vpop.trf.xlu0
        %v641 = vpop.trf.xlu0
        %v642 = vpop.trf.xlu0
        %v643 = vpop.trf.xlu0
        %v644 = vpop.trf.xlu0
        %v645 = vpop.trf.xlu0
        %v646 = vpop.trf.xlu0
        %v647 = vpop.trf.xlu0
        %649 = vrot.lane.b32.xlu0 %v631, 124
        %v650 = vpop.permute.xlu0 %649
        %vm652 = vcmask 130048
        %v654 = vsel %vm652, %v640, 0
        %v657 = vsel %vm652, %v641, 0
        %659 = vmatprep.subr.bf16.mxu0 0
        %660 = vmatpush1.bf16.msra.mxu0 %v650
        %661 = vmatprep.subr.bf16.mxu0 0
        %662 = vmatpush1.bf16.msra.mxu0 0
        %663 = vmatprep.subr.bf16.mxu0 0
        %664 = vmatpush1.bf16.msra.mxu0 0
        %665 = vmatprep.subr.bf16.mxu0 0
        %666 = vmatpush1.bf16.msra.mxu0 0
        %667 = vmatprep.subr.bf16.mxu0 0
        %668 = vmatpush1.bf16.msra.mxu0 0
        %669 = vmatprep.subr.bf16.mxu0 0
        %670 = vmatpush1.bf16.msra.mxu0 0
        %671 = vmatprep.subr.bf16.mxu0 0
        %672 = vmatpush1.bf16.msra.mxu0 0
        %673 = vmatprep.subr.bf16.mxu0 0
        %674 = vmatpush1.bf16.msra.mxu0 0
        %675 = vmatprep.subr.bf16.mxu0 0
        %676 = vmatpush1.bf16.msra.mxu0 0
        %677 = vmatprep.subr.bf16.mxu0 0
        %678 = vmatpush1.bf16.msra.mxu0 0
        %679 = vmatprep.subr.bf16.mxu0 0
        %680 = vmatpush1.bf16.msra.mxu0 0
        %681 = vmatprep.subr.bf16.mxu0 0
        %682 = vmatpush1.bf16.msra.mxu0 0
        %683 = vmatprep.subr.bf16.mxu0 0
        %684 = vmatpush1.bf16.msra.mxu0 0
        %685 = vmatprep.subr.bf16.mxu0 0
        %686 = vmatpush1.bf16.msra.mxu0 0
        %687 = vmatprep.subr.bf16.mxu0 0
        %688 = vmatpush1.bf16.msra.mxu0 0
        %689 = vmatprep.subr.bf16.mxu0 0
        %690 = vmatpush1.bf16.msra.mxu0 0
        %691 = vmatprep.mubr.bf16.mxu0 0
        %692 = vmatmul.mubr.bf16.gmra.mrb[0].mxu0 %v654
        %v693 = vpop.f32.mrb[0].mxu0
        %v694 = vadd.f32 0.0, %v693
        %v695 = vpop.f32.mrb[0].mxu0
        %v696 = vpop.f32.mrb[0].mxu0
        %v697 = vadd.f32 0.0, %v696
        %v698 = vpop.f32.mrb[0].mxu0
        %699 = vmatprep.mubr.bf16.mxu0 0
        %700 = vmatmul.mubr.bf16.gmra.mrb[0].mxu0 %v657
        %v701 = vpop.f32.mrb[0].mxu0
        %v702 = vadd.f32 0.0, %v701
        %v703 = vpop.f32.mrb[0].mxu0
        %v704 = vpop.f32.mrb[0].mxu0
        %v705 = vadd.f32 0.0, %v704
        %v706 = vpop.f32.mrb[0].mxu0
        %707 = vdwg.mxu0
        %v708 = vmul.f32 %v694, 0.0625
        %v709 = vmul.f32 %v697, 0.0625
        %v710 = vmul.f32 %v702, 0.0625
        %v711 = vmul.f32 %v705, 0.0625
        %v712 = vpack.c.bf16 %v709, %v708
        %v713 = vpack.c.bf16 %v711, %v710
        %v715 = vsel %vm540, %v606, 0
        %717 = vmatprep.subr.bf16.mxu0 0
        %718 = vmatpush1.bf16.msra.mxu0 %v712
        %719 = vmatprep.subr.bf16.mxu0 0
        %720 = vmatpush1.bf16.msra.mxu0 %v713
        %721 = vmatprep.subr.bf16.mxu0 0
        %722 = vmatpush1.bf16.msra.mxu0 0
        %723 = vmatprep.subr.bf16.mxu0 0
        %724 = vmatpush1.bf16.msra.mxu0 0
        %725 = vmatprep.subr.bf16.mxu0 0
        %726 = vmatpush1.bf16.msra.mxu0 0
        %727 = vmatprep.subr.bf16.mxu0 0
        %728 = vmatpush1.bf16.msra.mxu0 0
        %729 = vmatprep.subr.bf16.mxu0 0
        %730 = vmatpush1.bf16.msra.mxu0 0
        %731 = vmatprep.subr.bf16.mxu0 0
        %732 = vmatpush1.bf16.msra.mxu0 0
        %733 = vmatprep.subr.bf16.mxu0 0
        %734 = vmatpush1.bf16.msra.mxu0 0
        %735 = vmatprep.subr.bf16.mxu0 0
        %736 = vmatpush1.bf16.msra.mxu0 0
        %737 = vmatprep.subr.bf16.mxu0 0
        %738 = vmatpush1.bf16.msra.mxu0 0
        %739 = vmatprep.subr.bf16.mxu0 0
        %740 = vmatpush1.bf16.msra.mxu0 0
        %741 = vmatprep.subr.bf16.mxu0 0
        %742 = vmatpush1.bf16.msra.mxu0 0
        %743 = vmatprep.subr.bf16.mxu0 0
        %744 = vmatpush1.bf16.msra.mxu0 0
        %745 = vmatprep.subr.bf16.mxu0 0
        %746 = vmatpush1.bf16.msra.mxu0 0
        %747 = vmatprep.subr.bf16.mxu0 0
        %748 = vmatpush1.bf16.msra.mxu0 0
        %749 = vmatprep.mubr.bf16.mxu0 0
        %750 = vmatmul.mubr.bf16.gmra.mrb[0].mxu0 %v715
        %v751 = vpop.f32.mrb[0].mxu0
        %v752 = vadd.f32 0.0, %v751
        %v753 = vpop.f32.mrb[0].mxu0
        %v754 = vpop.f32.mrb[0].mxu0
        %v755 = vadd.f32 0.0, %v754
        %v756 = vpop.f32.mrb[0].mxu0
        %757 = vdwg.mxu0
        %v758 = vsub.f32 %v752, %v588
        %v759 = vsub.f32 %v755, %v589
        %762 = vrot.lane.b32.xlu0 %v758, 4
        %v763 = vpop.permute.xlu0 %762
        %764 = vrot.lane.b32.xlu0 %v759, 4
        %v765 = vpop.permute.xlu0 %764
        %v768 = vmul.f32 %v599, %v763
        %v769 = vmul.f32 %v601, %v765
        %v770 = vpack.c.bf16 %v769, %v768
        %v771 = vmul.f32 %v708, 0.01
        %v772 = vmul.f32 %v709, 0.01
        %v773 = vmul.f32 %v710, 0.01
        %v774 = vmul.f32 %v711, 0.01
        %776 = vrot.lane.b32.xlu0 %v770, 124
        %v777 = vpop.permute.xlu0 %776
        %779 = vmatprep.subr.bf16.mxu0 0
        %780 = vmatpush1.bf16.msra.mxu0 %v777
        %781 = vmatprep.subr.bf16.mxu0 0
        %782 = vmatpush1.bf16.msra.mxu0 0
        %783 = vmatprep.subr.bf16.mxu0 0
        %784 = vmatpush1.bf16.msra.mxu0 0
        %785 = vmatprep.subr.bf16.mxu0 0
        %786 = vmatpush1.bf16.msra.mxu0 0
        %787 = vmatprep.subr.bf16.mxu0 0
        %788 = vmatpush1.bf16.msra.mxu0 0
        %789 = vmatprep.subr.bf16.mxu0 0
        %790 = vmatpush1.bf16.msra.mxu0 0
        %791 = vmatprep.subr.bf16.mxu0 0
        %792 = vmatpush1.bf16.msra.mxu0 0
        %793 = vmatprep.subr.bf16.mxu0 0
        %794 = vmatpush1.bf16.msra.mxu0 0
        %795 = vmatprep.subr.bf16.mxu0 0
        %796 = vmatpush1.bf16.msra.mxu0 0
        %797 = vmatprep.subr.bf16.mxu0 0
        %798 = vmatpush1.bf16.msra.mxu0 0
        %799 = vmatprep.subr.bf16.mxu0 0
        %800 = vmatpush1.bf16.msra.mxu0 0
        %801 = vmatprep.subr.bf16.mxu0 0
        %802 = vmatpush1.bf16.msra.mxu0 0
        %803 = vmatprep.subr.bf16.mxu0 0
        %804 = vmatpush1.bf16.msra.mxu0 0
        %805 = vmatprep.subr.bf16.mxu0 0
        %806 = vmatpush1.bf16.msra.mxu0 0
        %807 = vmatprep.subr.bf16.mxu0 0
        %808 = vmatpush1.bf16.msra.mxu0 0
        %809 = vmatprep.subr.bf16.mxu0 0
        %810 = vmatpush1.bf16.msra.mxu0 0
        %811 = vmatprep.mubr.bf16.mxu0 0
        %812 = vmatmul.mubr.bf16.gmra.mrb[0].mxu0 %v654
        %v813 = vpop.f32.mrb[0].mxu0
        %v814 = vadd.f32 %v771, %v813
        %v815 = vpop.f32.mrb[0].mxu0
        %v816 = vpop.f32.mrb[0].mxu0
        %v817 = vadd.f32 %v772, %v816
        %v818 = vpop.f32.mrb[0].mxu0
        %819 = vmatprep.mubr.bf16.mxu0 0
        %820 = vmatmul.mubr.bf16.gmra.mrb[0].mxu0 %v657
        %v821 = vpop.f32.mrb[0].mxu0
        %v822 = vadd.f32 %v773, %v821
        %v823 = vpop.f32.mrb[0].mxu0
        %v824 = vpop.f32.mrb[0].mxu0
        %v825 = vadd.f32 %v774, %v824
        %v826 = vpop.f32.mrb[0].mxu0
        %827 = vdwg.mxu0
        %v828 = vpack.c.bf16 %v817, %v814
        %v829 = vpack.c.bf16 %v825, %v822
        %830 = vmatprep.subr.bf16.mxu0 0
        %831 = vmatpush1.bf16.msra.mxu0 %v828
        %832 = vmatprep.subr.bf16.mxu0 0
        %833 = vmatpush1.bf16.msra.mxu0 %v829
        %834 = vmatprep.subr.bf16.mxu0 0
        %835 = vmatpush1.bf16.msra.mxu0 0
        %836 = vmatprep.subr.bf16.mxu0 0
        %837 = vmatpush1.bf16.msra.mxu0 0
        %838 = vmatprep.subr.bf16.mxu0 0
        %839 = vmatpush1.bf16.msra.mxu0 0
        %840 = vmatprep.subr.bf16.mxu0 0
        %841 = vmatpush1.bf16.msra.mxu0 0
        %842 = vmatprep.subr.bf16.mxu0 0
        %843 = vmatpush1.bf16.msra.mxu0 0
        %844 = vmatprep.subr.bf16.mxu0 0
        %845 = vmatpush1.bf16.msra.mxu0 0
        %846 = vmatprep.subr.bf16.mxu0 0
        %847 = vmatpush1.bf16.msra.mxu0 0
        %848 = vmatprep.subr.bf16.mxu0 0
        %849 = vmatpush1.bf16.msra.mxu0 0
        %850 = vmatprep.subr.bf16.mxu0 0
        %851 = vmatpush1.bf16.msra.mxu0 0
        %852 = vmatprep.subr.bf16.mxu0 0
        %853 = vmatpush1.bf16.msra.mxu0 0
        %854 = vmatprep.subr.bf16.mxu0 0
        %855 = vmatpush1.bf16.msra.mxu0 0
        %856 = vmatprep.subr.bf16.mxu0 0
        %857 = vmatpush1.bf16.msra.mxu0 0
        %858 = vmatprep.subr.bf16.mxu0 0
        %859 = vmatpush1.bf16.msra.mxu0 0
        %860 = vmatprep.subr.bf16.mxu0 0
        %861 = vmatpush1.bf16.msra.mxu0 0
        %862 = vmatprep.mubr.bf16.mxu0 0
        %863 = vmatmul.mubr.bf16.gmra.mrb[0].mxu0 %v715
        %v864 = vpop.f32.mrb[0].mxu0
        %v865 = vadd.f32 0.0, %v864
        %v866 = vpop.f32.mrb[0].mxu0
        %v867 = vpop.f32.mrb[0].mxu0
        %v868 = vadd.f32 0.0, %v867
        %v869 = vpop.f32.mrb[0].mxu0
        %870 = vdwg.mxu0
        %v871 = vmul.f32 %v814, %v814
        %v872 = vmul.f32 %v817, %v817
        %v873 = vmul.f32 %v822, %v822
        %v874 = vmul.f32 %v825, %v825
        %v875 = vsel %vm544, %v871, 0.0
        %v876 = vsel %vm544, %v872, 0.0
        %v877 = vadd.f32 %v875, %v876
        %v878 = vsel %vm544, %v873, 0.0
        %v879 = vadd.f32 %v877, %v878
        %v880 = vsel %vm544, %v874, 0.0
        %v881 = vadd.f32 %v879, %v880
        %882 = vadd.xlane.f32.xlu0 %v881
        %v883 = vpop.xlane.xlu0 %882
        %v884 = vrot.slane %v883, 4
        %v885 = vadd.f32 %v883, %v884
        %v886 = vrot.slane %v885, 2
        %v887 = vadd.f32 %v885, %v886
        %v888 = vrot.slane %v887, 1
        %v889 = vadd.f32 %v887, %v888
        %s890 = vtos %v889
        %v891 = vstv %s890
        %894 = vrot.lane.b32.xlu0 %v865, 4
        %v895 = vpop.permute.xlu0 %894
        %896 = vrot.lane.b32.xlu0 %v868, 4
        %v897 = vpop.permute.xlu0 %896
        %v900 = vmul.f32 %v599, %v895
        %v901 = vmul.f32 %v601, %v897
        %v902 = vmul.f32 %v900, %v895
        %v903 = vmul.f32 %v901, %v897
        %906 = vrot.lane.b32.xlu0 %v902, 124
        %v907 = vpop.permute.xlu0 %906
        %908 = vrot.lane.b32.xlu0 %v903, 124
        %v909 = vpop.permute.xlu0 %908
        %v912 = vsel %vm544, %v907, 0.0
        %v913 = vsel %vm544, %v909, 0.0
        %v914 = vadd.f32 %v912, %v913
        %915 = vadd.xlane.f32.xlu0 %v914
        %v916 = vpop.xlane.xlu0 %915
        %v917 = vrot.slane %v916, 4
        %v918 = vadd.f32 %v916, %v917
        %v919 = vrot.slane %v918, 2
        %v920 = vadd.f32 %v918, %v919
        %v921 = vrot.slane %v920, 1
        %v922 = vadd.f32 %v920, %v921
        %s923 = vtos %v922
        %v924 = vstv %s923
        %v925 = vmul.f32 %v891, 0.01
        %v926 = vadd.f32 %v924, %v925
        %v927 = vmax.f32 %v926, 1e-08
        %v928 = vrcp.pop %v927
        %v929 = vmul.f32 %v891, %v928
        %v930 = vmul.f32 %v929, %v814
        %v931 = vmul.f32 %v929, %v817
        %v932 = vmul.f32 %v929, %v822
        %v933 = vmul.f32 %v929, %v825
        %v934 = vsub.f32 %v708, %v930
        %v935 = vsub.f32 %v709, %v931
        %v936 = vsub.f32 %v710, %v932
        %v937 = vsub.f32 %v711, %v933
        %v938 = vpack.c.bf16 %v935, %v934
        %v939 = vpack.c.bf16 %v937, %v936
        %940 = vmatprep.subr.bf16.mxu0 0
        %941 = vmatpush1.bf16.msra.mxu0 %v938
        %942 = vmatprep.subr.bf16.mxu0 0
        %943 = vmatpush1.bf16.msra.mxu0 %v939
        %944 = vmatprep.subr.bf16.mxu0 0
        %945 = vmatpush1.bf16.msra.mxu0 0
        %946 = vmatprep.subr.bf16.mxu0 0
        %947 = vmatpush1.bf16.msra.mxu0 0
        %948 = vmatprep.subr.bf16.mxu0 0
        %949 = vmatpush1.bf16.msra.mxu0 0
        %950 = vmatprep.subr.bf16.mxu0 0
        %951 = vmatpush1.bf16.msra.mxu0 0
        %952 = vmatprep.subr.bf16.mxu0 0
        %953 = vmatpush1.bf16.msra.mxu0 0
        %954 = vmatprep.subr.bf16.mxu0 0
        %955 = vmatpush1.bf16.msra.mxu0 0
        %956 = vmatprep.subr.bf16.mxu0 0
        %957 = vmatpush1.bf16.msra.mxu0 0
        %958 = vmatprep.subr.bf16.mxu0 0
        %959 = vmatpush1.bf16.msra.mxu0 0
        %960 = vmatprep.subr.bf16.mxu0 0
        %961 = vmatpush1.bf16.msra.mxu0 0
        %962 = vmatprep.subr.bf16.mxu0 0
        %963 = vmatpush1.bf16.msra.mxu0 0
        %964 = vmatprep.subr.bf16.mxu0 0
        %965 = vmatpush1.bf16.msra.mxu0 0
        %966 = vmatprep.subr.bf16.mxu0 0
        %967 = vmatpush1.bf16.msra.mxu0 0
        %968 = vmatprep.subr.bf16.mxu0 0
        %969 = vmatpush1.bf16.msra.mxu0 0
        %970 = vmatprep.subr.bf16.mxu0 0
        %971 = vmatpush1.bf16.msra.mxu0 0
        %972 = vmatprep.mubr.bf16.mxu0 0
        %973 = vmatmul.mubr.bf16.gmra.mrb[0].mxu0 %v715
        %v974 = vpop.f32.mrb[0].mxu0
        %v975 = vadd.f32 0.0, %v974
        %v976 = vpop.f32.mrb[0].mxu0
        %v977 = vpop.f32.mrb[0].mxu0
        %v978 = vadd.f32 0.0, %v977
        %v979 = vpop.f32.mrb[0].mxu0
        %980 = vdwg.mxu0
        %v981 = vsub.f32 %v975, %v588
        %v982 = vsub.f32 %v978, %v589
        %985 = vrot.lane.b32.xlu0 %v981, 4
        %v986 = vpop.permute.xlu0 %985
        %987 = vrot.lane.b32.xlu0 %v982, 4
        %v988 = vpop.permute.xlu0 %987
        %v991 = vmul.f32 %v599, %v986
        %v992 = vmul.f32 %v601, %v988
        %v993 = vpack.c.bf16 %v992, %v991
        %v994 = vmul.f32 %v934, 0.01
        %v995 = vmul.f32 %v935, 0.01
        %v996 = vmul.f32 %v936, 0.01
        %v997 = vmul.f32 %v937, 0.01
        %999 = vrot.lane.b32.xlu0 %v993, 124
        %v1000 = vpop.permute.xlu0 %999
        %1002 = vmatprep.subr.bf16.mxu0 0
        %1003 = vmatpush1.bf16.msra.mxu0 %v1000
        %1004 = vmatprep.subr.bf16.mxu0 0
        %1005 = vmatpush1.bf16.msra.mxu0 0
        %1006 = vmatprep.subr.bf16.mxu0 0
        %1007 = vmatpush1.bf16.msra.mxu0 0
        %1008 = vmatprep.subr.bf16.mxu0 0
        %1009 = vmatpush1.bf16.msra.mxu0 0
        %1010 = vmatprep.subr.bf16.mxu0 0
        %1011 = vmatpush1.bf16.msra.mxu0 0
        %1012 = vmatprep.subr.bf16.mxu0 0
        %1013 = vmatpush1.bf16.msra.mxu0 0
        %1014 = vmatprep.subr.bf16.mxu0 0
        %1015 = vmatpush1.bf16.msra.mxu0 0
        %1016 = vmatprep.subr.bf16.mxu0 0
        %1017 = vmatpush1.bf16.msra.mxu0 0
        %1018 = vmatprep.subr.bf16.mxu0 0
        %1019 = vmatpush1.bf16.msra.mxu0 0
        %1020 = vmatprep.subr.bf16.mxu0 0
        %1021 = vmatpush1.bf16.msra.mxu0 0
        %1022 = vmatprep.subr.bf16.mxu0 0
        %1023 = vmatpush1.bf16.msra.mxu0 0
        %1024 = vmatprep.subr.bf16.mxu0 0
        %1025 = vmatpush1.bf16.msra.mxu0 0
        %1026 = vmatprep.subr.bf16.mxu0 0
        %1027 = vmatpush1.bf16.msra.mxu0 0
        %1028 = vmatprep.subr.bf16.mxu0 0
        %1029 = vmatpush1.bf16.msra.mxu0 0
        %1030 = vmatprep.subr.bf16.mxu0 0
        %1031 = vmatpush1.bf16.msra.mxu0 0
        %1032 = vmatprep.subr.bf16.mxu0 0
        %1033 = vmatpush1.bf16.msra.mxu0 0
        %1034 = vmatprep.mubr.bf16.mxu0 0
        %1035 = vmatmul.mubr.bf16.gmra.mrb[0].mxu0 %v654
        %v1036 = vpop.f32.mrb[0].mxu0
        %v1037 = vadd.f32 %v994, %v1036
        %v1038 = vpop.f32.mrb[0].mxu0
        %v1039 = vpop.f32.mrb[0].mxu0
        %v1040 = vadd.f32 %v995, %v1039
        %v1041 = vpop.f32.mrb[0].mxu0
        %1042 = vmatprep.mubr.bf16.mxu0 0
        %1043 = vmatmul.mubr.bf16.gmra.mrb[0].mxu0 %v657
        %v1044 = vpop.f32.mrb[0].mxu0
        %v1045 = vadd.f32 %v996, %v1044
        %v1046 = vpop.f32.mrb[0].mxu0
        %v1047 = vpop.f32.mrb[0].mxu0
        %v1048 = vadd.f32 %v997, %v1047
        %v1049 = vpop.f32.mrb[0].mxu0
        %1050 = vdwg.mxu0
        %v1051 = vpack.c.bf16 %v1040, %v1037
        %v1052 = vpack.c.bf16 %v1048, %v1045
        %1053 = vmatprep.subr.bf16.mxu0 0
        %1054 = vmatpush1.bf16.msra.mxu0 %v1051
        %1055 = vmatprep.subr.bf16.mxu0 0
        %1056 = vmatpush1.bf16.msra.mxu0 %v1052
        %1057 = vmatprep.subr.bf16.mxu0 0
        %1058 = vmatpush1.bf16.msra.mxu0 0
        %1059 = vmatprep.subr.bf16.mxu0 0
        %1060 = vmatpush1.bf16.msra.mxu0 0
        %1061 = vmatprep.subr.bf16.mxu0 0
        %1062 = vmatpush1.bf16.msra.mxu0 0
        %1063 = vmatprep.subr.bf16.mxu0 0
        %1064 = vmatpush1.bf16.msra.mxu0 0
        %1065 = vmatprep.subr.bf16.mxu0 0
        %1066 = vmatpush1.bf16.msra.mxu0 0
        %1067 = vmatprep.subr.bf16.mxu0 0
        %1068 = vmatpush1.bf16.msra.mxu0 0
        %1069 = vmatprep.subr.bf16.mxu0 0
        %1070 = vmatpush1.bf16.msra.mxu0 0
        %1071 = vmatprep.subr.bf16.mxu0 0
        %1072 = vmatpush1.bf16.msra.mxu0 0
        %1073 = vmatprep.subr.bf16.mxu0 0
        %1074 = vmatpush1.bf16.msra.mxu0 0
        %1075 = vmatprep.subr.bf16.mxu0 0
        %1076 = vmatpush1.bf16.msra.mxu0 0
        %1077 = vmatprep.subr.bf16.mxu0 0
        %1078 = vmatpush1.bf16.msra.mxu0 0
        %1079 = vmatprep.subr.bf16.mxu0 0
        %1080 = vmatpush1.bf16.msra.mxu0 0
        %1081 = vmatprep.subr.bf16.mxu0 0
        %1082 = vmatpush1.bf16.msra.mxu0 0
        %1083 = vmatprep.subr.bf16.mxu0 0
        %1084 = vmatpush1.bf16.msra.mxu0 0
        %1085 = vmatprep.mubr.bf16.mxu0 0
        %1086 = vmatmul.mubr.bf16.gmra.mrb[0].mxu0 %v715
        %v1087 = vpop.f32.mrb[0].mxu0
        %v1088 = vadd.f32 0.0, %v1087
        %v1089 = vpop.f32.mrb[0].mxu0
        %v1090 = vpop.f32.mrb[0].mxu0
        %v1091 = vadd.f32 0.0, %v1090
        %v1092 = vpop.f32.mrb[0].mxu0
        %1093 = vdwg.mxu0
        %v1094 = vmul.f32 %v1037, %v1037
        %v1095 = vmul.f32 %v1040, %v1040
        %v1096 = vmul.f32 %v1045, %v1045
        %v1097 = vmul.f32 %v1048, %v1048
        %v1098 = vsel %vm544, %v1094, 0.0
        %v1099 = vsel %vm544, %v1095, 0.0
        %v1100 = vadd.f32 %v1098, %v1099
        %v1101 = vsel %vm544, %v1096, 0.0
        %v1102 = vadd.f32 %v1100, %v1101
        %v1103 = vsel %vm544, %v1097, 0.0
        %v1104 = vadd.f32 %v1102, %v1103
        %1105 = vadd.xlane.f32.xlu0 %v1104
        %v1106 = vpop.xlane.xlu0 %1105
        %v1107 = vrot.slane %v1106, 4
        %v1108 = vadd.f32 %v1106, %v1107
        %v1109 = vrot.slane %v1108, 2
        %v1110 = vadd.f32 %v1108, %v1109
        %v1111 = vrot.slane %v1110, 1
        %v1112 = vadd.f32 %v1110, %v1111
        %s1113 = vtos %v1112
        %v1114 = vstv %s1113
        %1117 = vrot.lane.b32.xlu0 %v1088, 4
        %v1118 = vpop.permute.xlu0 %1117
        %1119 = vrot.lane.b32.xlu0 %v1091, 4
        %v1120 = vpop.permute.xlu0 %1119
        %v1123 = vmul.f32 %v599, %v1118
        %v1124 = vmul.f32 %v601, %v1120
        %v1125 = vmul.f32 %v1123, %v1118
        %v1126 = vmul.f32 %v1124, %v1120
        %1129 = vrot.lane.b32.xlu0 %v1125, 124
        %v1130 = vpop.permute.xlu0 %1129
        %1131 = vrot.lane.b32.xlu0 %v1126, 124
        %v1132 = vpop.permute.xlu0 %1131
        %v1135 = vsel %vm544, %v1130, 0.0
        %v1136 = vsel %vm544, %v1132, 0.0
        %v1137 = vadd.f32 %v1135, %v1136
        %1138 = vadd.xlane.f32.xlu0 %v1137
        %v1139 = vpop.xlane.xlu0 %1138
        %v1140 = vrot.slane %v1139, 4
        %v1141 = vadd.f32 %v1139, %v1140
        %v1142 = vrot.slane %v1141, 2
        %v1143 = vadd.f32 %v1141, %v1142
        %v1144 = vrot.slane %v1143, 1
        %v1145 = vadd.f32 %v1143, %v1144
        %s1146 = vtos %v1145
        %v1147 = vstv %s1146
        %v1148 = vmul.f32 %v1114, 0.01
        %v1149 = vadd.f32 %v1147, %v1148
        %v1150 = vmax.f32 %v1149, 1e-08
        %v1151 = vrcp.pop %v1150
        %v1152 = vmul.f32 %v1114, %v1151
        %v1153 = vmul.f32 %v1152, %v1037
        %v1154 = vmul.f32 %v1152, %v1040
        %v1155 = vmul.f32 %v1152, %v1045
        %v1156 = vmul.f32 %v1152, %v1048
        %v1157 = vsub.f32 %v934, %v1153
        %v1158 = vsub.f32 %v935, %v1154
        %v1159 = vsub.f32 %v936, %v1155
        %v1160 = vsub.f32 %v937, %v1156
        %v1161 = vpack.c.bf16 %v1158, %v1157
        %v1162 = vpack.c.bf16 %v1160, %v1159
        %1163 = vmatprep.subr.bf16.mxu0 0
        %1164 = vmatpush1.bf16.msra.mxu0 %v1161
        %1165 = vmatprep.subr.bf16.mxu0 0
        %1166 = vmatpush1.bf16.msra.mxu0 %v1162
        %1167 = vmatprep.subr.bf16.mxu0 0
        %1168 = vmatpush1.bf16.msra.mxu0 0
        %1169 = vmatprep.subr.bf16.mxu0 0
        %1170 = vmatpush1.bf16.msra.mxu0 0
        %1171 = vmatprep.subr.bf16.mxu0 0
        %1172 = vmatpush1.bf16.msra.mxu0 0
        %1173 = vmatprep.subr.bf16.mxu0 0
        %1174 = vmatpush1.bf16.msra.mxu0 0
        %1175 = vmatprep.subr.bf16.mxu0 0
        %1176 = vmatpush1.bf16.msra.mxu0 0
        %1177 = vmatprep.subr.bf16.mxu0 0
        %1178 = vmatpush1.bf16.msra.mxu0 0
        %1179 = vmatprep.subr.bf16.mxu0 0
        %1180 = vmatpush1.bf16.msra.mxu0 0
        %1181 = vmatprep.subr.bf16.mxu0 0
        %1182 = vmatpush1.bf16.msra.mxu0 0
        %1183 = vmatprep.subr.bf16.mxu0 0
        %1184 = vmatpush1.bf16.msra.mxu0 0
        %1185 = vmatprep.subr.bf16.mxu0 0
        %1186 = vmatpush1.bf16.msra.mxu0 0
        %1187 = vmatprep.subr.bf16.mxu0 0
        %1188 = vmatpush1.bf16.msra.mxu0 0
        %1189 = vmatprep.subr.bf16.mxu0 0
        %1190 = vmatpush1.bf16.msra.mxu0 0
        %1191 = vmatprep.subr.bf16.mxu0 0
        %1192 = vmatpush1.bf16.msra.mxu0 0
        %1193 = vmatprep.subr.bf16.mxu0 0
        %1194 = vmatpush1.bf16.msra.mxu0 0
        %1195 = vmatprep.mubr.bf16.mxu0 0
        %1196 = vmatmul.mubr.bf16.gmra.mrb[0].mxu0 %v715
        %v1197 = vpop.f32.mrb[0].mxu0
        %v1198 = vadd.f32 0.0, %v1197
        %v1199 = vpop.f32.mrb[0].mxu0
        %v1200 = vpop.f32.mrb[0].mxu0
        %v1201 = vadd.f32 0.0, %v1200
        %v1202 = vpop.f32.mrb[0].mxu0
        %1203 = vdwg.mxu0
        %v1204 = vsub.f32 %v1198, %v588
        %v1205 = vsub.f32 %v1201, %v589
        %1208 = vrot.lane.b32.xlu0 %v1204, 4
        %v1209 = vpop.permute.xlu0 %1208
        %1210 = vrot.lane.b32.xlu0 %v1205, 4
        %v1211 = vpop.permute.xlu0 %1210
        %v1214 = vmul.f32 %v599, %v1209
        %v1215 = vmul.f32 %v601, %v1211
        %v1216 = vpack.c.bf16 %v1215, %v1214
        %v1217 = vmul.f32 %v1157, 0.01
        %v1218 = vmul.f32 %v1158, 0.01
        %v1219 = vmul.f32 %v1159, 0.01
        %v1220 = vmul.f32 %v1160, 0.01
        %1222 = vrot.lane.b32.xlu0 %v1216, 124
        %v1223 = vpop.permute.xlu0 %1222
        %1225 = vmatprep.subr.bf16.mxu0 0
        %1226 = vmatpush1.bf16.msra.mxu0 %v1223
        %1227 = vmatprep.subr.bf16.mxu0 0
        %1228 = vmatpush1.bf16.msra.mxu0 0
        %1229 = vmatprep.subr.bf16.mxu0 0
        %1230 = vmatpush1.bf16.msra.mxu0 0
        %1231 = vmatprep.subr.bf16.mxu0 0
        %1232 = vmatpush1.bf16.msra.mxu0 0
        %1233 = vmatprep.subr.bf16.mxu0 0
        %1234 = vmatpush1.bf16.msra.mxu0 0
        %1235 = vmatprep.subr.bf16.mxu0 0
        %1236 = vmatpush1.bf16.msra.mxu0 0
        %1237 = vmatprep.subr.bf16.mxu0 0
        %1238 = vmatpush1.bf16.msra.mxu0 0
        %1239 = vmatprep.subr.bf16.mxu0 0
        %1240 = vmatpush1.bf16.msra.mxu0 0
        %1241 = vmatprep.subr.bf16.mxu0 0
        %1242 = vmatpush1.bf16.msra.mxu0 0
        %1243 = vmatprep.subr.bf16.mxu0 0
        %1244 = vmatpush1.bf16.msra.mxu0 0
        %1245 = vmatprep.subr.bf16.mxu0 0
        %1246 = vmatpush1.bf16.msra.mxu0 0
        %1247 = vmatprep.subr.bf16.mxu0 0
        %1248 = vmatpush1.bf16.msra.mxu0 0
        %1249 = vmatprep.subr.bf16.mxu0 0
        %1250 = vmatpush1.bf16.msra.mxu0 0
        %1251 = vmatprep.subr.bf16.mxu0 0
        %1252 = vmatpush1.bf16.msra.mxu0 0
        %1253 = vmatprep.subr.bf16.mxu0 0
        %1254 = vmatpush1.bf16.msra.mxu0 0
        %1255 = vmatprep.subr.bf16.mxu0 0
        %1256 = vmatpush1.bf16.msra.mxu0 0
        %1257 = vmatprep.mubr.bf16.mxu0 0
        %1258 = vmatmul.mubr.bf16.gmra.mrb[0].mxu0 %v654
        %v1259 = vpop.f32.mrb[0].mxu0
        %v1260 = vadd.f32 %v1217, %v1259
        %v1261 = vpop.f32.mrb[0].mxu0
        %v1262 = vpop.f32.mrb[0].mxu0
        %v1263 = vadd.f32 %v1218, %v1262
        %v1264 = vpop.f32.mrb[0].mxu0
        %1265 = vmatprep.mubr.bf16.mxu0 0
        %1266 = vmatmul.mubr.bf16.gmra.mrb[0].mxu0 %v657
        %v1267 = vpop.f32.mrb[0].mxu0
        %v1268 = vadd.f32 %v1219, %v1267
        %v1269 = vpop.f32.mrb[0].mxu0
        %v1270 = vpop.f32.mrb[0].mxu0
        %v1271 = vadd.f32 %v1220, %v1270
        %v1272 = vpop.f32.mrb[0].mxu0
        %1273 = vdwg.mxu0
        %v1274 = vpack.c.bf16 %v1263, %v1260
        %v1275 = vpack.c.bf16 %v1271, %v1268
        %1276 = vmatprep.subr.bf16.mxu0 0
        %1277 = vmatpush1.bf16.msra.mxu0 %v1274
        %1278 = vmatprep.subr.bf16.mxu0 0
        %1279 = vmatpush1.bf16.msra.mxu0 %v1275
        %1280 = vmatprep.subr.bf16.mxu0 0
        %1281 = vmatpush1.bf16.msra.mxu0 0
        %1282 = vmatprep.subr.bf16.mxu0 0
        %1283 = vmatpush1.bf16.msra.mxu0 0
        %1284 = vmatprep.subr.bf16.mxu0 0
        %1285 = vmatpush1.bf16.msra.mxu0 0
        %1286 = vmatprep.subr.bf16.mxu0 0
        %1287 = vmatpush1.bf16.msra.mxu0 0
        %1288 = vmatprep.subr.bf16.mxu0 0
        %1289 = vmatpush1.bf16.msra.mxu0 0
        %1290 = vmatprep.subr.bf16.mxu0 0
        %1291 = vmatpush1.bf16.msra.mxu0 0
        %1292 = vmatprep.subr.bf16.mxu0 0
        %1293 = vmatpush1.bf16.msra.mxu0 0
        %1294 = vmatprep.subr.bf16.mxu0 0
        %1295 = vmatpush1.bf16.msra.mxu0 0
        %1296 = vmatprep.subr.bf16.mxu0 0
        %1297 = vmatpush1.bf16.msra.mxu0 0
        %1298 = vmatprep.subr.bf16.mxu0 0
        %1299 = vmatpush1.bf16.msra.mxu0 0
        %1300 = vmatprep.subr.bf16.mxu0 0
        %1301 = vmatpush1.bf16.msra.mxu0 0
        %1302 = vmatprep.subr.bf16.mxu0 0
        %1303 = vmatpush1.bf16.msra.mxu0 0
        %1304 = vmatprep.subr.bf16.mxu0 0
        %1305 = vmatpush1.bf16.msra.mxu0 0
        %1306 = vmatprep.subr.bf16.mxu0 0
        %1307 = vmatpush1.bf16.msra.mxu0 0
        %1308 = vmatprep.mubr.bf16.mxu0 0
        %1309 = vmatmul.mubr.bf16.gmra.mrb[0].mxu0 %v715
        %v1310 = vpop.f32.mrb[0].mxu0
        %v1311 = vadd.f32 0.0, %v1310
        %v1312 = vpop.f32.mrb[0].mxu0
        %v1313 = vpop.f32.mrb[0].mxu0
        %v1314 = vadd.f32 0.0, %v1313
        %v1315 = vpop.f32.mrb[0].mxu0
        %1316 = vdwg.mxu0
        %v1317 = vmul.f32 %v1260, %v1260
        %v1318 = vmul.f32 %v1263, %v1263
        %v1319 = vmul.f32 %v1268, %v1268
        %v1320 = vmul.f32 %v1271, %v1271
        %v1321 = vsel %vm544, %v1317, 0.0
        %v1322 = vsel %vm544, %v1318, 0.0
        %v1323 = vadd.f32 %v1321, %v1322
        %v1324 = vsel %vm544, %v1319, 0.0
        %v1325 = vadd.f32 %v1323, %v1324
        %v1326 = vsel %vm544, %v1320, 0.0
        %v1327 = vadd.f32 %v1325, %v1326
        %1328 = vadd.xlane.f32.xlu0 %v1327
        %v1329 = vpop.xlane.xlu0 %1328
        %v1330 = vrot.slane %v1329, 4
        %v1331 = vadd.f32 %v1329, %v1330
        %v1332 = vrot.slane %v1331, 2
        %v1333 = vadd.f32 %v1331, %v1332
        %v1334 = vrot.slane %v1333, 1
        %v1335 = vadd.f32 %v1333, %v1334
        %s1336 = vtos %v1335
        %v1337 = vstv %s1336
        %1340 = vrot.lane.b32.xlu0 %v1311, 4
        %v1341 = vpop.permute.xlu0 %1340
        %1342 = vrot.lane.b32.xlu0 %v1314, 4
        %v1343 = vpop.permute.xlu0 %1342
        %v1346 = vmul.f32 %v599, %v1341
        %v1347 = vmul.f32 %v601, %v1343
        %v1348 = vmul.f32 %v1346, %v1341
        %v1349 = vmul.f32 %v1347, %v1343
        %1352 = vrot.lane.b32.xlu0 %v1348, 124
        %v1353 = vpop.permute.xlu0 %1352
        %1354 = vrot.lane.b32.xlu0 %v1349, 124
        %v1355 = vpop.permute.xlu0 %1354
        %v1358 = vsel %vm544, %v1353, 0.0
        %v1359 = vsel %vm544, %v1355, 0.0
        %v1360 = vadd.f32 %v1358, %v1359
        %1361 = vadd.xlane.f32.xlu0 %v1360
        %v1362 = vpop.xlane.xlu0 %1361
        %v1363 = vrot.slane %v1362, 4
        %v1364 = vadd.f32 %v1362, %v1363
        %v1365 = vrot.slane %v1364, 2
        %v1366 = vadd.f32 %v1364, %v1365
        %v1367 = vrot.slane %v1366, 1
        %v1368 = vadd.f32 %v1366, %v1367
        %s1369 = vtos %v1368
        %v1370 = vstv %s1369
        %v1371 = vmul.f32 %v1337, 0.01
        %v1372 = vadd.f32 %v1370, %v1371
        %v1373 = vmax.f32 %v1372, 1e-08
        %v1374 = vrcp.pop %v1373
        %v1375 = vmul.f32 %v1337, %v1374
        %v1376 = vmul.f32 %v1375, %v1260
        %v1377 = vmul.f32 %v1375, %v1263
        %v1378 = vmul.f32 %v1375, %v1268
        %v1379 = vmul.f32 %v1375, %v1271
        %v1380 = vsub.f32 %v1157, %v1376
        %v1381 = vsub.f32 %v1158, %v1377
        %v1382 = vsub.f32 %v1159, %v1378
        %v1383 = vsub.f32 %v1160, %v1379
        %1384 = vst.msk [vmem:[#allocation2] sm:$0xff] %vm544, %v1380
        %1385 = vst.msk [vmem:[#allocation2 + $0x8] sm:$0xff] %vm544, %v1381
        %1386 = vst.msk [vmem:[#allocation2 + $0x10] sm:$0xff] %vm544, %v1382
        %1387 = vst.msk [vmem:[#allocation2 + $0x18] sm:$0xff] %vm544, %v1383
      $region68: #{seg_dolf_tracker_forward.5} parent=63 // pred_fallthru
        _
      %v1388 = vld [vmem:[#allocation2] sm:$0xff]
      %v1389 = vld [vmem:[#allocation2 + $0x8] sm:$0xff]
      %v1390 = vld [vmem:[#allocation2 + $0x10] sm:$0xff]
      %v1391 = vld [vmem:[#allocation2 + $0x18] sm:$0xff]
      %v1392 = vld [vmem:[%s505] sm:$0xf]
      %v1393 = vld [vmem:[%s505 + $0x4] sm:$0xf]
      %v1394 = vpack.c.bf16 %v1389, %v1388
      %v1395 = vpack.c.bf16 %v1391, %v1390
      %v1398 = vunpack.c.l.b16 %v1392
      %v1399 = vunpack.c.l.b16 %v1393
      %v1400 = vpack.c.b16 %v1399, %v1398
      %vm1401 = vcmask 261120
      %v1403 = vsel %vm1401, %v1400, 0
      %1405 = vmatprep.subr.bf16.mxu0 0
      %1406 = vmatpush1.bf16.msra.mxu0 %v1394
      %1407 = vmatprep.subr.bf16.mxu0 0
      %1408 = vmatpush1.bf16.msra.mxu0 %v1395
      %1409 = vmatprep.subr.bf16.mxu0 0
      %1410 = vmatpush1.bf16.msra.mxu0 0
      %1411 = vmatprep.subr.bf16.mxu0 0
      %1412 = vmatpush1.bf16.msra.mxu0 0
      %1413 = vmatprep.subr.bf16.mxu0 0
      %1414 = vmatpush1.bf16.msra.mxu0 0
      %1415 = vmatprep.subr.bf16.mxu0 0
      %1416 = vmatpush1.bf16.msra.mxu0 0
      %1417 = vmatprep.subr.bf16.mxu0 0
      %1418 = vmatpush1.bf16.msra.mxu0 0
      %1419 = vmatprep.subr.bf16.mxu0 0
      %1420 = vmatpush1.bf16.msra.mxu0 0
      %1421 = vmatprep.subr.bf16.mxu0 0
      %1422 = vmatpush1.bf16.msra.mxu0 0
      %1423 = vmatprep.subr.bf16.mxu0 0
      %1424 = vmatpush1.bf16.msra.mxu0 0
      %1425 = vmatprep.subr.bf16.mxu0 0
      %1426 = vmatpush1.bf16.msra.mxu0 0
      %1427 = vmatprep.subr.bf16.mxu0 0
      %1428 = vmatpush1.bf16.msra.mxu0 0
      %1429 = vmatprep.subr.bf16.mxu0 0
      %1430 = vmatpush1.bf16.msra.mxu0 0
      %1431 = vmatprep.subr.bf16.mxu0 0
      %1432 = vmatpush1.bf16.msra.mxu0 0
      %1433 = vmatprep.subr.bf16.mxu0 0
      %1434 = vmatpush1.bf16.msra.mxu0 0
      %1435 = vmatprep.subr.bf16.mxu0 0
      %1436 = vmatpush1.bf16.msra.mxu0 0
      %1437 = vmatprep.mubr.bf16.mxu0 0
      %1438 = vmatmul.mubr.bf16.gmra.mrb[0].mxu0 %v1403
      %v1439 = vpop.f32.mrb[0].mxu0
      %v1440 = vadd.f32 0.0, %v1439
      %v1441 = vpop.f32.mrb[0].mxu0
      %v1442 = vpop.f32.mrb[0].mxu0
      %v1443 = vadd.f32 0.0, %v1442
      %v1444 = vpop.f32.mrb[0].mxu0
      %1445 = vdwg.mxu0
      %v1446 = vpack.c.bf16 %v1443, %v1440
      %v1447 = vld [vmem:[%s5] sm:$0xf]
      %v1448 = vpack.c.bf16 %v1447, %v1447
      %v1449 = vld [vmem:[%s514] sm:$0xf]
      %v1450 = vld [vmem:[%s514 + $0x4] sm:$0xf]
      %v1451 = vld [vmem:[%s6] sm:$0xff]
      %v1452 = vld [vmem:[%s6 + $0x8] sm:$0xff]
      %v1453 = vld [vmem:[%s6 + $0x10] sm:$0xff]
      %v1454 = vld [vmem:[%s6 + $0x18] sm:$0xff]
      %v1455 = vpack.c.bf16 %v1452, %v1451
      %v1456 = vpack.c.bf16 %v1454, %v1453
      %v1459 = vunpack.c.l.b16 %v1449
      %v1460 = vunpack.c.l.b16 %v1450
      %v1461 = vpack.c.b16 %v1460, %v1459
      %v1463 = vsel %vm1401, %v1461, 0
      %1465 = vmatprep.subr.bf16.mxu0 0
      %1466 = vmatpush1.bf16.msra.mxu0 %v1455
      %1467 = vmatprep.subr.bf16.mxu0 0
      %1468 = vmatpush1.bf16.msra.mxu0 %v1456
      %1469 = vmatprep.subr.bf16.mxu0 0
      %1470 = vmatpush1.bf16.msra.mxu0 0
      %1471 = vmatprep.subr.bf16.mxu0 0
      %1472 = vmatpush1.bf16.msra.mxu0 0
      %1473 = vmatprep.subr.bf16.mxu0 0
      %1474 = vmatpush1.bf16.msra.mxu0 0
      %1475 = vmatprep.subr.bf16.mxu0 0
      %1476 = vmatpush1.bf16.msra.mxu0 0
      %1477 = vmatprep.subr.bf16.mxu0 0
      %1478 = vmatpush1.bf16.msra.mxu0 0
      %1479 = vmatprep.subr.bf16.mxu0 0
      %1480 = vmatpush1.bf16.msra.mxu0 0
      %1481 = vmatprep.subr.bf16.mxu0 0
      %1482 = vmatpush1.bf16.msra.mxu0 0
      %1483 = vmatprep.subr.bf16.mxu0 0
      %1484 = vmatpush1.bf16.msra.mxu0 0
      %1485 = vmatprep.subr.bf16.mxu0 0
      %1486 = vmatpush1.bf16.msra.mxu0 0
      %1487 = vmatprep.subr.bf16.mxu0 0
      %1488 = vmatpush1.bf16.msra.mxu0 0
      %1489 = vmatprep.subr.bf16.mxu0 0
      %1490 = vmatpush1.bf16.msra.mxu0 0
      %1491 = vmatprep.subr.bf16.mxu0 0
      %1492 = vmatpush1.bf16.msra.mxu0 0
      %1493 = vmatprep.subr.bf16.mxu0 0
      %1494 = vmatpush1.bf16.msra.mxu0 0
      %1495 = vmatprep.subr.bf16.mxu0 0
      %1496 = vmatpush1.bf16.msra.mxu0 0
      %1497 = vmatprep.mubr.bf16.mxu0 0
      %1498 = vmatmul.mubr.bf16.gmra.mrb[0].mxu0 %v1463
      %v1499 = vpop.f32.mrb[0].mxu0
      %v1500 = vadd.f32 0.0, %v1499
      %v1501 = vpop.f32.mrb[0].mxu0
      %v1502 = vpop.f32.mrb[0].mxu0
      %v1503 = vadd.f32 0.0, %v1502
      %v1504 = vpop.f32.mrb[0].mxu0
      %1505 = vdwg.mxu0
      %vm1506 = vcmask 31744
      %v1508 = vsel %vm1506, %v1446, 0
      %vm1510 = vcmask 1041408
      %v1512 = vsel %vm1510, %v1448, 0
      %1514 = vmatprep.subr.bf16.mxu0 0
      %1515 = vmatpush1.bf16.msra.mxu0 %v1512
      %1516 = vmatprep.subr.bf16.mxu0 0
      %1517 = vmatpush1.bf16.msra.mxu0 0
      %1518 = vmatprep.subr.bf16.mxu0 0
      %1519 = vmatpush1.bf16.msra.mxu0 0
      %1520 = vmatprep.subr.bf16.mxu0 0
      %1521 = vmatpush1.bf16.msra.mxu0 0
      %1522 = vmatprep.subr.bf16.mxu0 0
      %1523 = vmatpush1.bf16.msra.mxu0 0
      %1524 = vmatprep.subr.bf16.mxu0 0
      %1525 = vmatpush1.bf16.msra.mxu0 0
      %1526 = vmatprep.subr.bf16.mxu0 0
      %1527 = vmatpush1.bf16.msra.mxu0 0
      %1528 = vmatprep.subr.bf16.mxu0 0
      %1529 = vmatpush1.bf16.msra.mxu0 0
      %1530 = vmatprep.subr.bf16.mxu0 0
      %1531 = vmatpush1.bf16.msra.mxu0 0
      %1532 = vmatprep.subr.bf16.mxu0 0
      %1533 = vmatpush1.bf16.msra.mxu0 0
      %1534 = vmatprep.subr.bf16.mxu0 0
      %1535 = vmatpush1.bf16.msra.mxu0 0
      %1536 = vmatprep.subr.bf16.mxu0 0
      %1537 = vmatpush1.bf16.msra.mxu0 0
      %1538 = vmatprep.subr.bf16.mxu0 0
      %1539 = vmatpush1.bf16.msra.mxu0 0
      %1540 = vmatprep.subr.bf16.mxu0 0
      %1541 = vmatpush1.bf16.msra.mxu0 0
      %1542 = vmatprep.subr.bf16.mxu0 0
      %1543 = vmatpush1.bf16.msra.mxu0 0
      %1544 = vmatprep.subr.bf16.mxu0 0
      %1545 = vmatpush1.bf16.msra.mxu0 0
      %1546 = vmatprep.mubr.bf16.mxu0 0
      %1547 = vmatmul.mubr.bf16.gmra.mrb[0].mxu0 %v1508
      %v1548 = vpop.f32.mrb[0].mxu0
      %v1549 = vadd.f32 %v1500, %v1548
      %v1550 = vpop.f32.mrb[0].mxu0
      %v1551 = vpop.f32.mrb[0].mxu0
      %v1552 = vadd.f32 %v1503, %v1551
      %v1553 = vpop.f32.mrb[0].mxu0
      %1554 = vdwg.mxu0
      %v1555 = vld [vmem:[%s523] sm:$0xf]
      %v1556 = vld [vmem:[%s523 + $0x4] sm:$0xf]
      %v1557 = vld [vmem:[%s7] sm:$0xff]
      %v1558 = vld [vmem:[%s7 + $0x8] sm:$0xff]
      %v1559 = vpack.c.bf16 %v1558, %v1557
      %v1562 = vunpack.c.l.b16 %v1555
      %v1563 = vunpack.c.l.b16 %v1556
      %v1564 = vpack.c.b16 %v1563, %v1562
      %vm1565 = vcmask 130048
      %v1567 = vsel %vm1565, %v1564, 0
      %1569 = vmatprep.subr.bf16.mxu0 0
      %1570 = vmatpush1.bf16.msra.mxu0 %v1559
      %1571 = vmatprep.subr.bf16.mxu0 0
      %1572 = vmatpush1.bf16.msra.mxu0 0
      %1573 = vmatprep.subr.bf16.mxu0 0
      %1574 = vmatpush1.bf16.msra.mxu0 0
      %1575 = vmatprep.subr.bf16.mxu0 0
      %1576 = vmatpush1.bf16.msra.mxu0 0
      %1577 = vmatprep.subr.bf16.mxu0 0
      %1578 = vmatpush1.bf16.msra.mxu0 0
      %1579 = vmatprep.subr.bf16.mxu0 0
      %1580 = vmatpush1.bf16.msra.mxu0 0
      %1581 = vmatprep.subr.bf16.mxu0 0
      %1582 = vmatpush1.bf16.msra.mxu0 0
      %1583 = vmatprep.subr.bf16.mxu0 0
      %1584 = vmatpush1.bf16.msra.mxu0 0
      %1585 = vmatprep.subr.bf16.mxu0 0
      %1586 = vmatpush1.bf16.msra.mxu0 0
      %1587 = vmatprep.subr.bf16.mxu0 0
      %1588 = vmatpush1.bf16.msra.mxu0 0
      %1589 = vmatprep.subr.bf16.mxu0 0
      %1590 = vmatpush1.bf16.msra.mxu0 0
      %1591 = vmatprep.subr.bf16.mxu0 0
      %1592 = vmatpush1.bf16.msra.mxu0 0
      %1593 = vmatprep.subr.bf16.mxu0 0
      %1594 = vmatpush1.bf16.msra.mxu0 0
      %1595 = vmatprep.subr.bf16.mxu0 0
      %1596 = vmatpush1.bf16.msra.mxu0 0
      %1597 = vmatprep.subr.bf16.mxu0 0
      %1598 = vmatpush1.bf16.msra.mxu0 0
      %1599 = vmatprep.subr.bf16.mxu0 0
      %1600 = vmatpush1.bf16.msra.mxu0 0
      %1601 = vmatprep.mubr.bf16.mxu0 0
      %1602 = vmatmul.mubr.bf16.gmra.mrb[0].mxu0 %v1567
      %v1603 = vpop.f32.mrb[0].mxu0
      %v1604 = vadd.f32 0.0, %v1603
      %v1605 = vpop.f32.mrb[0].mxu0
      %v1606 = vpop.f32.mrb[0].mxu0
      %v1607 = vadd.f32 0.0, %v1606
      %v1608 = vpop.f32.mrb[0].mxu0
      %1609 = vdwg.mxu0
      %v1610 = vadd.f32 %v1549, %v1604
      %v1611 = vadd.f32 %v1552, %v1607
      %v1612 = vld [vmem:[#allocation6] sm:$0x1]
      %v1614 = vlaneseq
      %v1615 = vshrl.u32 %v1614, 7
      %v1616 = vsub.s32 0, %v1615
      %v1617 = vrot.slane %v1612, %v1616
      %v1619 = vadd.f32 %v1610, %v1617
      %v1620 = vadd.f32 %v1611, %v1617
      %1622 = vset.pattern.permute.xlu0 0
      %1623 = vperm.xlu0 %1622, %v1619
      %v1624 = vpop.permute.xlu0 %1623
      %1627 = vset.pattern.permute.xlu0 0
      %1628 = vperm.xlu0 %1627, %v1620
      %v1629 = vpop.permute.xlu0 %1628
      %1631 = vst.msk [vmem:[%s532] sm:$0xff] %vm1565, %v1624
      %1632 = vst.msk [vmem:[%s532 + $0x8] sm:$0xff] %vm1565, %v1629
      %v1633 = vxor.u32 %v1619, 2147483648
      %v1634 = vxor.u32 %v1620, 2147483648
      %v1635 = vmul.f32 %v1633, 1.442695
      %v1636 = vpow.pop %v1635
      %v1637 = vmul.f32 %v1634, 1.442695
      %v1638 = vpow.pop %v1637
      %v1639 = vadd.f32 %v1636, 1.0
      %v1640 = vadd.f32 %v1638, 1.0
      %v1641 = vrcp.pop %v1639
      %v1642 = vmul.f32 1.0, %v1641
      %v1643 = vrcp.pop %v1640
      %v1644 = vmul.f32 1.0, %v1643
      %s1645 = smul.u32 %s29, 16
      %s1646 = sadd.s32 %s1645, 16
      %s1648 = sshra.s32 %s1646, 4
      %s1649 = sand.u32 %s1646, 15
      %s1650 = smul.addr %s1648, 8
      %s1651 = scalar_lea.vmem [#allocation3], %s1650
      %1652 = vst.msk [vmem:[%s1651] sm:$0xff] %vm1401, %v1400
      %1654 = vset.pattern.permute.xlu0 0
      %1655 = vperm.xlu0 %1654, %v1642
      %v1656 = vpop.permute.xlu0 %1655
      %1659 = vset.pattern.permute.xlu0 0
      %1660 = vperm.xlu0 %1659, %v1644
      %v1661 = vpop.permute.xlu0 %1660
      %v1664 = vlaneseq
      %v1665 = vshrl.u32 %v1664, 7
      %v1666 = vsub.s32 0, %v1665
      %v1667 = vrot.slane %v534, %v1666
      %v1669 = vmul.f32 %v1656, %v1667
      %v1670 = vmul.f32 %v1661, %v1667
      %v1672 = vlaneseq
      %v1673 = vshrl.u32 %v1672, 7
      %v1674 = vsub.s32 0, %v1673
      %v1675 = vrot.slane %v535, %v1674
      %v1677 = vadd.f32 %v1669, %v1675
      %v1678 = vadd.f32 %v1670, %v1675
      %v1679 = vmax.f32 %v1677, 0.0
      %v1680 = vmax.f32 %v1678, 0.0
      %s1681 = scalar_lea.vmem [#allocation4], %s1646
      %1682 = vst.msk [vmem:[%s1681] sm:$0xff] %vm1506, %v1679
      %1683 = vst.msk [vmem:[%s1681 + $0x8] sm:$0xff] %vm1506, %v1680
      %v1684 = vxor.u32 %v1677, 2147483648
      %v1685 = vxor.u32 %v1678, 2147483648
      %v1686 = vmul.f32 %v1684, 1.442695
      %v1687 = vpow.pop %v1686
      %v1688 = vmul.f32 %v1685, 1.442695
      %v1689 = vpow.pop %v1688
      %v1690 = vadd.f32 %v1687, 1.0
      %v1691 = vadd.f32 %v1689, 1.0
      %v1692 = vrcp.pop %v1690
      %v1693 = vmul.f32 1.0, %v1692
      %v1694 = vrcp.pop %v1691
      %v1695 = vmul.f32 1.0, %v1694
      %1698 = vrot.lane.b32.xlu0 %v1693, 124
      %v1699 = vpop.permute.xlu0 %1698
      %1700 = vrot.lane.b32.xlu0 %v1695, 124
      %v1701 = vpop.permute.xlu0 %1700
      %s1704 = scalar_lea.vmem [#allocation5], %s1646
      %1705 = vst.msk [vmem:[%s1704] sm:$0xff] %vm1506, %v1699
      %1706 = vst.msk [vmem:[%s1704 + $0x8] sm:$0xff] %vm1506, %v1701
      %p1707 = scmp.lt.s32.totalorder %s29, 1
      // Predicated region
      $region69: #{seg_dolf_tracker_forward.5} parent=63 // pred_check
        %p1708 = pneg %p1707
      $region70: #{seg_dolf_tracker_forward.5} parent=63 // pred_check_branch
        %1710 = sbr.rel (%p1708) target = $region72
      $region71: #{seg_dolf_tracker_forward.5} parent=63 // pred_region
        %v1711 = vld [vmem:[#allocation3] sm:$0xff]
        %v1712 = vld [vmem:[#allocation3 + $0x8] sm:$0xff]
        %v1713 = vld [vmem:[#allocation3 + $0x10] sm:$0xff]
        %v1714 = vld [vmem:[#allocation4] sm:$0xff]
        %v1715 = vld [vmem:[#allocation4 + $0x8] sm:$0xff]
        %v1716 = vld [vmem:[#allocation4 + $0x10] sm:$0xff]
        %v1717 = vld [vmem:[#allocation4 + $0x18] sm:$0xff]
        %v1718 = vld [vmem:[#allocation4 + $0x20] sm:$0xff]
        %v1719 = vld [vmem:[#allocation4 + $0x28] sm:$0xff]
        %v1720 = vld [vmem:[#allocation5] sm:$0xff]
        %v1721 = vld [vmem:[#allocation5 + $0x8] sm:$0xff]
        %v1722 = vld [vmem:[#allocation5 + $0x10] sm:$0xff]
        %v1723 = vld [vmem:[#allocation5 + $0x18] sm:$0xff]
        %v1724 = vld [vmem:[#allocation5 + $0x20] sm:$0xff]
        %v1725 = vld [vmem:[#allocation5 + $0x28] sm:$0xff]
        %v1727 = vsel %vm1401, %v1711, 0
        %v1730 = vsel %vm1401, %v1712, 0
        %v1733 = vsel %vm1401, %v1713, 0
        %1735 = vmatprep.subr.bf16.mxu0 0
        %1736 = vmatpush1.bf16.msra.mxu0 %v1394
        %1737 = vmatprep.subr.bf16.mxu0 0
        %1738 = vmatpush1.bf16.msra.mxu0 %v1395
        %1739 = vmatprep.subr.bf16.mxu0 0
        %1740 = vmatpush1.bf16.msra.mxu0 0
        %1741 = vmatprep.subr.bf16.mxu0 0
        %1742 = vmatpush1.bf16.msra.mxu0 0
        %1743 = vmatprep.subr.bf16.mxu0 0
        %1744 = vmatpush1.bf16.msra.mxu0 0
        %1745 = vmatprep.subr.bf16.mxu0 0
        %1746 = vmatpush1.bf16.msra.mxu0 0
        %1747 = vmatprep.subr.bf16.mxu0 0
        %1748 = vmatpush1.bf16.msra.mxu0 0
        %1749 = vmatprep.subr.bf16.mxu0 0
        %1750 = vmatpush1.bf16.msra.mxu0 0
        %1751 = vmatprep.subr.bf16.mxu0 0
        %1752 = vmatpush1.bf16.msra.mxu0 0
        %1753 = vmatprep.subr.bf16.mxu0 0
        %1754 = vmatpush1.bf16.msra.mxu0 0
        %1755 = vmatprep.subr.bf16.mxu0 0
        %1756 = vmatpush1.bf16.msra.mxu0 0
        %1757 = vmatprep.subr.bf16.mxu0 0
        %1758 = vmatpush1.bf16.msra.mxu0 0
        %1759 = vmatprep.subr.bf16.mxu0 0
        %1760 = vmatpush1.bf16.msra.mxu0 0
        %1761 = vmatprep.subr.bf16.mxu0 0
        %1762 = vmatpush1.bf16.msra.mxu0 0
        %1763 = vmatprep.subr.bf16.mxu0 0
        %1764 = vmatpush1.bf16.msra.mxu0 0
        %1765 = vmatprep.subr.bf16.mxu0 0
        %1766 = vmatpush1.bf16.msra.mxu0 0
        %1767 = vmatprep.mubr.bf16.mxu0 0
        %1768 = vmatmul.mubr.bf16.gmra.mrb[0].mxu0 %v1727
        %v1769 = vpop.f32.mrb[0].mxu0
        %v1770 = vadd.f32 0.0, %v1769
        %v1771 = vpop.f32.mrb[0].mxu0
        %v1772 = vpop.f32.mrb[0].mxu0
        %v1773 = vadd.f32 0.0, %v1772
        %v1774 = vpop.f32.mrb[0].mxu0
        %1775 = vmatprep.mubr.bf16.mxu0 0
        %1776 = vmatmul.mubr.bf16.gmra.mrb[0].mxu0 %v1730
        %v1777 = vpop.f32.mrb[0].mxu0
        %v1778 = vadd.f32 0.0, %v1777
        %v1779 = vpop.f32.mrb[0].mxu0
        %v1780 = vpop.f32.mrb[0].mxu0
        %v1781 = vadd.f32 0.0, %v1780
        %v1782 = vpop.f32.mrb[0].mxu0
        %1783 = vmatprep.mubr.bf16.mxu0 0
        %1784 = vmatmul.mubr.bf16.gmra.mrb[0].mxu0 %v1733
        %v1785 = vpop.f32.mrb[0].mxu0
        %v1786 = vadd.f32 0.0, %v1785
        %v1787 = vpop.f32.mrb[0].mxu0
        %v1788 = vpop.f32.mrb[0].mxu0
        %v1789 = vadd.f32 0.0, %v1788
        %v1790 = vpop.f32.mrb[0].mxu0
        %1791 = vdwg.mxu0
        %v1792 = vsub.f32 %v1770, %v1714
        %v1793 = vsub.f32 %v1773, %v1715
        %v1794 = vsub.f32 %v1778, %v1716
        %v1795 = vsub.f32 %v1781, %v1717
        %v1796 = vsub.f32 %v1786, %v1718
        %v1797 = vsub.f32 %v1789, %v1719
        %v1798 = vmul.f32 %v1720, %v1792
        %v1799 = vmul.f32 %v1721, %v1793
        %v1800 = vmul.f32 %v1722, %v1794
        %v1801 = vmul.f32 %v1723, %v1795
        %v1802 = vmul.f32 %v1724, %v1796
        %v1803 = vmul.f32 %v1725, %v1797
        %v1804 = vpack.c.bf16 %v1799, %v1798
        %v1805 = vpack.c.bf16 %v1801, %v1800
        %v1806 = vpack.c.bf16 %v1803, %v1802
        %v1807 = vmul.f32 %v1388, 0.01
        %v1808 = vmul.f32 %v1389, 0.01
        %v1809 = vmul.f32 %v1390, 0.01
        %v1810 = vmul.f32 %v1391, 0.01
        %1811 = vxpose.xlu0.c.b16.start [1/8] %v1711, 128
        %1812 = vxpose.xlu0.c.b16.cont [2/8] %v1712, 128
        %1813 = vxpose.xlu0.c.b16.cont [3/8] %v1713, 128
        %1814 = vxpose.xlu0.c.b16.cont [4/8] 0, 128
        %1815 = vxpose.xlu0.c.b16.cont [5/8] 0, 128
        %1816 = vxpose.xlu0.c.b16.cont [6/8] 0, 128
        %1817 = vxpose.xlu0.c.b16.cont [7/8] 0, 128
        %1818 = vxpose.xlu0.c.b16.end [8/8] 0, 128
        %v1819 = vpop.trf.xlu0
        %v1820 = vpop.trf.xlu0
        %v1821 = vpop.trf.xlu0
        %v1822 = vpop.trf.xlu0
        %v1823 = vpop.trf.xlu0
        %v1824 = vpop.trf.xlu0
        %v1825 = vpop.trf.xlu0
        %v1826 = vpop.trf.xlu0
        %vm1827 = vcmask 392192
        %v1829 = vsel %vm1827, %v1819, 0
        %v1832 = vsel %vm1827, %v1820, 0
        %1834 = vmatprep.subr.bf16.mxu0 0
        %1835 = vmatpush1.bf16.msra.mxu0 %v1804
        %1836 = vmatprep.subr.bf16.mxu0 0
        %1837 = vmatpush1.bf16.msra.mxu0 %v1805
        %1838 = vmatprep.subr.bf16.mxu0 0
        %1839 = vmatpush1.bf16.msra.mxu0 %v1806
        %1840 = vmatprep.subr.bf16.mxu0 0
        %1841 = vmatpush1.bf16.msra.mxu0 0
        %1842 = vmatprep.subr.bf16.mxu0 0
        %1843 = vmatpush1.bf16.msra.mxu0 0
        %1844 = vmatprep.subr.bf16.mxu0 0
        %1845 = vmatpush1.bf16.msra.mxu0 0
        %1846 = vmatprep.subr.bf16.mxu0 0
        %1847 = vmatpush1.bf16.msra.mxu0 0
        %1848 = vmatprep.subr.bf16.mxu0 0
        %1849 = vmatpush1.bf16.msra.mxu0 0
        %1850 = vmatprep.subr.bf16.mxu0 0
        %1851 = vmatpush1.bf16.msra.mxu0 0
        %1852 = vmatprep.subr.bf16.mxu0 0
        %1853 = vmatpush1.bf16.msra.mxu0 0
        %1854 = vmatprep.subr.bf16.mxu0 0
        %1855 = vmatpush1.bf16.msra.mxu0 0
        %1856 = vmatprep.subr.bf16.mxu0 0
        %1857 = vmatpush1.bf16.msra.mxu0 0
        %1858 = vmatprep.subr.bf16.mxu0 0
        %1859 = vmatpush1.bf16.msra.mxu0 0
        %1860 = vmatprep.subr.bf16.mxu0 0
        %1861 = vmatpush1.bf16.msra.mxu0 0
        %1862 = vmatprep.subr.bf16.mxu0 0
        %1863 = vmatpush1.bf16.msra.mxu0 0
        %1864 = vmatprep.subr.bf16.mxu0 0
        %1865 = vmatpush1.bf16.msra.mxu0 0
        %1866 = vmatprep.mubr.bf16.mxu0 0
        %1867 = vmatmul.mubr.bf16.gmra.mrb[0].mxu0 %v1829
        %v1868 = vpop.f32.mrb[0].mxu0
        %v1869 = vadd.f32 %v1807, %v1868
        %v1870 = vpop.f32.mrb[0].mxu0
        %v1871 = vpop.f32.mrb[0].mxu0
        %v1872 = vadd.f32 %v1808, %v1871
        %v1873 = vpop.f32.mrb[0].mxu0
        %1874 = vmatprep.mubr.bf16.mxu0 0
        %1875 = vmatmul.mubr.bf16.gmra.mrb[0].mxu0 %v1832
        %v1876 = vpop.f32.mrb[0].mxu0
        %v1877 = vadd.f32 %v1809, %v1876
        %v1878 = vpop.f32.mrb[0].mxu0
        %v1879 = vpop.f32.mrb[0].mxu0
        %v1880 = vadd.f32 %v1810, %v1879
        %v1881 = vpop.f32.mrb[0].mxu0
        %1882 = vdwg.mxu0
        %v1883 = vpack.c.bf16 %v1872, %v1869
        %v1884 = vpack.c.bf16 %v1880, %v1877
        %1885 = vmatprep.subr.bf16.mxu0 0
        %1886 = vmatpush1.bf16.msra.mxu0 %v1883
        %1887 = vmatprep.subr.bf16.mxu0 0
        %1888 = vmatpush1.bf16.msra.mxu0 %v1884
        %1889 = vmatprep.subr.bf16.mxu0 0
        %1890 = vmatpush1.bf16.msra.mxu0 0
        %1891 = vmatprep.subr.bf16.mxu0 0
        %1892 = vmatpush1.bf16.msra.mxu0 0
        %1893 = vmatprep.subr.bf16.mxu0 0
        %1894 = vmatpush1.bf16.msra.mxu0 0
        %1895 = vmatprep.subr.bf16.mxu0 0
        %1896 = vmatpush1.bf16.msra.mxu0 0
        %1897 = vmatprep.subr.bf16.mxu0 0
        %1898 = vmatpush1.bf16.msra.mxu0 0
        %1899 = vmatprep.subr.bf16.mxu0 0
        %1900 = vmatpush1.bf16.msra.mxu0 0
        %1901 = vmatprep.subr.bf16.mxu0 0
        %1902 = vmatpush1.bf16.msra.mxu0 0
        %1903 = vmatprep.subr.bf16.mxu0 0
        %1904 = vmatpush1.bf16.msra.mxu0 0
        %1905 = vmatprep.subr.bf16.mxu0 0
        %1906 = vmatpush1.bf16.msra.mxu0 0
        %1907 = vmatprep.subr.bf16.mxu0 0
        %1908 = vmatpush1.bf16.msra.mxu0 0
        %1909 = vmatprep.subr.bf16.mxu0 0
        %1910 = vmatpush1.bf16.msra.mxu0 0
        %1911 = vmatprep.subr.bf16.mxu0 0
        %1912 = vmatpush1.bf16.msra.mxu0 0
        %1913 = vmatprep.subr.bf16.mxu0 0
        %1914 = vmatpush1.bf16.msra.mxu0 0
        %1915 = vmatprep.subr.bf16.mxu0 0
        %1916 = vmatpush1.bf16.msra.mxu0 0
        %1917 = vmatprep.mubr.bf16.mxu0 0
        %1918 = vmatmul.mubr.bf16.gmra.mrb[0].mxu0 %v1727
        %v1919 = vpop.f32.mrb[0].mxu0
        %v1920 = vadd.f32 0.0, %v1919
        %v1921 = vpop.f32.mrb[0].mxu0
        %v1922 = vpop.f32.mrb[0].mxu0
        %v1923 = vadd.f32 0.0, %v1922
        %v1924 = vpop.f32.mrb[0].mxu0
        %1925 = vmatprep.mubr.bf16.mxu0 0
        %1926 = vmatmul.mubr.bf16.gmra.mrb[0].mxu0 %v1730
        %v1927 = vpop.f32.mrb[0].mxu0
        %v1928 = vadd.f32 0.0, %v1927
        %v1929 = vpop.f32.mrb[0].mxu0
        %v1930 = vpop.f32.mrb[0].mxu0
        %v1931 = vadd.f32 0.0, %v1930
        %v1932 = vpop.f32.mrb[0].mxu0
        %1933 = vmatprep.mubr.bf16.mxu0 0
        %1934 = vmatmul.mubr.bf16.gmra.mrb[0].mxu0 %v1733
        %v1935 = vpop.f32.mrb[0].mxu0
        %v1936 = vadd.f32 0.0, %v1935
        %v1937 = vpop.f32.mrb[0].mxu0
        %v1938 = vpop.f32.mrb[0].mxu0
        %v1939 = vadd.f32 0.0, %v1938
        %v1940 = vpop.f32.mrb[0].mxu0
        %1941 = vdwg.mxu0
        %v1942 = vmul.f32 %v1869, %v1869
        %v1943 = vmul.f32 %v1872, %v1872
        %v1944 = vmul.f32 %v1877, %v1877
        %v1945 = vmul.f32 %v1880, %v1880
        %v1946 = vsel %vm1506, %v1942, 0.0
        %v1947 = vsel %vm1506, %v1943, 0.0
        %v1948 = vadd.f32 %v1946, %v1947
        %v1949 = vsel %vm1506, %v1944, 0.0
        %v1950 = vadd.f32 %v1948, %v1949
        %v1951 = vsel %vm1506, %v1945, 0.0
        %v1952 = vadd.f32 %v1950, %v1951
        %1953 = vadd.xlane.f32.xlu0 %v1952
        %v1954 = vpop.xlane.xlu0 %1953
        %v1955 = vrot.slane %v1954, 4
        %v1956 = vadd.f32 %v1954, %v1955
        %v1957 = vrot.slane %v1956, 2
        %v1958 = vadd.f32 %v1956, %v1957
        %v1959 = vrot.slane %v1958, 1
        %v1960 = vadd.f32 %v1958, %v1959
        %s1961 = vtos %v1960
        %v1962 = vstv %s1961
        %v1963 = vmul.f32 %v1720, %v1920
        %v1964 = vmul.f32 %v1721, %v1923
        %v1965 = vmul.f32 %v1722, %v1928
        %v1966 = vmul.f32 %v1723, %v1931
        %v1967 = vmul.f32 %v1724, %v1936
        %v1968 = vmul.f32 %v1725, %v1939
        %v1969 = vmul.f32 %v1963, %v1920
        %v1970 = vmul.f32 %v1964, %v1923
        %v1971 = vmul.f32 %v1965, %v1928
        %v1972 = vmul.f32 %v1966, %v1931
        %v1973 = vmul.f32 %v1967, %v1936
        %v1974 = vmul.f32 %v1968, %v1939
        %v1975 = vsel %vm1506, %v1969, 0.0
        %v1976 = vsel %vm1506, %v1970, 0.0
        %v1977 = vadd.f32 %v1975, %v1976
        %v1978 = vsel %vm1506, %v1971, 0.0
        %v1979 = vadd.f32 %v1977, %v1978
        %v1980 = vsel %vm1506, %v1972, 0.0
        %v1981 = vadd.f32 %v1979, %v1980
        %v1982 = vsel %vm1506, %v1973, 0.0
        %v1983 = vadd.f32 %v1981, %v1982
        %v1984 = vsel %vm1506, %v1974, 0.0
        %v1985 = vadd.f32 %v1983, %v1984
        %1986 = vadd.xlane.f32.xlu0 %v1985
        %v1987 = vpop.xlane.xlu0 %1986
        %v1988 = vrot.slane %v1987, 4
        %v1989 = vadd.f32 %v1987, %v1988
        %v1990 = vrot.slane %v1989, 2
        %v1991 = vadd.f32 %v1989, %v1990
        %v1992 = vrot.slane %v1991, 1
        %v1993 = vadd.f32 %v1991, %v1992
        %s1994 = vtos %v1993
        %v1995 = vstv %s1994
        %v1996 = vmul.f32 %v1962, 0.01
        %v1997 = vadd.f32 %v1995, %v1996
        %v1998 = vmax.f32 %v1997, 1e-08
        %v1999 = vrcp.pop %v1998
        %v2000 = vmul.f32 %v1962, %v1999
        %v2001 = vmul.f32 %v2000, %v1869
        %v2002 = vmul.f32 %v2000, %v1872
        %v2003 = vmul.f32 %v2000, %v1877
        %v2004 = vmul.f32 %v2000, %v1880
        %v2005 = vsub.f32 %v1388, %v2001
        %v2006 = vsub.f32 %v1389, %v2002
        %v2007 = vsub.f32 %v1390, %v2003
        %v2008 = vsub.f32 %v1391, %v2004
        %v2009 = vpack.c.bf16 %v2006, %v2005
        %v2010 = vpack.c.bf16 %v2008, %v2007
        %2011 = vmatprep.subr.bf16.mxu0 0
        %2012 = vmatpush1.bf16.msra.mxu0 %v2009
        %2013 = vmatprep.subr.bf16.mxu0 0
        %2014 = vmatpush1.bf16.msra.mxu0 %v2010
        %2015 = vmatprep.subr.bf16.mxu0 0
        %2016 = vmatpush1.bf16.msra.mxu0 0
        %2017 = vmatprep.subr.bf16.mxu0 0
        %2018 = vmatpush1.bf16.msra.mxu0 0
        %2019 = vmatprep.subr.bf16.mxu0 0
        %2020 = vmatpush1.bf16.msra.mxu0 0
        %2021 = vmatprep.subr.bf16.mxu0 0
        %2022 = vmatpush1.bf16.msra.mxu0 0
        %2023 = vmatprep.subr.bf16.mxu0 0
        %2024 = vmatpush1.bf16.msra.mxu0 0
        %2025 = vmatprep.subr.bf16.mxu0 0
        %2026 = vmatpush1.bf16.msra.mxu0 0
        %2027 = vmatprep.subr.bf16.mxu0 0
        %2028 = vmatpush1.bf16.msra.mxu0 0
        %2029 = vmatprep.subr.bf16.mxu0 0
        %2030 = vmatpush1.bf16.msra.mxu0 0
        %2031 = vmatprep.subr.bf16.mxu0 0
        %2032 = vmatpush1.bf16.msra.mxu0 0
        %2033 = vmatprep.subr.bf16.mxu0 0
        %2034 = vmatpush1.bf16.msra.mxu0 0
        %2035 = vmatprep.subr.bf16.mxu0 0
        %2036 = vmatpush1.bf16.msra.mxu0 0
        %2037 = vmatprep.subr.bf16.mxu0 0
        %2038 = vmatpush1.bf16.msra.mxu0 0
        %2039 = vmatprep.subr.bf16.mxu0 0
        %2040 = vmatpush1.bf16.msra.mxu0 0
        %2041 = vmatprep.subr.bf16.mxu0 0
        %2042 = vmatpush1.bf16.msra.mxu0 0
        %2043 = vmatprep.mubr.bf16.mxu0 0
        %2044 = vmatmul.mubr.bf16.gmra.mrb[0].mxu0 %v1727
        %v2045 = vpop.f32.mrb[0].mxu0
        %v2046 = vadd.f32 0.0, %v2045
        %v2047 = vpop.f32.mrb[0].mxu0
        %v2048 = vpop.f32.mrb[0].mxu0
        %v2049 = vadd.f32 0.0, %v2048
        %v2050 = vpop.f32.mrb[0].mxu0
        %2051 = vmatprep.mubr.bf16.mxu0 0
        %2052 = vmatmul.mubr.bf16.gmra.mrb[0].mxu0 %v1730
        %v2053 = vpop.f32.mrb[0].mxu0
        %v2054 = vadd.f32 0.0, %v2053
        %v2055 = vpop.f32.mrb[0].mxu0
        %v2056 = vpop.f32.mrb[0].mxu0
        %v2057 = vadd.f32 0.0, %v2056
        %v2058 = vpop.f32.mrb[0].mxu0
        %2059 = vmatprep.mubr.bf16.mxu0 0
        %2060 = vmatmul.mubr.bf16.gmra.mrb[0].mxu0 %v1733
        %v2061 = vpop.f32.mrb[0].mxu0
        %v2062 = vadd.f32 0.0, %v2061
        %v2063 = vpop.f32.mrb[0].mxu0
        %v2064 = vpop.f32.mrb[0].mxu0
        %v2065 = vadd.f32 0.0, %v2064
        %v2066 = vpop.f32.mrb[0].mxu0
        %2067 = vdwg.mxu0
        %v2068 = vsub.f32 %v2046, %v1714
        %v2069 = vsub.f32 %v2049, %v1715
        %v2070 = vsub.f32 %v2054, %v1716
        %v2071 = vsub.f32 %v2057, %v1717
        %v2072 = vsub.f32 %v2062, %v1718
        %v2073 = vsub.f32 %v2065, %v1719
        %v2074 = vmul.f32 %v1720, %v2068
        %v2075 = vmul.f32 %v1721, %v2069
        %v2076 = vmul.f32 %v1722, %v2070
        %v2077 = vmul.f32 %v1723, %v2071
        %v2078 = vmul.f32 %v1724, %v2072
        %v2079 = vmul.f32 %v1725, %v2073
        %v2080 = vpack.c.bf16 %v2075, %v2074
        %v2081 = vpack.c.bf16 %v2077, %v2076
        %v2082 = vpack.c.bf16 %v2079, %v2078
        %v2083 = vmul.f32 %v2005, 0.01
        %v2084 = vmul.f32 %v2006, 0.01
        %v2085 = vmul.f32 %v2007, 0.01
        %v2086 = vmul.f32 %v2008, 0.01
        %2087 = vmatprep.subr.bf16.mxu0 0
        %2088 = vmatpush1.bf16.msra.mxu0 %v2080
        %2089 = vmatprep.subr.bf16.mxu0 0
        %2090 = vmatpush1.bf16.msra.mxu0 %v2081
        %2091 = vmatprep.subr.bf16.mxu0 0
        %2092 = vmatpush1.bf16.msra.mxu0 %v2082
        %2093 = vmatprep.subr.bf16.mxu0 0
        %2094 = vmatpush1.bf16.msra.mxu0 0
        %2095 = vmatprep.subr.bf16.mxu0 0
        %2096 = vmatpush1.bf16.msra.mxu0 0
        %2097 = vmatprep.subr.bf16.mxu0 0
        %2098 = vmatpush1.bf16.msra.mxu0 0
        %2099 = vmatprep.subr.bf16.mxu0 0
        %2100 = vmatpush1.bf16.msra.mxu0 0
        %2101 = vmatprep.subr.bf16.mxu0 0
        %2102 = vmatpush1.bf16.msra.mxu0 0
        %2103 = vmatprep.subr.bf16.mxu0 0
        %2104 = vmatpush1.bf16.msra.mxu0 0
        %2105 = vmatprep.subr.bf16.mxu0 0
        %2106 = vmatpush1.bf16.msra.mxu0 0
        %2107 = vmatprep.subr.bf16.mxu0 0
        %2108 = vmatpush1.bf16.msra.mxu0 0
        %2109 = vmatprep.subr.bf16.mxu0 0
        %2110 = vmatpush1.bf16.msra.mxu0 0
        %2111 = vmatprep.subr.bf16.mxu0 0
        %2112 = vmatpush1.bf16.msra.mxu0 0
        %2113 = vmatprep.subr.bf16.mxu0 0
        %2114 = vmatpush1.bf16.msra.mxu0 0
        %2115 = vmatprep.subr.bf16.mxu0 0
        %2116 = vmatpush1.bf16.msra.mxu0 0
        %2117 = vmatprep.subr.bf16.mxu0 0
        %2118 = vmatpush1.bf16.msra.mxu0 0
        %2119 = vmatprep.mubr.bf16.mxu0 0
        %2120 = vmatmul.mubr.bf16.gmra.mrb[0].mxu0 %v1829
        %v2121 = vpop.f32.mrb[0].mxu0
        %v2122 = vadd.f32 %v2083, %v2121
        %v2123 = vpop.f32.mrb[0].mxu0
        %v2124 = vpop.f32.mrb[0].mxu0
        %v2125 = vadd.f32 %v2084, %v2124
        %v2126 = vpop.f32.mrb[0].mxu0
        %2127 = vmatprep.mubr.bf16.mxu0 0
        %2128 = vmatmul.mubr.bf16.gmra.mrb[0].mxu0 %v1832
        %v2129 = vpop.f32.mrb[0].mxu0
        %v2130 = vadd.f32 %v2085, %v2129
        %v2131 = vpop.f32.mrb[0].mxu0
        %v2132 = vpop.f32.mrb[0].mxu0
        %v2133 = vadd.f32 %v2086, %v2132
        %v2134 = vpop.f32.mrb[0].mxu0
        %2135 = vdwg.mxu0
        %v2136 = vpack.c.bf16 %v2125, %v2122
        %v2137 = vpack.c.bf16 %v2133, %v2130
        %2138 = vmatprep.subr.bf16.mxu0 0
        %2139 = vmatpush1.bf16.msra.mxu0 %v2136
        %2140 = vmatprep.subr.bf16.mxu0 0
        %2141 = vmatpush1.bf16.msra.mxu0 %v2137
        %2142 = vmatprep.subr.bf16.mxu0 0
        %2143 = vmatpush1.bf16.msra.mxu0 0
        %2144 = vmatprep.subr.bf16.mxu0 0
        %2145 = vmatpush1.bf16.msra.mxu0 0
        %2146 = vmatprep.subr.bf16.mxu0 0
        %2147 = vmatpush1.bf16.msra.mxu0 0
        %2148 = vmatprep.subr.bf16.mxu0 0
        %2149 = vmatpush1.bf16.msra.mxu0 0
        %2150 = vmatprep.subr.bf16.mxu0 0
        %2151 = vmatpush1.bf16.msra.mxu0 0
        %2152 = vmatprep.subr.bf16.mxu0 0
        %2153 = vmatpush1.bf16.msra.mxu0 0
        %2154 = vmatprep.subr.bf16.mxu0 0
        %2155 = vmatpush1.bf16.msra.mxu0 0
        %2156 = vmatprep.subr.bf16.mxu0 0
        %2157 = vmatpush1.bf16.msra.mxu0 0
        %2158 = vmatprep.subr.bf16.mxu0 0
        %2159 = vmatpush1.bf16.msra.mxu0 0
        %2160 = vmatprep.subr.bf16.mxu0 0
        %2161 = vmatpush1.bf16.msra.mxu0 0
        %2162 = vmatprep.subr.bf16.mxu0 0
        %2163 = vmatpush1.bf16.msra.mxu0 0
        %2164 = vmatprep.subr.bf16.mxu0 0
        %2165 = vmatpush1.bf16.msra.mxu0 0
        %2166 = vmatprep.subr.bf16.mxu0 0
        %2167 = vmatpush1.bf16.msra.mxu0 0
        %2168 = vmatprep.subr.bf16.mxu0 0
        %2169 = vmatpush1.bf16.msra.mxu0 0
        %2170 = vmatprep.mubr.bf16.mxu0 0
        %2171 = vmatmul.mubr.bf16.gmra.mrb[0].mxu0 %v1727
        %v2172 = vpop.f32.mrb[0].mxu0
        %v2173 = vadd.f32 0.0, %v2172
        %v2174 = vpop.f32.mrb[0].mxu0
        %v2175 = vpop.f32.mrb[0].mxu0
        %v2176 = vadd.f32 0.0, %v2175
        %v2177 = vpop.f32.mrb[0].mxu0
        %2178 = vmatprep.mubr.bf16.mxu0 0
        %2179 = vmatmul.mubr.bf16.gmra.mrb[0].mxu0 %v1730
        %v2180 = vpop.f32.mrb[0].mxu0
        %v2181 = vadd.f32 0.0, %v2180
        %v2182 = vpop.f32.mrb[0].mxu0
        %v2183 = vpop.f32.mrb[0].mxu0
        %v2184 = vadd.f32 0.0, %v2183
        %v2185 = vpop.f32.mrb[0].mxu0
        %2186 = vmatprep.mubr.bf16.mxu0 0
        %2187 = vmatmul.mubr.bf16.gmra.mrb[0].mxu0 %v1733
        %v2188 = vpop.f32.mrb[0].mxu0
        %v2189 = vadd.f32 0.0, %v2188
        %v2190 = vpop.f32.mrb[0].mxu0
        %v2191 = vpop.f32.mrb[0].mxu0
        %v2192 = vadd.f32 0.0, %v2191
        %v2193 = vpop.f32.mrb[0].mxu0
        %2194 = vdwg.mxu0
        %v2195 = vmul.f32 %v2122, %v2122
        %v2196 = vmul.f32 %v2125, %v2125
        %v2197 = vmul.f32 %v2130, %v2130
        %v2198 = vmul.f32 %v2133, %v2133
        %v2199 = vsel %vm1506, %v2195, 0.0
        %v2200 = vsel %vm1506, %v2196, 0.0
        %v2201 = vadd.f32 %v2199, %v2200
        %v2202 = vsel %vm1506, %v2197, 0.0
        %v2203 = vadd.f32 %v2201, %v2202
        %v2204 = vsel %vm1506, %v2198, 0.0
        %v2205 = vadd.f32 %v2203, %v2204
        %2206 = vadd.xlane.f32.xlu0 %v2205
        %v2207 = vpop.xlane.xlu0 %2206
        %v2208 = vrot.slane %v2207, 4
        %v2209 = vadd.f32 %v2207, %v2208
        %v2210 = vrot.slane %v2209, 2
        %v2211 = vadd.f32 %v2209, %v2210
        %v2212 = vrot.slane %v2211, 1
        %v2213 = vadd.f32 %v2211, %v2212
        %s2214 = vtos %v2213
        %v2215 = vstv %s2214
        %v2216 = vmul.f32 %v1720, %v2173
        %v2217 = vmul.f32 %v1721, %v2176
        %v2218 = vmul.f32 %v1722, %v2181
        %v2219 = vmul.f32 %v1723, %v2184
        %v2220 = vmul.f32 %v1724, %v2189
        %v2221 = vmul.f32 %v1725, %v2192
        %v2222 = vmul.f32 %v2216, %v2173
        %v2223 = vmul.f32 %v2217, %v2176
        %v2224 = vmul.f32 %v2218, %v2181
        %v2225 = vmul.f32 %v2219, %v2184
        %v2226 = vmul.f32 %v2220, %v2189
        %v2227 = vmul.f32 %v2221, %v2192
        %v2228 = vsel %vm1506, %v2222, 0.0
        %v2229 = vsel %vm1506, %v2223, 0.0
        %v2230 = vadd.f32 %v2228, %v2229
        %v2231 = vsel %vm1506, %v2224, 0.0
        %v2232 = vadd.f32 %v2230, %v2231
        %v2233 = vsel %vm1506, %v2225, 0.0
        %v2234 = vadd.f32 %v2232, %v2233
        %v2235 = vsel %vm1506, %v2226, 0.0
        %v2236 = vadd.f32 %v2234, %v2235
        %v2237 = vsel %vm1506, %v2227, 0.0
        %v2238 = vadd.f32 %v2236, %v2237
        %2239 = vadd.xlane.f32.xlu0 %v2238
        %v2240 = vpop.xlane.xlu0 %2239
        %v2241 = vrot.slane %v2240, 4
        %v2242 = vadd.f32 %v2240, %v2241
        %v2243 = vrot.slane %v2242, 2
        %v2244 = vadd.f32 %v2242, %v2243
        %v2245 = vrot.slane %v2244, 1
        %v2246 = vadd.f32 %v2244, %v2245
        %s2247 = vtos %v2246
        %v2248 = vstv %s2247
        %v2249 = vmul.f32 %v2215, 0.01
        %v2250 = vadd.f32 %v2248, %v2249
        %v2251 = vmax.f32 %v2250, 1e-08
        %v2252 = vrcp.pop %v2251
        %v2253 = vmul.f32 %v2215, %v2252
        %v2254 = vmul.f32 %v2253, %v2122
        %v2255 = vmul.f32 %v2253, %v2125
        %v2256 = vmul.f32 %v2253, %v2130
        %v2257 = vmul.f32 %v2253, %v2133
        %v2258 = vsub.f32 %v2005, %v2254
        %v2259 = vsub.f32 %v2006, %v2255
        %v2260 = vsub.f32 %v2007, %v2256
        %v2261 = vsub.f32 %v2008, %v2257
        %2262 = vst.msk [vmem:[#allocation2] sm:$0xff] %vm1506, %v2258
        %2263 = vst.msk [vmem:[#allocation2 + $0x8] sm:$0xff] %vm1506, %v2259
        %2264 = vst.msk [vmem:[#allocation2 + $0x10] sm:$0xff] %vm1506, %v2260
        %2265 = vst.msk [vmem:[#allocation2 + $0x18] sm:$0xff] %vm1506, %v2261
      $region72: #{seg_dolf_tracker_forward.5} parent=63 // pred_fallthru
        _
      %p2266 = scmp.lt.s32.totalorder %s29, 1
      %s2267 = scalar_select %p2266, %s29, 1
      %p2268 = scmp.lt.s32.totalorder %s28, 1
      %s2269 = scalar_select %p2268, %s28, 1
      %s2270 = smul.addr %s2269, 2
      %s2271 = smul.addr %s2267, 4
      %s2272 = sadd.s32 %s2270, %s2271
      %s2273 = smul.addr %s2272, 8
      %s2274 = scalar_lea.vmem %s11, %s2273
      // Predicated region
      $region73: #{seg_dolf_tracker_forward.5} parent=63 // pred_check
        %p2275 = pneg %p318
      $region74: #{seg_dolf_tracker_forward.5} parent=63 // pred_check_branch
        %2277 = sbr.rel (%p2275) target = $region76
      $region75: #{seg_dolf_tracker_forward.5} parent=63 // pred_region
        _
      $region76: #{seg_dolf_tracker_forward.5} parent=63 // pred_fallthru
        _
    $region64: #{seg_dolf_tracker_forward.5} parent=5 // pred_fallthru
      _
    %p2278 = scmp.le.s32.totalorder 2, %s19
    // Predicated region
    $region77: #{seg_dolf_tracker_forward.5} parent=5 // pred_check
      %p2279 = pneg %p2278
    $region78: #{seg_dolf_tracker_forward.5} parent=5 // pred_check_branch
      %2281 = sbr.rel (%p2279) target = $region80
    $region79: #{seg_dolf_tracker_forward.5} parent=5 // pred_region
      %s2282 = ssub.s32 %s19, 2
      // Predicated region
      $region81: #{seg_dolf_tracker_forward.5} parent=79 // pred_check
        %p2283 = pneg %p324
      $region82: #{seg_dolf_tracker_forward.5} parent=79 // pred_check_branch
        %2285 = sbr.rel (%p2283) target = $region84
      $region83: #{seg_dolf_tracker_forward.5} parent=79 // pred_region
        %p2286 = scmp.lt.s32.totalorder %s31, 1
        %s2287 = scalar_select %p2286, %s31, 1
        %p2288 = scmp.lt.s32.totalorder %s30, 1
        %s2289 = scalar_select %p2288, %s30, 1
        %s2290 = smul.addr %s2289, 2
        %s2291 = smul.addr %s2287, 4
        %s2292 = sadd.s32 %s2290, %s2291
        %s2293 = smul.addr %s2292, 8
        %s2294 = scalar_lea.vmem %s11, %s2293
      $region84: #{seg_dolf_tracker_forward.5} parent=79 // pred_fallthru
        _
    $region80: #{seg_dolf_tracker_forward.5} parent=5 // pred_fallthru
      _
  $region6: #{seg_dolf_tracker_forward.5} parent=0 // loop_footer
    %s23 = sadd.s32 1, %s19
  $region7: #{seg_dolf_tracker_forward.5} parent=0 // loop_footer_branch
    %18 = sbr.rel target = $region3
  $region8: #{seg_dolf_tracker_forward.5} parent=0 // loop_exit
    _

</llo_original>
